<compile_context>
chip_gen: v6e
topology: v6e:2x2x1
jax: 0.10.0
libtpu: 0.0.40
codegen_flags: <defaults>
</compile_context>

<pallas_src>
import numpy as np
import jax
import jax.numpy as jnp
from jax.experimental import pallas as pl
from jax.experimental.pallas import tpu as pltpu


# ----------------------------------------------------------------------------
# Kernel 1: fused conv stack (one batch element per grid step, all layers fused)
# ----------------------------------------------------------------------------
def _make_fused_conv_kernel(cfgs):
    """cfgs: tuple of (Cin, Cout, H, W) per conv layer.

    Layout per batch element: channels in sublanes, flattened padded spatial
    (row-major, time fastest) in lanes.  Flat padded index = r*(W+2) + c.
    """
    L = len(cfgs)

    def kernel(*refs):
        x_ref = refs[0]                       # (1, F, T)
        o_ref = refs[1 + 3 * L]               # (C_last, F'*T')
        scratch = refs[2 + 3 * L:]

        # Zero the flat padded buffers; interiors are fully overwritten below,
        # the 1-pixel halo (and slack row) stays zero == Conv2d(padding=1).
        for l in range(L):
            scratch[3 * l][...] = jnp.zeros_like(scratch[3 * l])

        # Layer-0 input: copy (1, F, T) rows into the interior of the flat
        # padded image (in-kernel halo; no jnp.pad HBM round-trip).
        _, _, H0, W0 = cfgs[0]
        Pp0 = W0 + 2
        pad0 = scratch[0]
        xv = x_ref[...]                       # (1, F, T) small value
        for r in range(H0):
            pad0[:, pl.ds((r + 1) * Pp0 + 1, W0)] = xv[:, r, :]

        for l in range(L):
            Cin, Cout, H, W = cfgs[l]
            Pp = W + 2
            Hh, Wh = H // 2, W // 2           # floor, like MaxPool2d(2,2)
            w_ref = refs[1 + 3 * l]           # (Cout, 9*Cin)
            sc_ref = refs[2 + 3 * l]          # (Cout, 1) folded-BN scale
            sh_ref = refs[3 + 3 * l]          # (Cout, 1) folded-BN shift (+bias)
            pad_ref = scratch[3 * l]          # (Cin, (H+3)*(W+2)) flat padded in
            col_ref = scratch[3 * l + 1]      # (9*Cin, H*(W+2))   im2col
            act_ref = scratch[3 * l + 2]      # (Cout, H*(W+2))    conv+BN+ReLU

            # im2col: every 3x3 tap is one contiguous lane-slice of the flat
            # padded image (no relayout-heavy reshapes).
            for kh in range(3):
                for kw in range(3):
                    t = kh * 3 + kw
                    col_ref[t * Cin:(t + 1) * Cin, :] = \
                        pad_ref[:, pl.ds(kh * Pp + kw, H * Pp)]

            # Single MXU matmul per layer: (Cout, 9*Cin) @ (9*Cin, H*(W+2)).
            # (The two junk columns per row come from the padding and are
            #  never read below.)
            y = jnp.dot(w_ref[...], col_ref[...],
                        preferred_element_type=jnp.float32)
            # Folded BatchNorm (eval running stats) + ReLU, f32 epilogue.
            y = jnp.maximum(y * sc_ref[...] + sh_ref[...], 0.0)
            act_ref[...] = y

            # MaxPool2d(2,2): max the two source rows, then pick even/odd time
            # columns with 0/1 selection matmuls (idle MXU does the gather).
            w_idx = jax.lax.broadcasted_iota(jnp.int32, (W, Wh), 0)
            j_idx = jax.lax.broadcasted_iota(jnp.int32, (W, Wh), 1)
            sel_even = jnp.where(w_idx == 2 * j_idx, 1.0, 0.0).astype(jnp.float32)
            sel_odd = jnp.where(w_idx == 2 * j_idx + 1, 1.0, 0.0).astype(jnp.float32)

            if l + 1 < L:
                nxt_pad = scratch[3 * (l + 1)]
                Pp_n = cfgs[l + 1][3] + 2
            for i in range(Hh):
                r0 = act_ref[:, pl.ds((2 * i) * Pp, W)]
                r1 = act_ref[:, pl.ds((2 * i + 1) * Pp, W)]
                rm = jnp.maximum(r0, r1)                        # (Cout, W)
                dec = jnp.maximum(
                    jnp.dot(rm, sel_even, preferred_element_type=jnp.float32),
                    jnp.dot(rm, sel_odd, preferred_element_type=jnp.float32))
                if l + 1 < L:
                    # Feed the next layer's padded buffer directly (stays in VMEM).
                    nxt_pad[:, pl.ds((i + 1) * Pp_n + 1, Wh)] = dec
                else:
                    # Channel-major conv features: out[c, i*T' + j].
                    o_ref[:, pl.ds(i * Wh, Wh)] = dec.astype(o_ref.dtype)

    return kernel


def fused_conv_stack(x_nchw, conv_params):
    """x_nchw: (B, 1, F, T) PyTorch NCHW.  conv_params: [(w_hwio, scale, shift)].
    Returns conv features in channel-major layout (B, C, F', T')."""
    B, cin0, F, T = x_nchw.shape
    assert cin0 == 1

    cfgs = []
    w_mats, scales, shifts = [], [], []
    H, W, Cin = F, T, 1
    for (w, scale, shift) in conv_params:
        Cout = w.shape[-1]
        cfgs.append((Cin, Cout, H, W))
        # HWIO (3,3,Cin,Cout) -> (Cout, 9*Cin), column order = tap-major, cin-minor
        w_mats.append(jnp.transpose(w, (3, 0, 1, 2)).reshape(Cout, 9 * Cin))
        scales.append(scale.reshape(Cout, 1))
        shifts.append(shift.reshape(Cout, 1))
        H, W, Cin = H // 2, W // 2, Cout
    Fp, Tp, C = H, W, Cin
    cfgs = tuple(cfgs)

    in_specs = [pl.BlockSpec((None, 1, F, T), lambda b: (b, 0, 0, 0))]
    operands = [x_nchw]
    for l in range(len(cfgs)):
        ci, co, _, _ = cfgs[l]
        in_specs += [pl.BlockSpec((co, 9 * ci), lambda b: (0, 0)),
                     pl.BlockSpec((co, 1), lambda b: (0, 0)),
                     pl.BlockSpec((co, 1), lambda b: (0, 0))]
        operands += [w_mats[l], scales[l], shifts[l]]

    scratch = []
    for (ci, co, h, w) in cfgs:
        pp = w + 2
        scratch += [pltpu.VMEM((ci, (h + 3) * pp), jnp.float32),   # flat padded in
                    pltpu.VMEM((9 * ci, h * pp), jnp.float32),     # im2col
                    pltpu.VMEM((co, h * pp), jnp.float32)]         # conv+BN+ReLU

    out = pl.pallas_call(
        _make_fused_conv_kernel(cfgs),
        out_shape=jax.ShapeDtypeStruct((B, C, Fp * Tp), jnp.float32),
        grid=(B,),
        in_specs=in_specs,
        out_specs=pl.BlockSpec((None, C, Fp * Tp), lambda b: (b, 0, 0)),
        scratch_shapes=scratch,
        compiler_params=pltpu.CompilerParams(dimension_semantics=("parallel",)),
    )(*operands)
    return out.reshape(B, C, Fp, Tp)


# ----------------------------------------------------------------------------
# Kernel 2: fc (Linear->ReLU->Dropout(id)->Linear->ReLU) + stack concat
# ----------------------------------------------------------------------------
def _make_fc_stack_kernel(conv_d):
    def kernel(x_ref, w1_ref, b1_ref, w2_ref, b2_ref, o_ref):
        x = x_ref[...]                                            # (bn, conv_d)
        h = jnp.maximum(
            jnp.dot(x, w1_ref[...], preferred_element_type=jnp.float32)
            + b1_ref[...], 0.0)
        # TODO(synk): nn.Dropout(p=0.3) is identity in eval mode; training-mode
        # stochastic dropout (RNG mask + 1/(1-p) scaling) is not implemented.
        y = jnp.maximum(
            jnp.dot(h, w2_ref[...], preferred_element_type=jnp.float32)
            + b2_ref[...], 0.0)
        # stack=True: [conv features | fc features] written to disjoint column
        # slices of the output block (no in-kernel concatenate relayout).
        o_ref[:, :conv_d] = x
        o_ref[:, conv_d:] = y.astype(o_ref.dtype)
    return kernel


def fc_stack(x2d, w1, b1, w2, b2, block_rows=256):
    N, Din = x2d.shape
    Dh = w1.shape[1]
    D2 = w2.shape[1]
    D = Din + D2
    bn = N if N <= block_rows else block_rows   # row-tiled grid over B*T'
    # TODO(synk): on v7x consider pipeline_mode=pl.Buffered(1) on the weight
    # specs to single-buffer the (large, constant-index) weight tiles.
    return pl.pallas_call(
        _make_fc_stack_kernel(Din),
        out_shape=jax.ShapeDtypeStruct((N, D), x2d.dtype),
        grid=(pl.cdiv(N, bn),),
        in_specs=[
            pl.BlockSpec((bn, Din), lambda i: (i, 0)),
            pl.BlockSpec((Din, Dh), lambda i: (0, 0)),
            pl.BlockSpec((1, Dh), lambda i: (0, 0)),
            pl.BlockSpec((Dh, D2), lambda i: (0, 0)),
            pl.BlockSpec((1, D2), lambda i: (0, 0)),
        ],
        out_specs=pl.BlockSpec((bn, D), lambda i: (i, 0)),
        compiler_params=pltpu.CompilerParams(dimension_semantics=("parallel",)),
    )(x2d, w1, b1.reshape(1, Dh), w2, b2.reshape(1, D2))


# ----------------------------------------------------------------------------
# Full forward pass
# ----------------------------------------------------------------------------
def audio_ntt_2022_encoder_forward(x_nchw, params):
    B = x_nchw.shape[0]
    feat = fused_conv_stack(x_nchw, params["convs"])       # (B, C, F', T')
    _, C, Fp, Tp = feat.shape
    # PyTorch: permute(0,3,2,1) -> (B, T', F', C) ; reshape(B, T', F'*C)
    x = jnp.transpose(feat, (0, 3, 2, 1)).reshape(B, Tp, Fp * C)
    out = fc_stack(x.reshape(B * Tp, Fp * C),
                   params["w1"], params["b1"], params["w2"], params["b2"])
    return out.reshape(B, Tp, -1)


# ----------------------------------------------------------------------------
# Pure-JAX reference (for numerical validation of the Pallas path)
# ----------------------------------------------------------------------------
def reference_forward(x_nchw, params):
    x = jnp.transpose(x_nchw, (0, 2, 3, 1))
    for (w, scale, shift) in params["convs"]:
        y = jax.lax.conv_general_dilated(
            x, w, window_strides=(1, 1), padding="SAME",
            dimension_numbers=("NHWC", "HWIO", "NHWC"))
        y = jnp.maximum(y * scale + shift, 0.0)
        x = jax.lax.reduce_window(y, -jnp.inf, jax.lax.max,
                                  (1, 2, 2, 1), (1, 2, 2, 1), "VALID")
    B, Fp, Tp, C = x.shape
    x = jnp.transpose(x, (0, 2, 1, 3)).reshape(B, Tp, Fp * C)
    h = jnp.maximum(x @ params["w1"] + params["b1"], 0.0)
    y2 = jnp.maximum(h @ params["w2"] + params["b2"], 0.0)
    return jnp.concatenate([x, y2], axis=-1)


# ----------------------------------------------------------------------------
# Deterministic synthetic parameter init (shapes match AudioNTT2022Encoder)
# ----------------------------------------------------------------------------
def init_params(key, n_mels, d, base_d, mlp_hidden_d, conv_layers):
    conv_d = base_d * (n_mels // 2 ** conv_layers)
    ks = jax.random.split(key, 4 * conv_layers + 4)
    idx = 0
    convs = []
    cin = 1
    eps = 1e-5
    for _ in range(conv_layers):
        w = 0.1 * jax.random.normal(ks[idx], (3, 3, cin, base_d), jnp.float32); idx += 1
        b = 0.1 * jax.random.normal(ks[idx], (base_d,), jnp.float32); idx += 1
        gamma = 1.0 + 0.1 * jax.random.normal(ks[idx], (base_d,), jnp.float32); idx += 1
        beta = 0.1 * jax.random.normal(ks[idx], (base_d,), jnp.float32); idx += 1
        run_mean = jnp.zeros((base_d,), jnp.float32)   # eval-mode running stats
        run_var = jnp.ones((base_d,), jnp.float32)
        scale = gamma / jnp.sqrt(run_var + eps)
        shift = beta + (b - run_mean) * scale          # conv bias folded into BN
        convs.append((w, scale, shift))
        cin = base_d
    w1 = 0.1 * jax.random.normal(ks[idx], (conv_d, mlp_hidden_d), jnp.float32); idx += 1
    b1 = 0.1 * jax.random.normal(ks[idx], (mlp_hidden_d,), jnp.float32); idx += 1
    w2 = 0.1 * jax.random.normal(ks[idx], (mlp_hidden_d, d - conv_d), jnp.float32); idx += 1
    b2 = 0.1 * jax.random.normal(ks[idx], (d - conv_d,), jnp.float32); idx += 1
    return dict(convs=convs, w1=w1, b1=b1, w2=w2, b2=b2, conv_d=conv_d)


if __name__ == "__main__":
    # Small shapes consistent with the module:
    #   n_mels=16, T=16, base_d=8, conv_layers=2 -> conv_d = 8 * (16//4) = 32
    #   mlp_hidden_d=32, d=48  -> fc output width = d - conv_d = 16
    B, n_mels, T = 2, 16, 16
    base_d, conv_layers, mlp_hidden_d, d = 8, 2, 32, 48

    key = jax.random.PRNGKey(0)
    kx, kp = jax.random.split(key)
    x = jax.random.normal(kx, (B, 1, n_mels, T), jnp.float32)   # PyTorch NCHW input

    params = init_params(kp, n_mels=n_mels, d=d, base_d=base_d,
                         mlp_hidden_d=mlp_hidden_d, conv_layers=conv_layers)

    out = audio_ntt_2022_encoder_forward(x, params)
    out = jax.block_until_ready(out)

    assert out.shape == (B, T // 2 ** conv_layers, d), out.shape

    ref = reference_forward(x, params)
    # Tolerance accounts for MXU default-precision (bf16 passes) matmuls on both
    # paths with different groupings; real indexing/pooling bugs are O(0.1+).
    np.testing.assert_allclose(np.asarray(out), np.asarray(ref),
                               atol=5e-3, rtol=5e-3)
    print("KERNEL_OK")
</pallas_src>

<mosaic_0001>
module attributes {stable_mosaic.version = 11 : i64} {
  func.func @kernel(%arg0: i32, %arg1: memref<1x1x16x16xf32, #tpu.memory_space<vmem>>, %arg2: memref<8x9xf32, #tpu.memory_space<vmem>>, %arg3: memref<8x1xf32, #tpu.memory_space<vmem>>, %arg4: memref<8x1xf32, #tpu.memory_space<vmem>>, %arg5: memref<8x72xf32, #tpu.memory_space<vmem>>, %arg6: memref<8x1xf32, #tpu.memory_space<vmem>>, %arg7: memref<8x1xf32, #tpu.memory_space<vmem>>, %arg8: memref<1x8x16xf32, #tpu.memory_space<vmem>>, %arg9: memref<1x342xf32, #tpu.memory_space<vmem>>, %arg10: memref<9x288xf32, #tpu.memory_space<vmem>>, %arg11: memref<8x288xf32, #tpu.memory_space<vmem>>, %arg12: memref<8x110xf32, #tpu.memory_space<vmem>>, %arg13: memref<72x80xf32, #tpu.memory_space<vmem>>, %arg14: memref<8x80xf32, #tpu.memory_space<vmem>>) attributes {dimension_semantics = [#tpu.dimension_semantics<parallel>], iteration_bounds = array<i64: 2>, scalar_prefetch = 0 : i64, scratch_operands = 6 : i64, tpu.core_type = #tpu.core_type<tc>, window_params = [{transform_indices = @transform_0, window_bounds = array<i64: 1, 1, 16, 16>}, {pipeline_mode = #tpu.pipeline_mode<synchronous>, transform_indices = @transform_1, window_bounds = array<i64: 8, 9>}, {pipeline_mode = #tpu.pipeline_mode<synchronous>, transform_indices = @transform_2, window_bounds = array<i64: 8, 1>}, {pipeline_mode = #tpu.pipeline_mode<synchronous>, transform_indices = @transform_3, window_bounds = array<i64: 8, 1>}, {pipeline_mode = #tpu.pipeline_mode<synchronous>, transform_indices = @transform_4, window_bounds = array<i64: 8, 72>}, {pipeline_mode = #tpu.pipeline_mode<synchronous>, transform_indices = @transform_5, window_bounds = array<i64: 8, 1>}, {pipeline_mode = #tpu.pipeline_mode<synchronous>, transform_indices = @transform_6, window_bounds = array<i64: 8, 1>}, {transform_indices = @transform_7, window_bounds = array<i64: 1, 8, 16>}]} {
    %cst = arith.constant 0.000000e+00 : f32
    %0 = vector.broadcast %cst : f32 to vector<1x342xf32>
    %c0 = arith.constant 0 : index
    %c0_0 = arith.constant 0 : index
    %1 = vector.load %arg9[%c0, %c0_0] : memref<1x342xf32, #tpu.memory_space<vmem>>, vector<1x342xf32>
    tpu.vector_store %arg9[%c0, %c0_0], %0 {strides = array<i32>} : memref<1x342xf32, #tpu.memory_space<vmem>>, vector<1x342xf32>,
    %cst_1 = arith.constant 0.000000e+00 : f32
    %2 = vector.broadcast %cst_1 : f32 to vector<8x110xf32>
    %c0_2 = arith.constant 0 : index
    %c0_3 = arith.constant 0 : index
    %3 = vector.load %arg12[%c0_2, %c0_3] : memref<8x110xf32, #tpu.memory_space<vmem>>, vector<8x110xf32>
    tpu.vector_store %arg12[%c0_2, %c0_3], %2 {strides = array<i32>} : memref<8x110xf32, #tpu.memory_space<vmem>>, vector<8x110xf32>,
    %c0_4 = arith.constant 0 : index
    %c0_5 = arith.constant 0 : index
    %c0_6 = arith.constant 0 : index
    %c0_7 = arith.constant 0 : index
    %4 = vector.load %arg1[%c0_4, %c0_5, %c0_6, %c0_7] : memref<1x1x16x16xf32, #tpu.memory_space<vmem>>, vector<1x1x16x16xf32>
    %5 = vector.shape_cast %4 : vector<1x1x16x16xf32> to vector<1x16x16xf32>
    %6 = vector.extract_strided_slice %5 {offsets = [0, 0, 0], sizes = [1, 1, 16], strides = [1, 1, 1]} : vector<1x16x16xf32> to vector<1x1x16xf32>
    %7 = vector.shape_cast %6 : vector<1x1x16xf32> to vector<1x16xf32>
    %c0_8 = arith.constant 0 : index
    %c19 = arith.constant 19 : index
    %8 = vector.load %arg9[%c0_8, %c19] : memref<1x342xf32, #tpu.memory_space<vmem>>, vector<1x16xf32>
    tpu.vector_store %arg9[%c0_8, %c19], %7 {strides = array<i32>} : memref<1x342xf32, #tpu.memory_space<vmem>>, vector<1x16xf32>,
    %9 = vector.extract_strided_slice %5 {offsets = [0, 1, 0], sizes = [1, 1, 16], strides = [1, 1, 1]} : vector<1x16x16xf32> to vector<1x1x16xf32>
    %10 = vector.shape_cast %9 : vector<1x1x16xf32> to vector<1x16xf32>
    %c0_9 = arith.constant 0 : index
    %c37 = arith.constant 37 : index
    %11 = vector.load %arg9[%c0_9, %c37] : memref<1x342xf32, #tpu.memory_space<vmem>>, vector<1x16xf32>
    tpu.vector_store %arg9[%c0_9, %c37], %10 {strides = array<i32>} : memref<1x342xf32, #tpu.memory_space<vmem>>, vector<1x16xf32>,
    %12 = vector.extract_strided_slice %5 {offsets = [0, 2, 0], sizes = [1, 1, 16], strides = [1, 1, 1]} : vector<1x16x16xf32> to vector<1x1x16xf32>
    %13 = vector.shape_cast %12 : vector<1x1x16xf32> to vector<1x16xf32>
    %c0_10 = arith.constant 0 : index
    %c55 = arith.constant 55 : index
    %14 = vector.load %arg9[%c0_10, %c55] : memref<1x342xf32, #tpu.memory_space<vmem>>, vector<1x16xf32>
    tpu.vector_store %arg9[%c0_10, %c55], %13 {strides = array<i32>} : memref<1x342xf32, #tpu.memory_space<vmem>>, vector<1x16xf32>,
    %15 = vector.extract_strided_slice %5 {offsets = [0, 3, 0], sizes = [1, 1, 16], strides = [1, 1, 1]} : vector<1x16x16xf32> to vector<1x1x16xf32>
    %16 = vector.shape_cast %15 : vector<1x1x16xf32> to vector<1x16xf32>
    %c0_11 = arith.constant 0 : index
    %c73 = arith.constant 73 : index
    %17 = vector.load %arg9[%c0_11, %c73] : memref<1x342xf32, #tpu.memory_space<vmem>>, vector<1x16xf32>
    tpu.vector_store %arg9[%c0_11, %c73], %16 {strides = array<i32>} : memref<1x342xf32, #tpu.memory_space<vmem>>, vector<1x16xf32>,
    %18 = vector.extract_strided_slice %5 {offsets = [0, 4, 0], sizes = [1, 1, 16], strides = [1, 1, 1]} : vector<1x16x16xf32> to vector<1x1x16xf32>
    %19 = vector.shape_cast %18 : vector<1x1x16xf32> to vector<1x16xf32>
    %c0_12 = arith.constant 0 : index
    %c91 = arith.constant 91 : index
    %20 = vector.load %arg9[%c0_12, %c91] : memref<1x342xf32, #tpu.memory_space<vmem>>, vector<1x16xf32>
    tpu.vector_store %arg9[%c0_12, %c91], %19 {strides = array<i32>} : memref<1x342xf32, #tpu.memory_space<vmem>>, vector<1x16xf32>,
    %21 = vector.extract_strided_slice %5 {offsets = [0, 5, 0], sizes = [1, 1, 16], strides = [1, 1, 1]} : vector<1x16x16xf32> to vector<1x1x16xf32>
    %22 = vector.shape_cast %21 : vector<1x1x16xf32> to vector<1x16xf32>
    %c0_13 = arith.constant 0 : index
    %c109 = arith.constant 109 : index
    %23 = vector.load %arg9[%c0_13, %c109] : memref<1x342xf32, #tpu.memory_space<vmem>>, vector<1x16xf32>
    tpu.vector_store %arg9[%c0_13, %c109], %22 {strides = array<i32>} : memref<1x342xf32, #tpu.memory_space<vmem>>, vector<1x16xf32>,
    %24 = vector.extract_strided_slice %5 {offsets = [0, 6, 0], sizes = [1, 1, 16], strides = [1, 1, 1]} : vector<1x16x16xf32> to vector<1x1x16xf32>
    %25 = vector.shape_cast %24 : vector<1x1x16xf32> to vector<1x16xf32>
    %c0_14 = arith.constant 0 : index
    %c127 = arith.constant 127 : index
    %26 = vector.load %arg9[%c0_14, %c127] : memref<1x342xf32, #tpu.memory_space<vmem>>, vector<1x16xf32>
    tpu.vector_store %arg9[%c0_14, %c127], %25 {strides = array<i32>} : memref<1x342xf32, #tpu.memory_space<vmem>>, vector<1x16xf32>,
    %27 = vector.extract_strided_slice %5 {offsets = [0, 7, 0], sizes = [1, 1, 16], strides = [1, 1, 1]} : vector<1x16x16xf32> to vector<1x1x16xf32>
    %28 = vector.shape_cast %27 : vector<1x1x16xf32> to vector<1x16xf32>
    %c0_15 = arith.constant 0 : index
    %c145 = arith.constant 145 : index
    %29 = vector.load %arg9[%c0_15, %c145] : memref<1x342xf32, #tpu.memory_space<vmem>>, vector<1x16xf32>
    tpu.vector_store %arg9[%c0_15, %c145], %28 {strides = array<i32>} : memref<1x342xf32, #tpu.memory_space<vmem>>, vector<1x16xf32>,
    %30 = vector.extract_strided_slice %5 {offsets = [0, 8, 0], sizes = [1, 1, 16], strides = [1, 1, 1]} : vector<1x16x16xf32> to vector<1x1x16xf32>
    %31 = vector.shape_cast %30 : vector<1x1x16xf32> to vector<1x16xf32>
    %c0_16 = arith.constant 0 : index
    %c163 = arith.constant 163 : index
    %32 = vector.load %arg9[%c0_16, %c163] : memref<1x342xf32, #tpu.memory_space<vmem>>, vector<1x16xf32>
    tpu.vector_store %arg9[%c0_16, %c163], %31 {strides = array<i32>} : memref<1x342xf32, #tpu.memory_space<vmem>>, vector<1x16xf32>,
    %33 = vector.extract_strided_slice %5 {offsets = [0, 9, 0], sizes = [1, 1, 16], strides = [1, 1, 1]} : vector<1x16x16xf32> to vector<1x1x16xf32>
    %34 = vector.shape_cast %33 : vector<1x1x16xf32> to vector<1x16xf32>
    %c0_17 = arith.constant 0 : index
    %c181 = arith.constant 181 : index
    %35 = vector.load %arg9[%c0_17, %c181] : memref<1x342xf32, #tpu.memory_space<vmem>>, vector<1x16xf32>
    tpu.vector_store %arg9[%c0_17, %c181], %34 {strides = array<i32>} : memref<1x342xf32, #tpu.memory_space<vmem>>, vector<1x16xf32>,
    %36 = vector.extract_strided_slice %5 {offsets = [0, 10, 0], sizes = [1, 1, 16], strides = [1, 1, 1]} : vector<1x16x16xf32> to vector<1x1x16xf32>
    %37 = vector.shape_cast %36 : vector<1x1x16xf32> to vector<1x16xf32>
    %c0_18 = arith.constant 0 : index
    %c199 = arith.constant 199 : index
    %38 = vector.load %arg9[%c0_18, %c199] : memref<1x342xf32, #tpu.memory_space<vmem>>, vector<1x16xf32>
    tpu.vector_store %arg9[%c0_18, %c199], %37 {strides = array<i32>} : memref<1x342xf32, #tpu.memory_space<vmem>>, vector<1x16xf32>,
    %39 = vector.extract_strided_slice %5 {offsets = [0, 11, 0], sizes = [1, 1, 16], strides = [1, 1, 1]} : vector<1x16x16xf32> to vector<1x1x16xf32>
    %40 = vector.shape_cast %39 : vector<1x1x16xf32> to vector<1x16xf32>
    %c0_19 = arith.constant 0 : index
    %c217 = arith.constant 217 : index
    %41 = vector.load %arg9[%c0_19, %c217] : memref<1x342xf32, #tpu.memory_space<vmem>>, vector<1x16xf32>
    tpu.vector_store %arg9[%c0_19, %c217], %40 {strides = array<i32>} : memref<1x342xf32, #tpu.memory_space<vmem>>, vector<1x16xf32>,
    %42 = vector.extract_strided_slice %5 {offsets = [0, 12, 0], sizes = [1, 1, 16], strides = [1, 1, 1]} : vector<1x16x16xf32> to vector<1x1x16xf32>
    %43 = vector.shape_cast %42 : vector<1x1x16xf32> to vector<1x16xf32>
    %c0_20 = arith.constant 0 : index
    %c235 = arith.constant 235 : index
    %44 = vector.load %arg9[%c0_20, %c235] : memref<1x342xf32, #tpu.memory_space<vmem>>, vector<1x16xf32>
    tpu.vector_store %arg9[%c0_20, %c235], %43 {strides = array<i32>} : memref<1x342xf32, #tpu.memory_space<vmem>>, vector<1x16xf32>,
    %45 = vector.extract_strided_slice %5 {offsets = [0, 13, 0], sizes = [1, 1, 16], strides = [1, 1, 1]} : vector<1x16x16xf32> to vector<1x1x16xf32>
    %46 = vector.shape_cast %45 : vector<1x1x16xf32> to vector<1x16xf32>
    %c0_21 = arith.constant 0 : index
    %c253 = arith.constant 253 : index
    %47 = vector.load %arg9[%c0_21, %c253] : memref<1x342xf32, #tpu.memory_space<vmem>>, vector<1x16xf32>
    tpu.vector_store %arg9[%c0_21, %c253], %46 {strides = array<i32>} : memref<1x342xf32, #tpu.memory_space<vmem>>, vector<1x16xf32>,
    %48 = vector.extract_strided_slice %5 {offsets = [0, 14, 0], sizes = [1, 1, 16], strides = [1, 1, 1]} : vector<1x16x16xf32> to vector<1x1x16xf32>
    %49 = vector.shape_cast %48 : vector<1x1x16xf32> to vector<1x16xf32>
    %c0_22 = arith.constant 0 : index
    %c271 = arith.constant 271 : index
    %50 = vector.load %arg9[%c0_22, %c271] : memref<1x342xf32, #tpu.memory_space<vmem>>, vector<1x16xf32>
    tpu.vector_store %arg9[%c0_22, %c271], %49 {strides = array<i32>} : memref<1x342xf32, #tpu.memory_space<vmem>>, vector<1x16xf32>,
    %51 = vector.extract_strided_slice %5 {offsets = [0, 15, 0], sizes = [1, 1, 16], strides = [1, 1, 1]} : vector<1x16x16xf32> to vector<1x1x16xf32>
    %52 = vector.shape_cast %51 : vector<1x1x16xf32> to vector<1x16xf32>
    %c0_23 = arith.constant 0 : index
    %c289 = arith.constant 289 : index
    %53 = vector.load %arg9[%c0_23, %c289] : memref<1x342xf32, #tpu.memory_space<vmem>>, vector<1x16xf32>
    tpu.vector_store %arg9[%c0_23, %c289], %52 {strides = array<i32>} : memref<1x342xf32, #tpu.memory_space<vmem>>, vector<1x16xf32>,
    %c0_24 = arith.constant 0 : index
    %c0_25 = arith.constant 0 : index
    %54 = vector.load %arg9[%c0_24, %c0_25] : memref<1x342xf32, #tpu.memory_space<vmem>>, vector<1x288xf32>
    %c0_26 = arith.constant 0 : index
    %c0_27 = arith.constant 0 : index
    %55 = vector.load %arg10[%c0_26, %c0_27] : memref<9x288xf32, #tpu.memory_space<vmem>>, vector<1x288xf32>
    tpu.vector_store %arg10[%c0_26, %c0_27], %54 {strides = array<i32>} : memref<9x288xf32, #tpu.memory_space<vmem>>, vector<1x288xf32>,
    %c0_28 = arith.constant 0 : index
    %c1 = arith.constant 1 : index
    %56 = vector.load %arg9[%c0_28, %c1] : memref<1x342xf32, #tpu.memory_space<vmem>>, vector<1x288xf32>
    %c1_29 = arith.constant 1 : index
    %c0_30 = arith.constant 0 : index
    %57 = vector.load %arg10[%c1_29, %c0_30] : memref<9x288xf32, #tpu.memory_space<vmem>>, vector<1x288xf32>
    tpu.vector_store %arg10[%c1_29, %c0_30], %56 {strides = array<i32>} : memref<9x288xf32, #tpu.memory_space<vmem>>, vector<1x288xf32>,
    %c0_31 = arith.constant 0 : index
    %c2 = arith.constant 2 : index
    %58 = vector.load %arg9[%c0_31, %c2] : memref<1x342xf32, #tpu.memory_space<vmem>>, vector<1x288xf32>
    %c2_32 = arith.constant 2 : index
    %c0_33 = arith.constant 0 : index
    %59 = vector.load %arg10[%c2_32, %c0_33] : memref<9x288xf32, #tpu.memory_space<vmem>>, vector<1x288xf32>
    tpu.vector_store %arg10[%c2_32, %c0_33], %58 {strides = array<i32>} : memref<9x288xf32, #tpu.memory_space<vmem>>, vector<1x288xf32>,
    %c0_34 = arith.constant 0 : index
    %c18 = arith.constant 18 : index
    %60 = vector.load %arg9[%c0_34, %c18] : memref<1x342xf32, #tpu.memory_space<vmem>>, vector<1x288xf32>
    %c3 = arith.constant 3 : index
    %c0_35 = arith.constant 0 : index
    %61 = vector.load %arg10[%c3, %c0_35] : memref<9x288xf32, #tpu.memory_space<vmem>>, vector<1x288xf32>
    tpu.vector_store %arg10[%c3, %c0_35], %60 {strides = array<i32>} : memref<9x288xf32, #tpu.memory_space<vmem>>, vector<1x288xf32>,
    %c0_36 = arith.constant 0 : index
    %c19_37 = arith.constant 19 : index
    %62 = vector.load %arg9[%c0_36, %c19_37] : memref<1x342xf32, #tpu.memory_space<vmem>>, vector<1x288xf32>
    %c4 = arith.constant 4 : index
    %c0_38 = arith.constant 0 : index
    %63 = vector.load %arg10[%c4, %c0_38] : memref<9x288xf32, #tpu.memory_space<vmem>>, vector<1x288xf32>
    tpu.vector_store %arg10[%c4, %c0_38], %62 {strides = array<i32>} : memref<9x288xf32, #tpu.memory_space<vmem>>, vector<1x288xf32>,
    %c0_39 = arith.constant 0 : index
    %c20 = arith.constant 20 : index
    %64 = vector.load %arg9[%c0_39, %c20] : memref<1x342xf32, #tpu.memory_space<vmem>>, vector<1x288xf32>
    %c5 = arith.constant 5 : index
    %c0_40 = arith.constant 0 : index
    %65 = vector.load %arg10[%c5, %c0_40] : memref<9x288xf32, #tpu.memory_space<vmem>>, vector<1x288xf32>
    tpu.vector_store %arg10[%c5, %c0_40], %64 {strides = array<i32>} : memref<9x288xf32, #tpu.memory_space<vmem>>, vector<1x288xf32>,
    %c0_41 = arith.constant 0 : index
    %c36 = arith.constant 36 : index
    %66 = vector.load %arg9[%c0_41, %c36] : memref<1x342xf32, #tpu.memory_space<vmem>>, vector<1x288xf32>
    %c6 = arith.constant 6 : index
    %c0_42 = arith.constant 0 : index
    %67 = vector.load %arg10[%c6, %c0_42] : memref<9x288xf32, #tpu.memory_space<vmem>>, vector<1x288xf32>
    tpu.vector_store %arg10[%c6, %c0_42], %66 {strides = array<i32>} : memref<9x288xf32, #tpu.memory_space<vmem>>, vector<1x288xf32>,
    %c0_43 = arith.constant 0 : index
    %c37_44 = arith.constant 37 : index
    %68 = vector.load %arg9[%c0_43, %c37_44] : memref<1x342xf32, #tpu.memory_space<vmem>>, vector<1x288xf32>
    %c7 = arith.constant 7 : index
    %c0_45 = arith.constant 0 : index
    %69 = vector.load %arg10[%c7, %c0_45] : memref<9x288xf32, #tpu.memory_space<vmem>>, vector<1x288xf32>
    tpu.vector_store %arg10[%c7, %c0_45], %68 {strides = array<i32>} : memref<9x288xf32, #tpu.memory_space<vmem>>, vector<1x288xf32>,
    %c0_46 = arith.constant 0 : index
    %c38 = arith.constant 38 : index
    %70 = vector.load %arg9[%c0_46, %c38] : memref<1x342xf32, #tpu.memory_space<vmem>>, vector<1x288xf32>
    %c8 = arith.constant 8 : index
    %c0_47 = arith.constant 0 : index
    %71 = vector.load %arg10[%c8, %c0_47] : memref<9x288xf32, #tpu.memory_space<vmem>>, vector<1x288xf32>
    tpu.vector_store %arg10[%c8, %c0_47], %70 {strides = array<i32>} : memref<9x288xf32, #tpu.memory_space<vmem>>, vector<1x288xf32>,
    %c0_48 = arith.constant 0 : index
    %c0_49 = arith.constant 0 : index
    %72 = vector.load %arg2[%c0_48, %c0_49] : memref<8x9xf32, #tpu.memory_space<vmem>>, vector<8x9xf32>
    %c0_50 = arith.constant 0 : index
    %c0_51 = arith.constant 0 : index
    %73 = vector.load %arg10[%c0_50, %c0_51] : memref<9x288xf32, #tpu.memory_space<vmem>>, vector<9x288xf32>
    %cst_52 = arith.constant dense<0.000000e+00> : vector<8x288xf32>
    %74 = tpu.matmul %72, %73, %cst_52 {dimension_numbers = #tpu.dot_dimension_numbers<[1], [0], [0], [1], [0, 0, 1, 1], [], []>} : vector<8x9xf32>, vector<9x288xf32>, vector<8x288xf32> -> vector<8x288xf32>
    %c0_53 = arith.constant 0 : index
    %c0_54 = arith.constant 0 : index
    %75 = vector.load %arg3[%c0_53, %c0_54] : memref<8x1xf32, #tpu.memory_space<vmem>>, vector<8x1xf32>
    %76 = vector.broadcast %75 : vector<8x1xf32> to vector<8x288xf32>
    %77 = arith.mulf %74, %76 : vector<8x288xf32>
    %c0_55 = arith.constant 0 : index
    %c0_56 = arith.constant 0 : index
    %78 = vector.load %arg4[%c0_55, %c0_56] : memref<8x1xf32, #tpu.memory_space<vmem>>, vector<8x1xf32>
    %79 = vector.broadcast %78 : vector<8x1xf32> to vector<8x288xf32>
    %80 = arith.addf %77, %79 : vector<8x288xf32>
    %cst_57 = arith.constant 0.000000e+00 : f32
    %81 = vector.broadcast %cst_57 : f32 to vector<8x288xf32>
    %82 = arith.maximumf %80, %81 : vector<8x288xf32>
    %c0_58 = arith.constant 0 : index
    %c0_59 = arith.constant 0 : index
    %83 = vector.load %arg11[%c0_58, %c0_59] : memref<8x288xf32, #tpu.memory_space<vmem>>, vector<8x288xf32>
    tpu.vector_store %arg11[%c0_58, %c0_59], %82 {strides = array<i32>} : memref<8x288xf32, #tpu.memory_space<vmem>>, vector<8x288xf32>,
    %84 = tpu.iota {dimensions = array<i32: 0>} : vector<16x8xi32>
    %85 = tpu.iota {dimensions = array<i32: 1>} : vector<16x8xi32>
    %c2_i32 = arith.constant 2 : i32
    %86 = vector.broadcast %c2_i32 : i32 to vector<16x8xi32>
    %87 = arith.muli %86, %85 : vector<16x8xi32>
    %88 = arith.cmpi eq, %84, %87 : vector<16x8xi32>
    %cst_60 = arith.constant 1.000000e+00 : f32
    %cst_61 = arith.constant 0.000000e+00 : f32
    %89 = vector.broadcast %cst_60 : f32 to vector<16x8xf32>
    %90 = vector.broadcast %cst_61 : f32 to vector<16x8xf32>
    %91 = arith.select %88, %89, %90 : vector<16x8xi1>, vector<16x8xf32>
    %c2_i32_62 = arith.constant 2 : i32
    %92 = vector.broadcast %c2_i32_62 : i32 to vector<16x8xi32>
    %93 = arith.muli %92, %85 : vector<16x8xi32>
    %c1_i32 = arith.constant 1 : i32
    %94 = vector.broadcast %c1_i32 : i32 to vector<16x8xi32>
    %95 = arith.addi %93, %94 : vector<16x8xi32>
    %96 = arith.cmpi eq, %84, %95 : vector<16x8xi32>
    %cst_63 = arith.constant 1.000000e+00 : f32
    %cst_64 = arith.constant 0.000000e+00 : f32
    %97 = vector.broadcast %cst_63 : f32 to vector<16x8xf32>
    %98 = vector.broadcast %cst_64 : f32 to vector<16x8xf32>
    %99 = arith.select %96, %97, %98 : vector<16x8xi1>, vector<16x8xf32>
    %c0_65 = arith.constant 0 : index
    %c0_66 = arith.constant 0 : index
    %100 = vector.load %arg11[%c0_65, %c0_66] : memref<8x288xf32, #tpu.memory_space<vmem>>, vector<8x16xf32>
    %c0_67 = arith.constant 0 : index
    %c18_68 = arith.constant 18 : index
    %101 = vector.load %arg11[%c0_67, %c18_68] : memref<8x288xf32, #tpu.memory_space<vmem>>, vector<8x16xf32>
    %102 = arith.maximumf %100, %101 : vector<8x16xf32>
    %cst_69 = arith.constant dense<0.000000e+00> : vector<8x8xf32>
    %103 = tpu.matmul %102, %91, %cst_69 {dimension_numbers = #tpu.dot_dimension_numbers<[1], [0], [0], [1], [0, 0, 1, 1], [], []>} : vector<8x16xf32>, vector<16x8xf32>, vector<8x8xf32> -> vector<8x8xf32>
    %cst_70 = arith.constant dense<0.000000e+00> : vector<8x8xf32>
    %104 = tpu.matmul %102, %99, %cst_70 {dimension_numbers = #tpu.dot_dimension_numbers<[1], [0], [0], [1], [0, 0, 1, 1], [], []>} : vector<8x16xf32>, vector<16x8xf32>, vector<8x8xf32> -> vector<8x8xf32>
    %105 = arith.maximumf %103, %104 : vector<8x8xf32>
    %c0_71 = arith.constant 0 : index
    %c11 = arith.constant 11 : index
    %106 = vector.load %arg12[%c0_71, %c11] : memref<8x110xf32, #tpu.memory_space<vmem>>, vector<8x8xf32>
    tpu.vector_store %arg12[%c0_71, %c11], %105 {strides = array<i32>} : memref<8x110xf32, #tpu.memory_space<vmem>>, vector<8x8xf32>,
    %c0_72 = arith.constant 0 : index
    %c36_73 = arith.constant 36 : index
    %107 = vector.load %arg11[%c0_72, %c36_73] : memref<8x288xf32, #tpu.memory_space<vmem>>, vector<8x16xf32>
    %c0_74 = arith.constant 0 : index
    %c54 = arith.constant 54 : index
    %108 = vector.load %arg11[%c0_74, %c54] : memref<8x288xf32, #tpu.memory_space<vmem>>, vector<8x16xf32>
    %109 = arith.maximumf %107, %108 : vector<8x16xf32>
    %cst_75 = arith.constant dense<0.000000e+00> : vector<8x8xf32>
    %110 = tpu.matmul %109, %91, %cst_75 {dimension_numbers = #tpu.dot_dimension_numbers<[1], [0], [0], [1], [0, 0, 1, 1], [], []>} : vector<8x16xf32>, vector<16x8xf32>, vector<8x8xf32> -> vector<8x8xf32>
    %cst_76 = arith.constant dense<0.000000e+00> : vector<8x8xf32>
    %111 = tpu.matmul %109, %99, %cst_76 {dimension_numbers = #tpu.dot_dimension_numbers<[1], [0], [0], [1], [0, 0, 1, 1], [], []>} : vector<8x16xf32>, vector<16x8xf32>, vector<8x8xf32> -> vector<8x8xf32>
    %112 = arith.maximumf %110, %111 : vector<8x8xf32>
    %c0_77 = arith.constant 0 : index
    %c21 = arith.constant 21 : index
    %113 = vector.load %arg12[%c0_77, %c21] : memref<8x110xf32, #tpu.memory_space<vmem>>, vector<8x8xf32>
    tpu.vector_store %arg12[%c0_77, %c21], %112 {strides = array<i32>} : memref<8x110xf32, #tpu.memory_space<vmem>>, vector<8x8xf32>,
    %c0_78 = arith.constant 0 : index
    %c72 = arith.constant 72 : index
    %114 = vector.load %arg11[%c0_78, %c72] : memref<8x288xf32, #tpu.memory_space<vmem>>, vector<8x16xf32>
    %c0_79 = arith.constant 0 : index
    %c90 = arith.constant 90 : index
    %115 = vector.load %arg11[%c0_79, %c90] : memref<8x288xf32, #tpu.memory_space<vmem>>, vector<8x16xf32>
    %116 = arith.maximumf %114, %115 : vector<8x16xf32>
    %cst_80 = arith.constant dense<0.000000e+00> : vector<8x8xf32>
    %117 = tpu.matmul %116, %91, %cst_80 {dimension_numbers = #tpu.dot_dimension_numbers<[1], [0], [0], [1], [0, 0, 1, 1], [], []>} : vector<8x16xf32>, vector<16x8xf32>, vector<8x8xf32> -> vector<8x8xf32>
    %cst_81 = arith.constant dense<0.000000e+00> : vector<8x8xf32>
    %118 = tpu.matmul %116, %99, %cst_81 {dimension_numbers = #tpu.dot_dimension_numbers<[1], [0], [0], [1], [0, 0, 1, 1], [], []>} : vector<8x16xf32>, vector<16x8xf32>, vector<8x8xf32> -> vector<8x8xf32>
    %119 = arith.maximumf %117, %118 : vector<8x8xf32>
    %c0_82 = arith.constant 0 : index
    %c31 = arith.constant 31 : index
    %120 = vector.load %arg12[%c0_82, %c31] : memref<8x110xf32, #tpu.memory_space<vmem>>, vector<8x8xf32>
    tpu.vector_store %arg12[%c0_82, %c31], %119 {strides = array<i32>} : memref<8x110xf32, #tpu.memory_space<vmem>>, vector<8x8xf32>,
    %c0_83 = arith.constant 0 : index
    %c108 = arith.constant 108 : index
    %121 = vector.load %arg11[%c0_83, %c108] : memref<8x288xf32, #tpu.memory_space<vmem>>, vector<8x16xf32>
    %c0_84 = arith.constant 0 : index
    %c126 = arith.constant 126 : index
    %122 = vector.load %arg11[%c0_84, %c126] : memref<8x288xf32, #tpu.memory_space<vmem>>, vector<8x16xf32>
    %123 = arith.maximumf %121, %122 : vector<8x16xf32>
    %cst_85 = arith.constant dense<0.000000e+00> : vector<8x8xf32>
    %124 = tpu.matmul %123, %91, %cst_85 {dimension_numbers = #tpu.dot_dimension_numbers<[1], [0], [0], [1], [0, 0, 1, 1], [], []>} : vector<8x16xf32>, vector<16x8xf32>, vector<8x8xf32> -> vector<8x8xf32>
    %cst_86 = arith.constant dense<0.000000e+00> : vector<8x8xf32>
    %125 = tpu.matmul %123, %99, %cst_86 {dimension_numbers = #tpu.dot_dimension_numbers<[1], [0], [0], [1], [0, 0, 1, 1], [], []>} : vector<8x16xf32>, vector<16x8xf32>, vector<8x8xf32> -> vector<8x8xf32>
    %126 = arith.maximumf %124, %125 : vector<8x8xf32>
    %c0_87 = arith.constant 0 : index
    %c41 = arith.constant 41 : index
    %127 = vector.load %arg12[%c0_87, %c41] : memref<8x110xf32, #tpu.memory_space<vmem>>, vector<8x8xf32>
    tpu.vector_store %arg12[%c0_87, %c41], %126 {strides = array<i32>} : memref<8x110xf32, #tpu.memory_space<vmem>>, vector<8x8xf32>,
    %c0_88 = arith.constant 0 : index
    %c144 = arith.constant 144 : index
    %128 = vector.load %arg11[%c0_88, %c144] : memref<8x288xf32, #tpu.memory_space<vmem>>, vector<8x16xf32>
    %c0_89 = arith.constant 0 : index
    %c162 = arith.constant 162 : index
    %129 = vector.load %arg11[%c0_89, %c162] : memref<8x288xf32, #tpu.memory_space<vmem>>, vector<8x16xf32>
    %130 = arith.maximumf %128, %129 : vector<8x16xf32>
    %cst_90 = arith.constant dense<0.000000e+00> : vector<8x8xf32>
    %131 = tpu.matmul %130, %91, %cst_90 {dimension_numbers = #tpu.dot_dimension_numbers<[1], [0], [0], [1], [0, 0, 1, 1], [], []>} : vector<8x16xf32>, vector<16x8xf32>, vector<8x8xf32> -> vector<8x8xf32>
    %cst_91 = arith.constant dense<0.000000e+00> : vector<8x8xf32>
    %132 = tpu.matmul %130, %99, %cst_91 {dimension_numbers = #tpu.dot_dimension_numbers<[1], [0], [0], [1], [0, 0, 1, 1], [], []>} : vector<8x16xf32>, vector<16x8xf32>, vector<8x8xf32> -> vector<8x8xf32>
    %133 = arith.maximumf %131, %132 : vector<8x8xf32>
    %c0_92 = arith.constant 0 : index
    %c51 = arith.constant 51 : index
    %134 = vector.load %arg12[%c0_92, %c51] : memref<8x110xf32, #tpu.memory_space<vmem>>, vector<8x8xf32>
    tpu.vector_store %arg12[%c0_92, %c51], %133 {strides = array<i32>} : memref<8x110xf32, #tpu.memory_space<vmem>>, vector<8x8xf32>,
    %c0_93 = arith.constant 0 : index
    %c180 = arith.constant 180 : index
    %135 = vector.load %arg11[%c0_93, %c180] : memref<8x288xf32, #tpu.memory_space<vmem>>, vector<8x16xf32>
    %c0_94 = arith.constant 0 : index
    %c198 = arith.constant 198 : index
    %136 = vector.load %arg11[%c0_94, %c198] : memref<8x288xf32, #tpu.memory_space<vmem>>, vector<8x16xf32>
    %137 = arith.maximumf %135, %136 : vector<8x16xf32>
    %cst_95 = arith.constant dense<0.000000e+00> : vector<8x8xf32>
    %138 = tpu.matmul %137, %91, %cst_95 {dimension_numbers = #tpu.dot_dimension_numbers<[1], [0], [0], [1], [0, 0, 1, 1], [], []>} : vector<8x16xf32>, vector<16x8xf32>, vector<8x8xf32> -> vector<8x8xf32>
    %cst_96 = arith.constant dense<0.000000e+00> : vector<8x8xf32>
    %139 = tpu.matmul %137, %99, %cst_96 {dimension_numbers = #tpu.dot_dimension_numbers<[1], [0], [0], [1], [0, 0, 1, 1], [], []>} : vector<8x16xf32>, vector<16x8xf32>, vector<8x8xf32> -> vector<8x8xf32>
    %140 = arith.maximumf %138, %139 : vector<8x8xf32>
    %c0_97 = arith.constant 0 : index
    %c61 = arith.constant 61 : index
    %141 = vector.load %arg12[%c0_97, %c61] : memref<8x110xf32, #tpu.memory_space<vmem>>, vector<8x8xf32>
    tpu.vector_store %arg12[%c0_97, %c61], %140 {strides = array<i32>} : memref<8x110xf32, #tpu.memory_space<vmem>>, vector<8x8xf32>,
    %c0_98 = arith.constant 0 : index
    %c216 = arith.constant 216 : index
    %142 = vector.load %arg11[%c0_98, %c216] : memref<8x288xf32, #tpu.memory_space<vmem>>, vector<8x16xf32>
    %c0_99 = arith.constant 0 : index
    %c234 = arith.constant 234 : index
    %143 = vector.load %arg11[%c0_99, %c234] : memref<8x288xf32, #tpu.memory_space<vmem>>, vector<8x16xf32>
    %144 = arith.maximumf %142, %143 : vector<8x16xf32>
    %cst_100 = arith.constant dense<0.000000e+00> : vector<8x8xf32>
    %145 = tpu.matmul %144, %91, %cst_100 {dimension_numbers = #tpu.dot_dimension_numbers<[1], [0], [0], [1], [0, 0, 1, 1], [], []>} : vector<8x16xf32>, vector<16x8xf32>, vector<8x8xf32> -> vector<8x8xf32>
    %cst_101 = arith.constant dense<0.000000e+00> : vector<8x8xf32>
    %146 = tpu.matmul %144, %99, %cst_101 {dimension_numbers = #tpu.dot_dimension_numbers<[1], [0], [0], [1], [0, 0, 1, 1], [], []>} : vector<8x16xf32>, vector<16x8xf32>, vector<8x8xf32> -> vector<8x8xf32>
    %147 = arith.maximumf %145, %146 : vector<8x8xf32>
    %c0_102 = arith.constant 0 : index
    %c71 = arith.constant 71 : index
    %148 = vector.load %arg12[%c0_102, %c71] : memref<8x110xf32, #tpu.memory_space<vmem>>, vector<8x8xf32>
    tpu.vector_store %arg12[%c0_102, %c71], %147 {strides = array<i32>} : memref<8x110xf32, #tpu.memory_space<vmem>>, vector<8x8xf32>,
    %c0_103 = arith.constant 0 : index
    %c252 = arith.constant 252 : index
    %149 = vector.load %arg11[%c0_103, %c252] : memref<8x288xf32, #tpu.memory_space<vmem>>, vector<8x16xf32>
    %c0_104 = arith.constant 0 : index
    %c270 = arith.constant 270 : index
    %150 = vector.load %arg11[%c0_104, %c270] : memref<8x288xf32, #tpu.memory_space<vmem>>, vector<8x16xf32>
    %151 = arith.maximumf %149, %150 : vector<8x16xf32>
    %cst_105 = arith.constant dense<0.000000e+00> : vector<8x8xf32>
    %152 = tpu.matmul %151, %91, %cst_105 {dimension_numbers = #tpu.dot_dimension_numbers<[1], [0], [0], [1], [0, 0, 1, 1], [], []>} : vector<8x16xf32>, vector<16x8xf32>, vector<8x8xf32> -> vector<8x8xf32>
    %cst_106 = arith.constant dense<0.000000e+00> : vector<8x8xf32>
    %153 = tpu.matmul %151, %99, %cst_106 {dimension_numbers = #tpu.dot_dimension_numbers<[1], [0], [0], [1], [0, 0, 1, 1], [], []>} : vector<8x16xf32>, vector<16x8xf32>, vector<8x8xf32> -> vector<8x8xf32>
    %154 = arith.maximumf %152, %153 : vector<8x8xf32>
    %c0_107 = arith.constant 0 : index
    %c81 = arith.constant 81 : index
    %155 = vector.load %arg12[%c0_107, %c81] : memref<8x110xf32, #tpu.memory_space<vmem>>, vector<8x8xf32>
    tpu.vector_store %arg12[%c0_107, %c81], %154 {strides = array<i32>} : memref<8x110xf32, #tpu.memory_space<vmem>>, vector<8x8xf32>,
    %c0_108 = arith.constant 0 : index
    %c0_109 = arith.constant 0 : index
    %156 = vector.load %arg12[%c0_108, %c0_109] : memref<8x110xf32, #tpu.memory_space<vmem>>, vector<8x80xf32>
    %c0_110 = arith.constant 0 : index
    %c0_111 = arith.constant 0 : index
    %157 = vector.load %arg13[%c0_110, %c0_111] : memref<72x80xf32, #tpu.memory_space<vmem>>, vector<8x80xf32>
    tpu.vector_store %arg13[%c0_110, %c0_111], %156 {strides = array<i32>} : memref<72x80xf32, #tpu.memory_space<vmem>>, vector<8x80xf32>,
    %c0_112 = arith.constant 0 : index
    %c1_113 = arith.constant 1 : index
    %158 = vector.load %arg12[%c0_112, %c1_113] : memref<8x110xf32, #tpu.memory_space<vmem>>, vector<8x80xf32>
    %c8_114 = arith.constant 8 : index
    %c0_115 = arith.constant 0 : index
    %159 = vector.load %arg13[%c8_114, %c0_115] : memref<72x80xf32, #tpu.memory_space<vmem>>, vector<8x80xf32>
    tpu.vector_store %arg13[%c8_114, %c0_115], %158 {strides = array<i32>} : memref<72x80xf32, #tpu.memory_space<vmem>>, vector<8x80xf32>,
    %c0_116 = arith.constant 0 : index
    %c2_117 = arith.constant 2 : index
    %160 = vector.load %arg12[%c0_116, %c2_117] : memref<8x110xf32, #tpu.memory_space<vmem>>, vector<8x80xf32>
    %c16 = arith.constant 16 : index
    %c0_118 = arith.constant 0 : index
    %161 = vector.load %arg13[%c16, %c0_118] : memref<72x80xf32, #tpu.memory_space<vmem>>, vector<8x80xf32>
    tpu.vector_store %arg13[%c16, %c0_118], %160 {strides = array<i32>} : memref<72x80xf32, #tpu.memory_space<vmem>>, vector<8x80xf32>,
    %c0_119 = arith.constant 0 : index
    %c10 = arith.constant 10 : index
    %162 = vector.load %arg12[%c0_119, %c10] : memref<8x110xf32, #tpu.memory_space<vmem>>, vector<8x80xf32>
    %c24 = arith.constant 24 : index
    %c0_120 = arith.constant 0 : index
    %163 = vector.load %arg13[%c24, %c0_120] : memref<72x80xf32, #tpu.memory_space<vmem>>, vector<8x80xf32>
    tpu.vector_store %arg13[%c24, %c0_120], %162 {strides = array<i32>} : memref<72x80xf32, #tpu.memory_space<vmem>>, vector<8x80xf32>,
    %c0_121 = arith.constant 0 : index
    %c11_122 = arith.constant 11 : index
    %164 = vector.load %arg12[%c0_121, %c11_122] : memref<8x110xf32, #tpu.memory_space<vmem>>, vector<8x80xf32>
    %c32 = arith.constant 32 : index
    %c0_123 = arith.constant 0 : index
    %165 = vector.load %arg13[%c32, %c0_123] : memref<72x80xf32, #tpu.memory_space<vmem>>, vector<8x80xf32>
    tpu.vector_store %arg13[%c32, %c0_123], %164 {strides = array<i32>} : memref<72x80xf32, #tpu.memory_space<vmem>>, vector<8x80xf32>,
    %c0_124 = arith.constant 0 : index
    %c12 = arith.constant 12 : index
    %166 = vector.load %arg12[%c0_124, %c12] : memref<8x110xf32, #tpu.memory_space<vmem>>, vector<8x80xf32>
    %c40 = arith.constant 40 : index
    %c0_125 = arith.constant 0 : index
    %167 = vector.load %arg13[%c40, %c0_125] : memref<72x80xf32, #tpu.memory_space<vmem>>, vector<8x80xf32>
    tpu.vector_store %arg13[%c40, %c0_125], %166 {strides = array<i32>} : memref<72x80xf32, #tpu.memory_space<vmem>>, vector<8x80xf32>,
    %c0_126 = arith.constant 0 : index
    %c20_127 = arith.constant 20 : index
    %168 = vector.load %arg12[%c0_126, %c20_127] : memref<8x110xf32, #tpu.memory_space<vmem>>, vector<8x80xf32>
    %c48 = arith.constant 48 : index
    %c0_128 = arith.constant 0 : index
    %169 = vector.load %arg13[%c48, %c0_128] : memref<72x80xf32, #tpu.memory_space<vmem>>, vector<8x80xf32>
    tpu.vector_store %arg13[%c48, %c0_128], %168 {strides = array<i32>} : memref<72x80xf32, #tpu.memory_space<vmem>>, vector<8x80xf32>,
    %c0_129 = arith.constant 0 : index
    %c21_130 = arith.constant 21 : index
    %170 = vector.load %arg12[%c0_129, %c21_130] : memref<8x110xf32, #tpu.memory_space<vmem>>, vector<8x80xf32>
    %c56 = arith.constant 56 : index
    %c0_131 = arith.constant 0 : index
    %171 = vector.load %arg13[%c56, %c0_131] : memref<72x80xf32, #tpu.memory_space<vmem>>, vector<8x80xf32>
    tpu.vector_store %arg13[%c56, %c0_131], %170 {strides = array<i32>} : memref<72x80xf32, #tpu.memory_space<vmem>>, vector<8x80xf32>,
    %c0_132 = arith.constant 0 : index
    %c22 = arith.constant 22 : index
    %172 = vector.load %arg12[%c0_132, %c22] : memref<8x110xf32, #tpu.memory_space<vmem>>, vector<8x80xf32>
    %c64 = arith.constant 64 : index
    %c0_133 = arith.constant 0 : index
    %173 = vector.load %arg13[%c64, %c0_133] : memref<72x80xf32, #tpu.memory_space<vmem>>, vector<8x80xf32>
    tpu.vector_store %arg13[%c64, %c0_133], %172 {strides = array<i32>} : memref<72x80xf32, #tpu.memory_space<vmem>>, vector<8x80xf32>,
    %c0_134 = arith.constant 0 : index
    %c0_135 = arith.constant 0 : index
    %174 = vector.load %arg5[%c0_134, %c0_135] : memref<8x72xf32, #tpu.memory_space<vmem>>, vector<8x72xf32>
    %c0_136 = arith.constant 0 : index
    %c0_137 = arith.constant 0 : index
    %175 = vector.load %arg13[%c0_136, %c0_137] : memref<72x80xf32, #tpu.memory_space<vmem>>, vector<72x80xf32>
    %cst_138 = arith.constant dense<0.000000e+00> : vector<8x80xf32>
    %176 = tpu.matmul %174, %175, %cst_138 {dimension_numbers = #tpu.dot_dimension_numbers<[1], [0], [0], [1], [0, 0, 1, 1], [], []>} : vector<8x72xf32>, vector<72x80xf32>, vector<8x80xf32> -> vector<8x80xf32>
    %c0_139 = arith.constant 0 : index
    %c0_140 = arith.constant 0 : index
    %177 = vector.load %arg6[%c0_139, %c0_140] : memref<8x1xf32, #tpu.memory_space<vmem>>, vector<8x1xf32>
    %178 = vector.broadcast %177 : vector<8x1xf32> to vector<8x80xf32>
    %179 = arith.mulf %176, %178 : vector<8x80xf32>
    %c0_141 = arith.constant 0 : index
    %c0_142 = arith.constant 0 : index
    %180 = vector.load %arg7[%c0_141, %c0_142] : memref<8x1xf32, #tpu.memory_space<vmem>>, vector<8x1xf32>
    %181 = vector.broadcast %180 : vector<8x1xf32> to vector<8x80xf32>
    %182 = arith.addf %179, %181 : vector<8x80xf32>
    %cst_143 = arith.constant 0.000000e+00 : f32
    %183 = vector.broadcast %cst_143 : f32 to vector<8x80xf32>
    %184 = arith.maximumf %182, %183 : vector<8x80xf32>
    %c0_144 = arith.constant 0 : index
    %c0_145 = arith.constant 0 : index
    %185 = vector.load %arg14[%c0_144, %c0_145] : memref<8x80xf32, #tpu.memory_space<vmem>>, vector<8x80xf32>
    tpu.vector_store %arg14[%c0_144, %c0_145], %184 {strides = array<i32>} : memref<8x80xf32, #tpu.memory_space<vmem>>, vector<8x80xf32>,
    %186 = tpu.iota {dimensions = array<i32: 0>} : vector<8x4xi32>
    %187 = tpu.iota {dimensions = array<i32: 1>} : vector<8x4xi32>
    %c2_i32_146 = arith.constant 2 : i32
    %188 = vector.broadcast %c2_i32_146 : i32 to vector<8x4xi32>
    %189 = arith.muli %188, %187 : vector<8x4xi32>
    %190 = arith.cmpi eq, %186, %189 : vector<8x4xi32>
    %cst_147 = arith.constant 1.000000e+00 : f32
    %cst_148 = arith.constant 0.000000e+00 : f32
    %191 = vector.broadcast %cst_147 : f32 to vector<8x4xf32>
    %192 = vector.broadcast %cst_148 : f32 to vector<8x4xf32>
    %193 = arith.select %190, %191, %192 : vector<8x4xi1>, vector<8x4xf32>
    %c2_i32_149 = arith.constant 2 : i32
    %194 = vector.broadcast %c2_i32_149 : i32 to vector<8x4xi32>
    %195 = arith.muli %194, %187 : vector<8x4xi32>
    %c1_i32_150 = arith.constant 1 : i32
    %196 = vector.broadcast %c1_i32_150 : i32 to vector<8x4xi32>
    %197 = arith.addi %195, %196 : vector<8x4xi32>
    %198 = arith.cmpi eq, %186, %197 : vector<8x4xi32>
    %cst_151 = arith.constant 1.000000e+00 : f32
    %cst_152 = arith.constant 0.000000e+00 : f32
    %199 = vector.broadcast %cst_151 : f32 to vector<8x4xf32>
    %200 = vector.broadcast %cst_152 : f32 to vector<8x4xf32>
    %201 = arith.select %198, %199, %200 : vector<8x4xi1>, vector<8x4xf32>
    %c0_153 = arith.constant 0 : index
    %c0_154 = arith.constant 0 : index
    %202 = vector.load %arg14[%c0_153, %c0_154] : memref<8x80xf32, #tpu.memory_space<vmem>>, vector<8x8xf32>
    %c0_155 = arith.constant 0 : index
    %c10_156 = arith.constant 10 : index
    %203 = vector.load %arg14[%c0_155, %c10_156] : memref<8x80xf32, #tpu.memory_space<vmem>>, vector<8x8xf32>
    %204 = arith.maximumf %202, %203 : vector<8x8xf32>
    %cst_157 = arith.constant dense<0.000000e+00> : vector<8x4xf32>
    %205 = tpu.matmul %204, %193, %cst_157 {dimension_numbers = #tpu.dot_dimension_numbers<[1], [0], [0], [1], [0, 0, 1, 1], [], []>} : vector<8x8xf32>, vector<8x4xf32>, vector<8x4xf32> -> vector<8x4xf32>
    %cst_158 = arith.constant dense<0.000000e+00> : vector<8x4xf32>
    %206 = tpu.matmul %204, %201, %cst_158 {dimension_numbers = #tpu.dot_dimension_numbers<[1], [0], [0], [1], [0, 0, 1, 1], [], []>} : vector<8x8xf32>, vector<8x4xf32>, vector<8x4xf32> -> vector<8x4xf32>
    %207 = arith.maximumf %205, %206 : vector<8x4xf32>
    %c0_159 = arith.constant 0 : index
    %c0_160 = arith.constant 0 : index
    %c0_161 = arith.constant 0 : index
    %208 = vector.load %arg8[%c0_159, %c0_160, %c0_161] : memref<1x8x16xf32, #tpu.memory_space<vmem>>, vector<1x8x4xf32>
    %209 = vector.shape_cast %208 : vector<1x8x4xf32> to vector<8x4xf32>
    %210 = vector.shape_cast %207 : vector<8x4xf32> to vector<1x8x4xf32>
    tpu.vector_store %arg8[%c0_159, %c0_160, %c0_161], %210 {strides = array<i32>} : memref<1x8x16xf32, #tpu.memory_space<vmem>>, vector<1x8x4xf32>,
    %c0_162 = arith.constant 0 : index
    %c20_163 = arith.constant 20 : index
    %211 = vector.load %arg14[%c0_162, %c20_163] : memref<8x80xf32, #tpu.memory_space<vmem>>, vector<8x8xf32>
    %c0_164 = arith.constant 0 : index
    %c30 = arith.constant 30 : index
    %212 = vector.load %arg14[%c0_164, %c30] : memref<8x80xf32, #tpu.memory_space<vmem>>, vector<8x8xf32>
    %213 = arith.maximumf %211, %212 : vector<8x8xf32>
    %cst_165 = arith.constant dense<0.000000e+00> : vector<8x4xf32>
    %214 = tpu.matmul %213, %193, %cst_165 {dimension_numbers = #tpu.dot_dimension_numbers<[1], [0], [0], [1], [0, 0, 1, 1], [], []>} : vector<8x8xf32>, vector<8x4xf32>, vector<8x4xf32> -> vector<8x4xf32>
    %cst_166 = arith.constant dense<0.000000e+00> : vector<8x4xf32>
    %215 = tpu.matmul %213, %201, %cst_166 {dimension_numbers = #tpu.dot_dimension_numbers<[1], [0], [0], [1], [0, 0, 1, 1], [], []>} : vector<8x8xf32>, vector<8x4xf32>, vector<8x4xf32> -> vector<8x4xf32>
    %216 = arith.maximumf %214, %215 : vector<8x4xf32>
    %c0_167 = arith.constant 0 : index
    %c0_168 = arith.constant 0 : index
    %c4_169 = arith.constant 4 : index
    %217 = vector.load %arg8[%c0_167, %c0_168, %c4_169] : memref<1x8x16xf32, #tpu.memory_space<vmem>>, vector<1x8x4xf32>
    %218 = vector.shape_cast %217 : vector<1x8x4xf32> to vector<8x4xf32>
    %219 = vector.shape_cast %216 : vector<8x4xf32> to vector<1x8x4xf32>
    tpu.vector_store %arg8[%c0_167, %c0_168, %c4_169], %219 {strides = array<i32>} : memref<1x8x16xf32, #tpu.memory_space<vmem>>, vector<1x8x4xf32>,
    %c0_170 = arith.constant 0 : index
    %c40_171 = arith.constant 40 : index
    %220 = vector.load %arg14[%c0_170, %c40_171] : memref<8x80xf32, #tpu.memory_space<vmem>>, vector<8x8xf32>
    %c0_172 = arith.constant 0 : index
    %c50 = arith.constant 50 : index
    %221 = vector.load %arg14[%c0_172, %c50] : memref<8x80xf32, #tpu.memory_space<vmem>>, vector<8x8xf32>
    %222 = arith.maximumf %220, %221 : vector<8x8xf32>
    %cst_173 = arith.constant dense<0.000000e+00> : vector<8x4xf32>
    %223 = tpu.matmul %222, %193, %cst_173 {dimension_numbers = #tpu.dot_dimension_numbers<[1], [0], [0], [1], [0, 0, 1, 1], [], []>} : vector<8x8xf32>, vector<8x4xf32>, vector<8x4xf32> -> vector<8x4xf32>
    %cst_174 = arith.constant dense<0.000000e+00> : vector<8x4xf32>
    %224 = tpu.matmul %222, %201, %cst_174 {dimension_numbers = #tpu.dot_dimension_numbers<[1], [0], [0], [1], [0, 0, 1, 1], [], []>} : vector<8x8xf32>, vector<8x4xf32>, vector<8x4xf32> -> vector<8x4xf32>
    %225 = arith.maximumf %223, %224 : vector<8x4xf32>
    %c0_175 = arith.constant 0 : index
    %c0_176 = arith.constant 0 : index
    %c8_177 = arith.constant 8 : index
    %226 = vector.load %arg8[%c0_175, %c0_176, %c8_177] : memref<1x8x16xf32, #tpu.memory_space<vmem>>, vector<1x8x4xf32>
    %227 = vector.shape_cast %226 : vector<1x8x4xf32> to vector<8x4xf32>
    %228 = vector.shape_cast %225 : vector<8x4xf32> to vector<1x8x4xf32>
    tpu.vector_store %arg8[%c0_175, %c0_176, %c8_177], %228 {strides = array<i32>} : memref<1x8x16xf32, #tpu.memory_space<vmem>>, vector<1x8x4xf32>,
    %c0_178 = arith.constant 0 : index
    %c60 = arith.constant 60 : index
    %229 = vector.load %arg14[%c0_178, %c60] : memref<8x80xf32, #tpu.memory_space<vmem>>, vector<8x8xf32>
    %c0_179 = arith.constant 0 : index
    %c70 = arith.constant 70 : index
    %230 = vector.load %arg14[%c0_179, %c70] : memref<8x80xf32, #tpu.memory_space<vmem>>, vector<8x8xf32>
    %231 = arith.maximumf %229, %230 : vector<8x8xf32>
    %cst_180 = arith.constant dense<0.000000e+00> : vector<8x4xf32>
    %232 = tpu.matmul %231, %193, %cst_180 {dimension_numbers = #tpu.dot_dimension_numbers<[1], [0], [0], [1], [0, 0, 1, 1], [], []>} : vector<8x8xf32>, vector<8x4xf32>, vector<8x4xf32> -> vector<8x4xf32>
    %cst_181 = arith.constant dense<0.000000e+00> : vector<8x4xf32>
    %233 = tpu.matmul %231, %201, %cst_181 {dimension_numbers = #tpu.dot_dimension_numbers<[1], [0], [0], [1], [0, 0, 1, 1], [], []>} : vector<8x8xf32>, vector<8x4xf32>, vector<8x4xf32> -> vector<8x4xf32>
    %234 = arith.maximumf %232, %233 : vector<8x4xf32>
    %c0_182 = arith.constant 0 : index
    %c0_183 = arith.constant 0 : index
    %c12_184 = arith.constant 12 : index
    %235 = vector.load %arg8[%c0_182, %c0_183, %c12_184] : memref<1x8x16xf32, #tpu.memory_space<vmem>>, vector<1x8x4xf32>
    %236 = vector.shape_cast %235 : vector<1x8x4xf32> to vector<8x4xf32>
    %237 = vector.shape_cast %234 : vector<8x4xf32> to vector<1x8x4xf32>
    tpu.vector_store %arg8[%c0_182, %c0_183, %c12_184], %237 {strides = array<i32>} : memref<1x8x16xf32, #tpu.memory_space<vmem>>, vector<1x8x4xf32>,
    return
  }
  func.func @transform_0(%arg0: i32) -> (i32, i32, i32, i32) {
    %c0_i32 = arith.constant 0 : i32
    %c0_i32_0 = arith.constant 0 : i32
    %c0_i32_1 = arith.constant 0 : i32
    %c0_i32_2 = arith.constant 0 : i32
    return %arg0, %c0_i32, %c0_i32_0, %c0_i32_1 : i32, i32, i32, i32
  }
  func.func @transform_1(%arg0: i32) -> (i32, i32) {
    %c0_i32 = arith.constant 0 : i32
    %c0_i32_0 = arith.constant 0 : i32
    %c0_i32_1 = arith.constant 0 : i32
    return %c0_i32, %c0_i32_0 : i32, i32
  }
  func.func @transform_2(%arg0: i32) -> (i32, i32) {
    %c0_i32 = arith.constant 0 : i32
    %c0_i32_0 = arith.constant 0 : i32
    %c0_i32_1 = arith.constant 0 : i32
    return %c0_i32, %c0_i32_0 : i32, i32
  }
  func.func @transform_3(%arg0: i32) -> (i32, i32) {
    %c0_i32 = arith.constant 0 : i32
    %c0_i32_0 = arith.constant 0 : i32
    %c0_i32_1 = arith.constant 0 : i32
    return %c0_i32, %c0_i32_0 : i32, i32
  }
  func.func @transform_4(%arg0: i32) -> (i32, i32) {
    %c0_i32 = arith.constant 0 : i32
    %c0_i32_0 = arith.constant 0 : i32
    %c0_i32_1 = arith.constant 0 : i32
    return %c0_i32, %c0_i32_0 : i32, i32
  }
  func.func @transform_5(%arg0: i32) -> (i32, i32) {
    %c0_i32 = arith.constant 0 : i32
    %c0_i32_0 = arith.constant 0 : i32
    %c0_i32_1 = arith.constant 0 : i32
    return %c0_i32, %c0_i32_0 : i32, i32
  }
  func.func @transform_6(%arg0: i32) -> (i32, i32) {
    %c0_i32 = arith.constant 0 : i32
    %c0_i32_0 = arith.constant 0 : i32
    %c0_i32_1 = arith.constant 0 : i32
    return %c0_i32, %c0_i32_0 : i32, i32
  }
  func.func @transform_7(%arg0: i32) -> (i32, i32, i32) {
    %c0_i32 = arith.constant 0 : i32
    %c0_i32_0 = arith.constant 0 : i32
    %c0_i32_1 = arith.constant 0 : i32
    return %arg0, %c0_i32, %c0_i32_0 : i32, i32, i32
  }
}

</mosaic_0001>

<llo_original>
// kernel: tpu_custom_call.1
$region0: #{tpu_custom_call.1}
  #allocation0 [shape = 'u32[]', space=smem, size = 0x4, offset = 0x4, fixed_abs, tag = 'smem constant byte address 0x4 - core index']
  #allocation1 [shape = 'u32[144,128]{1,0:T(1,128)}', space=vmem, size = 0x12000, scoped, tag = 'internal scratch']
  #allocation2 [shape = 'f32[1,342]{1,0:T(1,128)}', space=vmem, size = 0x600, scoped, tag = 'scratch operand']
  #allocation3 [shape = 'f32[9,288]{1,0:T(8,128)}', space=vmem, size = 0x6000, scoped, tag = 'scratch operand']
  #allocation4 [shape = 'f32[8,288]{1,0:T(8,128)}', space=vmem, size = 0x3000, scoped, tag = 'scratch operand']
  #allocation5 [shape = 'f32[8,110]{1,0:T(8,128)}', space=vmem, size = 0x1000, scoped, tag = 'scratch operand']
  #allocation6 [shape = 'f32[72,80]{1,0:T(8,128)}', space=vmem, size = 0x9000, scoped, tag = 'scratch operand']
  #allocation7 [shape = 'f32[8,80]{1,0:T(8,128)}', space=vmem, size = 0x1000, scoped, tag = 'scratch operand']
  %s0 = inlined_call_operand.vmem [shape: f32[2,1,16,16], index: 0, kind: input, shape index: {}]
  %s1 = inlined_call_operand.hbm [shape: f32[8,9], index: 1, kind: input, shape index: {}]
  %s2 = inlined_call_operand.vmem [shape: f32[8,1], index: 2, kind: input, shape index: {}]
  %s3 = inlined_call_operand.vmem [shape: f32[8,1], index: 3, kind: input, shape index: {}]
  %s4 = inlined_call_operand.vmem [shape: f32[8,72], index: 4, kind: input, shape index: {}]
  %s5 = inlined_call_operand.vmem [shape: f32[8,1], index: 5, kind: input, shape index: {}]
  %s6 = inlined_call_operand.vmem [shape: f32[8,1], index: 6, kind: input, shape index: {}]
  %s7 = inlined_call_operand.hbm [shape: f32[2,8,16], index: 7, kind: output, shape index: {}]
  %s8 = sld [smem:[#allocation0]]
  $region65: #{tpu_custom_call.1} parent=0
    _
  %s10 = ssub.s32 1, %s8
  %s11 = scalar_select 0, %s10, %s8
  $region1: #{tpu_custom_call.1} parent=0
    #allocation8 [shape = 'u8[4096]{0}', space=vmem, size = 0x1000, scoped, tag = 'input window, operand 1, single buffered']
    #allocation9 [shape = 's32[2]{0}', space=sflag, size = 0x8, scoped, tag = 'scoped memory for tpu_custom_call.1']
    #allocation10 [shape = 's32[2]{0}', space=sflag, size = 0x8, scoped, tag = 'scoped memory for tpu_custom_call.1']
    #allocation11 [shape = 'u8[8192]{0}', space=vmem, size = 0x2000, scoped, tag = 'output window, operand 0']
    %12 = vsyncpa [#allocation9], 0
    %13 = vsyncpa [#allocation10], 0
    %s14 = scalar_lea.sflag [#allocation10], 1
    %15 = vsyncpa %s14, 0
    loop: start=0, step=1, limit=4
    $region2: #{tpu_custom_call.1} parent=1 // loop_pre_header
      _
    $region3: #{tpu_custom_call.1} parent=1 // loop_header
      %s17 = sphi 0, %s21
      %p18 = scmp.ge.s32.totalorder %s17, 4
      %s27 = sphi 0, %s29
      %s30 = sphi 0, %s27
      %s31 = sphi 0, %s30
      %s47 = sphi 0, %s31
      %s51 = sphi 0, %s51
      %s53 = sphi 0, %s51
      %s54 = sphi 0, %s53
      %s68 = sphi 0, %s54
      %s72 = sphi 0, %s72
      %s74 = sphi 0, %s72
      %s75 = sphi 0, %s74
      %s89 = sphi 0, %s75
      %s93 = sphi 0, %s93
      %s95 = sphi 0, %s93
      %s96 = sphi 0, %s95
      %s110 = sphi 0, %s96
      %s114 = sphi 0, %s114
      %s116 = sphi 0, %s114
      %s117 = sphi 0, %s116
      %s131 = sphi 0, %s117
      %s135 = sphi 0, %s135
      %s137 = sphi 0, %s135
      %s138 = sphi 0, %s137
      %s152 = sphi 0, %s138
      %s156 = sphi 0, %s156
      %s158 = sphi 0, %s156
      %s159 = sphi 0, %s158
      %s173 = sphi 0, %s159
      %s179 = sphi 0, %s181
      %s182 = sphi 0, %s179
      %s183 = sphi 0, %s182
      %s199 = sphi 0, %s183
    $region4: #{tpu_custom_call.1} parent=1 // loop_header_branch
      %20 = sbr.rel (%p18) target = $region8
    $region5: #{tpu_custom_call.1} parent=1 // loop_body
      %s22 = ssub.s32 %s17, 1
      %s23 = ssub.s32 %s17, 2
      %s24 = sadd.s32 %s17, 1
      %s25 = ssub.s32 %s17, %s24
      %p26 = scmp.eq.s32.totalorder %s25, 0
      %s28 = sadd.s32 %s27, 1
      %s29 = scalar_select %p26, %s27, %s28
      %p32 = pneg %p26
      %p33 = scmp.eq.s32.totalorder %s17, 1
      %p34 = por %p32, %p33
      %p35 = scmp.ne.s32.totalorder %s27, %s30
      %p36 = scmp.eq.s32.totalorder %s17, 0
      %p37 = por %p35, %p36
      %p38 = scmp.ne.s32.totalorder %s27, %s30
      %p39 = scmp.eq.s32.totalorder %s22, 1
      %p40 = por %p38, %p39
      %p41 = scmp.ne.s32.totalorder %s30, %s31
      %p42 = scmp.eq.s32.totalorder %s22, 0
      %p43 = por %p41, %p42
      %p44 = scmp.ne.s32.totalorder %s30, %s31
      %p45 = scmp.eq.s32.totalorder %s23, 1
      %p46 = por %p44, %p45
      %p48 = scmp.ne.s32.totalorder %s31, %s47
      %p49 = scmp.eq.s32.totalorder %s23, 0
      %p50 = por %p48, %p49
      %s52 = sadd.s32 %s51, 1
      %p55 = scmp.eq.s32.totalorder %s17, 1
      %p56 = scmp.ne.s32.totalorder %s51, %s53
      %p57 = scmp.eq.s32.totalorder %s17, 0
      %p58 = por %p56, %p57
      %p59 = scmp.ne.s32.totalorder %s51, %s53
      %p60 = scmp.eq.s32.totalorder %s22, 1
      %p61 = por %p59, %p60
      %p62 = scmp.ne.s32.totalorder %s53, %s54
      %p63 = scmp.eq.s32.totalorder %s22, 0
      %p64 = por %p62, %p63
      %p65 = scmp.ne.s32.totalorder %s53, %s54
      %p66 = scmp.eq.s32.totalorder %s23, 1
      %p67 = por %p65, %p66
      %p69 = scmp.ne.s32.totalorder %s54, %s68
      %p70 = scmp.eq.s32.totalorder %s23, 0
      %p71 = por %p69, %p70
      %s73 = sadd.s32 %s72, 1
      %p76 = scmp.eq.s32.totalorder %s17, 1
      %p77 = scmp.ne.s32.totalorder %s72, %s74
      %p78 = scmp.eq.s32.totalorder %s17, 0
      %p79 = por %p77, %p78
      %p80 = scmp.ne.s32.totalorder %s72, %s74
      %p81 = scmp.eq.s32.totalorder %s22, 1
      %p82 = por %p80, %p81
      %p83 = scmp.ne.s32.totalorder %s74, %s75
      %p84 = scmp.eq.s32.totalorder %s22, 0
      %p85 = por %p83, %p84
      %p86 = scmp.ne.s32.totalorder %s74, %s75
      %p87 = scmp.eq.s32.totalorder %s23, 1
      %p88 = por %p86, %p87
      %p90 = scmp.ne.s32.totalorder %s75, %s89
      %p91 = scmp.eq.s32.totalorder %s23, 0
      %p92 = por %p90, %p91
      %s94 = sadd.s32 %s93, 1
      %p97 = scmp.eq.s32.totalorder %s17, 1
      %p98 = scmp.ne.s32.totalorder %s93, %s95
      %p99 = scmp.eq.s32.totalorder %s17, 0
      %p100 = por %p98, %p99
      %p101 = scmp.ne.s32.totalorder %s93, %s95
      %p102 = scmp.eq.s32.totalorder %s22, 1
      %p103 = por %p101, %p102
      %p104 = scmp.ne.s32.totalorder %s95, %s96
      %p105 = scmp.eq.s32.totalorder %s22, 0
      %p106 = por %p104, %p105
      %p107 = scmp.ne.s32.totalorder %s95, %s96
      %p108 = scmp.eq.s32.totalorder %s23, 1
      %p109 = por %p107, %p108
      %p111 = scmp.ne.s32.totalorder %s96, %s110
      %p112 = scmp.eq.s32.totalorder %s23, 0
      %p113 = por %p111, %p112
      %s115 = sadd.s32 %s114, 1
      %p118 = scmp.eq.s32.totalorder %s17, 1
      %p119 = scmp.ne.s32.totalorder %s114, %s116
      %p120 = scmp.eq.s32.totalorder %s17, 0
      %p121 = por %p119, %p120
      %p122 = scmp.ne.s32.totalorder %s114, %s116
      %p123 = scmp.eq.s32.totalorder %s22, 1
      %p124 = por %p122, %p123
      %p125 = scmp.ne.s32.totalorder %s116, %s117
      %p126 = scmp.eq.s32.totalorder %s22, 0
      %p127 = por %p125, %p126
      %p128 = scmp.ne.s32.totalorder %s116, %s117
      %p129 = scmp.eq.s32.totalorder %s23, 1
      %p130 = por %p128, %p129
      %p132 = scmp.ne.s32.totalorder %s117, %s131
      %p133 = scmp.eq.s32.totalorder %s23, 0
      %p134 = por %p132, %p133
      %s136 = sadd.s32 %s135, 1
      %p139 = scmp.eq.s32.totalorder %s17, 1
      %p140 = scmp.ne.s32.totalorder %s135, %s137
      %p141 = scmp.eq.s32.totalorder %s17, 0
      %p142 = por %p140, %p141
      %p143 = scmp.ne.s32.totalorder %s135, %s137
      %p144 = scmp.eq.s32.totalorder %s22, 1
      %p145 = por %p143, %p144
      %p146 = scmp.ne.s32.totalorder %s137, %s138
      %p147 = scmp.eq.s32.totalorder %s22, 0
      %p148 = por %p146, %p147
      %p149 = scmp.ne.s32.totalorder %s137, %s138
      %p150 = scmp.eq.s32.totalorder %s23, 1
      %p151 = por %p149, %p150
      %p153 = scmp.ne.s32.totalorder %s138, %s152
      %p154 = scmp.eq.s32.totalorder %s23, 0
      %p155 = por %p153, %p154
      %s157 = sadd.s32 %s156, 1
      %p160 = scmp.eq.s32.totalorder %s17, 1
      %p161 = scmp.ne.s32.totalorder %s156, %s158
      %p162 = scmp.eq.s32.totalorder %s17, 0
      %p163 = por %p161, %p162
      %p164 = scmp.ne.s32.totalorder %s156, %s158
      %p165 = scmp.eq.s32.totalorder %s22, 1
      %p166 = por %p164, %p165
      %p167 = scmp.ne.s32.totalorder %s158, %s159
      %p168 = scmp.eq.s32.totalorder %s22, 0
      %p169 = por %p167, %p168
      %p170 = scmp.ne.s32.totalorder %s158, %s159
      %p171 = scmp.eq.s32.totalorder %s23, 1
      %p172 = por %p170, %p171
      %p174 = scmp.ne.s32.totalorder %s159, %s173
      %p175 = scmp.eq.s32.totalorder %s23, 0
      %p176 = por %p174, %p175
      %s177 = ssub.s32 %s17, %s24
      %p178 = scmp.eq.s32.totalorder %s177, 0
      %s180 = sadd.s32 %s179, 1
      %s181 = scalar_select %p178, %s179, %s180
      %p184 = pneg %p178
      %p185 = scmp.eq.s32.totalorder %s17, 1
      %p186 = por %p184, %p185
      %p187 = scmp.ne.s32.totalorder %s179, %s182
      %p188 = scmp.eq.s32.totalorder %s17, 0
      %p189 = por %p187, %p188
      %p190 = scmp.ne.s32.totalorder %s179, %s182
      %p191 = scmp.eq.s32.totalorder %s22, 1
      %p192 = por %p190, %p191
      %p193 = scmp.ne.s32.totalorder %s182, %s183
      %p194 = scmp.eq.s32.totalorder %s22, 0
      %p195 = por %p193, %p194
      %p196 = scmp.ne.s32.totalorder %s182, %s183
      %p197 = scmp.eq.s32.totalorder %s23, 1
      %p198 = por %p196, %p197
      %p200 = scmp.ne.s32.totalorder %s183, %s199
      %p201 = scmp.eq.s32.totalorder %s23, 0
      %p202 = por %p200, %p201
      %p203 = scmp.le.s32.totalorder 1, %s17
      %p204 = scmp.lt.s32.totalorder %s17, 3
      %p205 = pnand %p203, %p204
      %p206 = pneg %p205
      // Predicated region
      $region9: #{tpu_custom_call.1} parent=5 // pred_check
        _
      $region10: #{tpu_custom_call.1} parent=5 // pred_check_branch
        %208 = sbr.rel (%p205) target = $region12
      $region11: #{tpu_custom_call.1} parent=5 // pred_region
        %s209 = ssub.s32 %s17, 1
        // Predicated region
        $region13: #{tpu_custom_call.1} parent=11 // pred_check
          %p210 = pneg %p64
        $region14: #{tpu_custom_call.1} parent=11 // pred_check_branch
          %212 = sbr.rel (%p210) target = $region16
        $region15: #{tpu_custom_call.1} parent=11 // pred_region
          %s214 = ssub.s32 128, 128
          %215 = vsyncadd [#allocation9], %s214
          %s217 = sshll.u32 [#allocation8], 4
          %s218 = int_to_ptr.vmem [resolvable:$true] %s217
          %220 = dma.hbm_to_vmem [thread:$0]  %s1, 128, %s218, [#allocation9]
        $region16: #{tpu_custom_call.1} parent=11 // pred_fallthru
          _
        // Predicated region
        $region17: #{tpu_custom_call.1} parent=11 // pred_check
          %p221 = pneg %p85
        $region18: #{tpu_custom_call.1} parent=11 // pred_check_branch
          %223 = sbr.rel (%p221) target = $region20
        $region19: #{tpu_custom_call.1} parent=11 // pred_region
          _
        $region20: #{tpu_custom_call.1} parent=11 // pred_fallthru
          _
        // Predicated region
        $region21: #{tpu_custom_call.1} parent=11 // pred_check
          %p224 = pneg %p106
        $region22: #{tpu_custom_call.1} parent=11 // pred_check_branch
          %226 = sbr.rel (%p224) target = $region24
        $region23: #{tpu_custom_call.1} parent=11 // pred_region
          _
        $region24: #{tpu_custom_call.1} parent=11 // pred_fallthru
          _
        // Predicated region
        $region25: #{tpu_custom_call.1} parent=11 // pred_check
          %p227 = pneg %p127
        $region26: #{tpu_custom_call.1} parent=11 // pred_check_branch
          %229 = sbr.rel (%p227) target = $region28
        $region27: #{tpu_custom_call.1} parent=11 // pred_region
          _
        $region28: #{tpu_custom_call.1} parent=11 // pred_fallthru
          _
        // Predicated region
        $region29: #{tpu_custom_call.1} parent=11 // pred_check
          %p230 = pneg %p148
        $region30: #{tpu_custom_call.1} parent=11 // pred_check_branch
          %232 = sbr.rel (%p230) target = $region32
        $region31: #{tpu_custom_call.1} parent=11 // pred_region
          _
        $region32: #{tpu_custom_call.1} parent=11 // pred_fallthru
          _
        // Predicated region
        $region33: #{tpu_custom_call.1} parent=11 // pred_check
          %p233 = pneg %p169
        $region34: #{tpu_custom_call.1} parent=11 // pred_check_branch
          %235 = sbr.rel (%p233) target = $region36
        $region35: #{tpu_custom_call.1} parent=11 // pred_region
          _
        $region36: #{tpu_custom_call.1} parent=11 // pred_fallthru
          _
      $region12: #{tpu_custom_call.1} parent=5 // pred_fallthru
        _
      %p236 = scmp.lt.s32.totalorder %s17, 2
      // Predicated region
      $region37: #{tpu_custom_call.1} parent=5 // pred_check
        %p237 = pneg %p236
      $region38: #{tpu_custom_call.1} parent=5 // pred_check_branch
        %239 = sbr.rel (%p237) target = $region40
      $region39: #{tpu_custom_call.1} parent=5 // pred_region
        // Predicated region
        $region41: #{tpu_custom_call.1} parent=39 // pred_check
          %p240 = pneg %p37
        $region42: #{tpu_custom_call.1} parent=39 // pred_check_branch
          %242 = sbr.rel (%p240) target = $region44
        $region43: #{tpu_custom_call.1} parent=39 // pred_region
          %p243 = scmp.lt.s32.totalorder %s17, 1
          %s244 = scalar_select %p243, %s17, 1
          %s245 = smul.addr %s244, 2
          %s246 = smul.addr %s245, 8
          %s247 = scalar_lea.vmem %s0, %s246
        $region44: #{tpu_custom_call.1} parent=39 // pred_fallthru
          _
      $region40: #{tpu_custom_call.1} parent=5 // pred_fallthru
        _
      %p248 = scmp.le.s32.totalorder 1, %s17
      %p249 = scmp.lt.s32.totalorder %s17, 3
      %p250 = pnand %p248, %p249
      %p251 = pneg %p250
      // Predicated region
      $region45: #{tpu_custom_call.1} parent=5 // pred_check
        _
      $region46: #{tpu_custom_call.1} parent=5 // pred_check_branch
        %253 = sbr.rel (%p250) target = $region48
      $region47: #{tpu_custom_call.1} parent=5 // pred_region
        %s254 = ssub.s32 %s17, 1
        // Predicated region
        $region49: #{tpu_custom_call.1} parent=47 // pred_check
          %p255 = pneg %p64
        $region50: #{tpu_custom_call.1} parent=47 // pred_check_branch
          %257 = sbr.rel (%p255) target = $region52
        $region51: #{tpu_custom_call.1} parent=47 // pred_region
          %258 = dma.done [#allocation9], 128
        $region52: #{tpu_custom_call.1} parent=47 // pred_fallthru
          _
        %p259 = scmp.lt.s32.totalorder %s22, 1
        %s260 = scalar_select %p259, %s22, 1
        %s261 = smul.addr %s260, 2
        %s262 = smul.addr %s261, 8
        %s263 = scalar_lea.vmem %s0, %s262
        %p264 = pneg %p43
        %p265 = pneg %p40
        %p266 = pneg %p64
        %p267 = pneg %p61
        %p268 = pneg %p85
        %p269 = pneg %p82
        %p270 = pneg %p106
        %p271 = pneg %p103
        %p272 = pneg %p127
        %p273 = pneg %p124
        %p274 = pneg %p148
        %p275 = pneg %p145
        %p276 = pneg %p169
        %p277 = pneg %p166
        %p278 = pneg %p195
        %p279 = pneg %p192
        %s280 = sand.u32 %s182, 1
        %s281 = scalar_lea.sflag [#allocation10], %s280
        %s282 = sand.u32 %s182, 1
        %s283 = smul.addr %s282, 8
        %s284 = scalar_lea.vmem [#allocation11], %s283
        %p285 = scmp.lt.s32.totalorder %s22, 1
        %s286 = scalar_select %p285, %s22, 1
        %s287 = smul.addr %s286, 2
        %s288 = smul.addr %s287, 8
        %s289 = scalar_lea.vmem %s0, %s288
        %v290 = vlaneseq
        %vm291 = vcmp.ge.s32.totalorder %v290, 0
        %vm292 = vcmp.lt.s32.totalorder %v290, 342
        %vm293 = vmand %vm291, %vm292
        %294 = vst.msk [vmem:[#allocation2] sm:$0x7] %vm293, 0.0
        %vm295 = vcmask 900096
        %296 = vst.msk [vmem:[#allocation5] sm:$0xff] %vm295, 0.0
        %v297 = vld [vmem:[%s289] sm:$0xff]
        %v298 = vld [vmem:[%s289 + $0x8] sm:$0xff]
        %v301 = vunpack.c.l.s4 1966171168
        %v302 = vunpack.c.0.s8 %v301
        %v303 = vlaneseq
        %v304 = vshrl.u32 %v303, 7
        %v305 = vsub.s32 %v302, %v304
        %v306 = vrot.slane %v297, %v305
        %v308 = vunpack.c.l.s4 1966171168
        %v309 = vunpack.c.0.s8 %v308
        %v310 = vlaneseq
        %v311 = vshrl.u32 %v310, 7
        %v312 = vsub.s32 %v309, %v311
        %v313 = vrot.slane %v306, %v312
        %314 = vrot.lane.b32.xlu0 %v313, 19
        %v315 = vpop.permute.xlu0 %314
        %vm317 = vcmp.ge.s32.totalorder %v290, 19
        %vm318 = vcmp.lt.s32.totalorder %v290, 35
        %vm319 = vmand %vm317, %vm318
        %320 = vst.msk [vmem:[#allocation2] sm:$0x1] %vm319, %v315
        %v321 = vcombine.high %v306, %v306
        %v323 = vunpack.c.l.s4 1966171168
        %v324 = vunpack.c.0.s8 %v323
        %v325 = vlaneseq
        %v326 = vshrl.u32 %v325, 7
        %v327 = vsub.s32 %v324, %v326
        %v328 = vrot.slane %v321, %v327
        %329 = vrot.lane.b32.xlu0 %v328, 37
        %v330 = vpop.permute.xlu0 %329
        %vm332 = vcmp.ge.s32.totalorder %v290, 37
        %vm333 = vcmp.lt.s32.totalorder %v290, 53
        %vm334 = vmand %vm332, %vm333
        %335 = vst.msk [vmem:[#allocation2] sm:$0x1] %vm334, %v330
        %v336 = vcombine.high %v313, %v313
        %337 = vrot.lane.b32.xlu0 %v336, 55
        %v338 = vpop.permute.xlu0 %337
        %vm340 = vcmp.ge.s32.totalorder %v290, 55
        %vm341 = vcmp.lt.s32.totalorder %v290, 71
        %vm342 = vmand %vm340, %vm341
        %343 = vst.msk [vmem:[#allocation2] sm:$0x1] %vm342, %v338
        %v344 = vcombine.high %v328, %v328
        %345 = vrot.lane.b32.xlu0 %v344, 73
        %v346 = vpop.permute.xlu0 %345
        %vm348 = vcmp.ge.s32.totalorder %v290, 73
        %vm349 = vcmp.lt.s32.totalorder %v290, 89
        %vm350 = vmand %vm348, %vm349
        %351 = vst.msk [vmem:[#allocation2] sm:$0x1] %vm350, %v346
        %v352 = vcombine.high %v297, %v297
        %v354 = vunpack.c.l.s4 1966171168
        %v355 = vunpack.c.0.s8 %v354
        %v356 = vlaneseq
        %v357 = vshrl.u32 %v356, 7
        %v358 = vsub.s32 %v355, %v357
        %v359 = vrot.slane %v352, %v358
        %v361 = vunpack.c.l.s4 1966171168
        %v362 = vunpack.c.0.s8 %v361
        %v363 = vlaneseq
        %v364 = vshrl.u32 %v363, 7
        %v365 = vsub.s32 %v362, %v364
        %v366 = vrot.slane %v359, %v365
        %367 = vrot.lane.b32.xlu0 %v366, 91
        %v368 = vpop.permute.xlu0 %367
        %vm370 = vcmp.ge.s32.totalorder %v290, 91
        %vm371 = vcmp.lt.s32.totalorder %v290, 107
        %vm372 = vmand %vm370, %vm371
        %373 = vst.msk [vmem:[#allocation2] sm:$0x1] %vm372, %v368
        %v374 = vcombine.high %v359, %v359
        %v376 = vunpack.c.l.s4 1966171168
        %v377 = vunpack.c.0.s8 %v376
        %v378 = vlaneseq
        %v379 = vshrl.u32 %v378, 7
        %v380 = vsub.s32 %v377, %v379
        %v381 = vrot.slane %v374, %v380
        %382 = vrot.lane.b32.xlu0 %v381, 109
        %v383 = vpop.permute.xlu0 %382
        %vm385 = vcmp.ge.s32.totalorder %v290, 109
        %vm386 = vcmp.lt.s32.totalorder %v290, 125
        %vm387 = vmand %vm385, %vm386
        %388 = vst.msk [vmem:[#allocation2] sm:$0x1] %vm387, %v383
        %v389 = vcombine.high %v366, %v366
        %390 = vrot.lane.b32.xlu0 %v389, 127
        %v391 = vpop.permute.xlu0 %390
        %v392 = vrot.slane %v391, 7
        %vm393 = vcmask 1039360
        %v394 = vsel %vm393, %v392, %v391
        %vm396 = vcmp.ge.s32.totalorder %v290, 127
        %vm397 = vcmp.lt.s32.totalorder %v290, 143
        %vm398 = vmand %vm396, %vm397
        %399 = vst.msk [vmem:[#allocation2] sm:$0x3] %vm398, %v394
        %v400 = vcombine.high %v381, %v381
        %401 = vrot.lane.b32.xlu0 %v400, 17
        %v402 = vpop.permute.xlu0 %401
        %vm404 = vcmp.ge.s32.totalorder %v290, 17
        %vm405 = vcmp.lt.s32.totalorder %v290, 33
        %vm406 = vmand %vm404, %vm405
        %407 = vst.msk [vmem:[#allocation2 + $0x1] sm:$0x1] %vm406, %v402
        %v410 = vunpack.c.l.s4 1966171168
        %v411 = vunpack.c.0.s8 %v410
        %v412 = vlaneseq
        %v413 = vshrl.u32 %v412, 7
        %v414 = vsub.s32 %v411, %v413
        %v415 = vrot.slane %v298, %v414
        %v417 = vunpack.c.l.s4 1966171168
        %v418 = vunpack.c.0.s8 %v417
        %v419 = vlaneseq
        %v420 = vshrl.u32 %v419, 7
        %v421 = vsub.s32 %v418, %v420
        %v422 = vrot.slane %v415, %v421
        %423 = vrot.lane.b32.xlu0 %v422, 35
        %v424 = vpop.permute.xlu0 %423
        %vm426 = vcmp.ge.s32.totalorder %v290, 35
        %vm427 = vcmp.lt.s32.totalorder %v290, 51
        %vm428 = vmand %vm426, %vm427
        %429 = vst.msk [vmem:[#allocation2 + $0x1] sm:$0x1] %vm428, %v424
        %v430 = vcombine.high %v415, %v415
        %v432 = vunpack.c.l.s4 1966171168
        %v433 = vunpack.c.0.s8 %v432
        %v434 = vlaneseq
        %v435 = vshrl.u32 %v434, 7
        %v436 = vsub.s32 %v433, %v435
        %v437 = vrot.slane %v430, %v436
        %438 = vrot.lane.b32.xlu0 %v437, 53
        %v439 = vpop.permute.xlu0 %438
        %vm441 = vcmp.ge.s32.totalorder %v290, 53
        %vm442 = vcmp.lt.s32.totalorder %v290, 69
        %vm443 = vmand %vm441, %vm442
        %444 = vst.msk [vmem:[#allocation2 + $0x1] sm:$0x1] %vm443, %v439
        %v445 = vcombine.high %v422, %v422
        %446 = vrot.lane.b32.xlu0 %v445, 71
        %v447 = vpop.permute.xlu0 %446
        %vm449 = vcmp.ge.s32.totalorder %v290, 71
        %vm450 = vcmp.lt.s32.totalorder %v290, 87
        %vm451 = vmand %vm449, %vm450
        %452 = vst.msk [vmem:[#allocation2 + $0x1] sm:$0x1] %vm451, %v447
        %v453 = vcombine.high %v437, %v437
        %454 = vrot.lane.b32.xlu0 %v453, 89
        %v455 = vpop.permute.xlu0 %454
        %vm457 = vcmp.ge.s32.totalorder %v290, 89
        %vm458 = vcmp.lt.s32.totalorder %v290, 105
        %vm459 = vmand %vm457, %vm458
        %460 = vst.msk [vmem:[#allocation2 + $0x1] sm:$0x1] %vm459, %v455
        %v461 = vcombine.high %v298, %v298
        %v463 = vunpack.c.l.s4 1966171168
        %v464 = vunpack.c.0.s8 %v463
        %v465 = vlaneseq
        %v466 = vshrl.u32 %v465, 7
        %v467 = vsub.s32 %v464, %v466
        %v468 = vrot.slane %v461, %v467
        %v470 = vunpack.c.l.s4 1966171168
        %v471 = vunpack.c.0.s8 %v470
        %v472 = vlaneseq
        %v473 = vshrl.u32 %v472, 7
        %v474 = vsub.s32 %v471, %v473
        %v475 = vrot.slane %v468, %v474
        %476 = vrot.lane.b32.xlu0 %v475, 107
        %v477 = vpop.permute.xlu0 %476
        %vm479 = vcmp.ge.s32.totalorder %v290, 107
        %vm480 = vcmp.lt.s32.totalorder %v290, 123
        %vm481 = vmand %vm479, %vm480
        %482 = vst.msk [vmem:[#allocation2 + $0x1] sm:$0x1] %vm481, %v477
        %v483 = vcombine.high %v468, %v468
        %v485 = vunpack.c.l.s4 1966171168
        %v486 = vunpack.c.0.s8 %v485
        %v487 = vlaneseq
        %v488 = vshrl.u32 %v487, 7
        %v489 = vsub.s32 %v486, %v488
        %v490 = vrot.slane %v483, %v489
        %491 = vrot.lane.b32.xlu0 %v490, 125
        %v492 = vpop.permute.xlu0 %491
        %v493 = vrot.slane %v492, 7
        %vm494 = vcmask 1022976
        %v495 = vsel %vm494, %v493, %v492
        %vm497 = vcmp.ge.s32.totalorder %v290, 125
        %vm498 = vcmp.lt.s32.totalorder %v290, 141
        %vm499 = vmand %vm497, %vm498
        %500 = vst.msk [vmem:[#allocation2 + $0x1] sm:$0x3] %vm499, %v495
        %v501 = vcombine.high %v475, %v475
        %502 = vrot.lane.b32.xlu0 %v501, 15
        %v503 = vpop.permute.xlu0 %502
        %vm505 = vcmp.ge.s32.totalorder %v290, 15
        %vm506 = vcmp.lt.s32.totalorder %v290, 31
        %vm507 = vmand %vm505, %vm506
        %508 = vst.msk [vmem:[#allocation2 + $0x2] sm:$0x1] %vm507, %v503
        %v509 = vcombine.high %v490, %v490
        %510 = vrot.lane.b32.xlu0 %v509, 33
        %v511 = vpop.permute.xlu0 %510
        %vm513 = vcmp.ge.s32.totalorder %v290, 33
        %vm514 = vcmp.lt.s32.totalorder %v290, 49
        %vm515 = vmand %vm513, %vm514
        %516 = vst.msk [vmem:[#allocation2 + $0x2] sm:$0x1] %vm515, %v511
        %v517 = vld [vmem:[#allocation2] sm:$0x7]
        %vm518 = vcmp.lt.s32.totalorder %v290, 288
        %vm519 = vmand %vm291, %vm518
        %520 = vst.msk [vmem:[#allocation3] ss:$8 sm:$0x7] %vm519, %v517
        %521 = vst.msk [vmem:[#allocation3] ss:$8 sm:$0x0] %vm519, %v517
        %v522 = vld [vmem:[#allocation2] sm:$0x7]
        %524 = vrot.lane.b32.xlu0 %v522, 127
        %v525 = vpop.permute.xlu0 %524
        %v526 = vrot.slane %v525, 1
        %v527 = vsel %vm393, %v525, %v526
        %s529 = scalar_lea.vmem [#allocation3], 1
        %530 = vst.msk [vmem:[%s529] ss:$8 sm:$0x7] %vm519, %v527
        %531 = vst.msk [vmem:[%s529] ss:$8 sm:$0x0] %vm519, %v527
        %v532 = vld [vmem:[#allocation2] sm:$0x7]
        %534 = vrot.lane.b32.xlu0 %v532, 126
        %v535 = vpop.permute.xlu0 %534
        %v536 = vrot.slane %v535, 1
        %vm537 = vcmask 1031168
        %v538 = vsel %vm537, %v535, %v536
        %s540 = scalar_lea.vmem [#allocation3], 2
        %541 = vst.msk [vmem:[%s540] ss:$8 sm:$0x7] %vm519, %v538
        %542 = vst.msk [vmem:[%s540] ss:$8 sm:$0x0] %vm519, %v538
        %v543 = vld [vmem:[#allocation2] sm:$0x7]
        %545 = vrot.lane.b32.xlu0 %v543, 110
        %v546 = vpop.permute.xlu0 %545
        %v547 = vrot.slane %v546, 1
        %v548 = vsel %vm295, %v546, %v547
        %s550 = scalar_lea.vmem [#allocation3], 3
        %551 = vst.msk [vmem:[%s550] ss:$8 sm:$0x7] %vm519, %v548
        %552 = vst.msk [vmem:[%s550] ss:$8 sm:$0x0] %vm519, %v548
        %v553 = vld [vmem:[#allocation2] sm:$0x7]
        %555 = vrot.lane.b32.xlu0 %v553, 109
        %v556 = vpop.permute.xlu0 %555
        %v557 = vrot.slane %v556, 1
        %vm558 = vcmask 891904
        %v559 = vsel %vm558, %v556, %v557
        %s561 = scalar_lea.vmem [#allocation3], 4
        %562 = vst.msk [vmem:[%s561] ss:$8 sm:$0x7] %vm519, %v559
        %563 = vst.msk [vmem:[%s561] ss:$8 sm:$0x0] %vm519, %v559
        %v564 = vld [vmem:[#allocation2] sm:$0x7]
        %566 = vrot.lane.b32.xlu0 %v564, 108
        %v567 = vpop.permute.xlu0 %566
        %v568 = vrot.slane %v567, 1
        %vm569 = vcmask 883712
        %v570 = vsel %vm569, %v567, %v568
        %s572 = scalar_lea.vmem [#allocation3], 5
        %573 = vst.msk [vmem:[%s572] ss:$8 sm:$0x7] %vm519, %v570
        %574 = vst.msk [vmem:[%s572] ss:$8 sm:$0x0] %vm519, %v570
        %v575 = vld [vmem:[#allocation2] sm:$0x7]
        %577 = vrot.lane.b32.xlu0 %v575, 92
        %v578 = vpop.permute.xlu0 %577
        %v579 = vrot.slane %v578, 1
        %vm580 = vcmask 752640
        %v581 = vsel %vm580, %v578, %v579
        %s583 = scalar_lea.vmem [#allocation3], 6
        %584 = vst.msk [vmem:[%s583] ss:$8 sm:$0x7] %vm519, %v581
        %585 = vst.msk [vmem:[%s583] ss:$8 sm:$0x0] %vm519, %v581
        %v586 = vld [vmem:[#allocation2] sm:$0x7]
        %588 = vrot.lane.b32.xlu0 %v586, 91
        %v589 = vpop.permute.xlu0 %588
        %v590 = vrot.slane %v589, 1
        %vm591 = vcmask 744448
        %v592 = vsel %vm591, %v589, %v590
        %s594 = scalar_lea.vmem [#allocation3], 7
        %595 = vst.msk [vmem:[%s594] ss:$8 sm:$0x7] %vm519, %v592
        %596 = vst.msk [vmem:[%s594] ss:$8 sm:$0x0] %vm519, %v592
        %v597 = vld [vmem:[#allocation2] sm:$0x7]
        %599 = vrot.lane.b32.xlu0 %v597, 90
        %v600 = vpop.permute.xlu0 %599
        %v601 = vrot.slane %v600, 1
        %vm602 = vcmask 736256
        %v603 = vsel %vm602, %v600, %v601
        %s605 = scalar_lea.vmem [#allocation3], 24
        %606 = vst.msk [vmem:[%s605] ss:$8 sm:$0x7] %vm519, %v603
        %607 = vst.msk [vmem:[%s605] ss:$8 sm:$0x0] %vm519, %v603
        %v608 = vld [vmem:[#allocation8] sm:$0xff]
        %v609 = vld [vmem:[#allocation3] sm:$0xff]
        %v610 = vld [vmem:[#allocation3 + $0x8] sm:$0xff]
        %v611 = vld [vmem:[#allocation3 + $0x10] sm:$0xff]
        %v612 = vld [vmem:[#allocation3 + $0x18] sm:$0x1]
        %v613 = vld [vmem:[#allocation3 + $0x20] sm:$0x1]
        %v614 = vld [vmem:[#allocation3 + $0x28] sm:$0x1]
        %vm615 = vcmask 72704
        %v617 = vsel %vm615, %v608, 0
        %vm619 = vcmask 1040384
        %v621 = vsel %vm619, %v612, 0
        %v624 = vsel %vm619, %v613, 0
        %v627 = vsel %vm619, %v614, 0
        %629 = vmatprep.subr.mxu0 0.0
        %630 = vmatpush1.msra.mxu0 0.0
        %631 = vmatprep.subr.mxu0 0.0
        %632 = vmatpush1.msra.mxu0 0.0
        %633 = vmatprep.subr.mxu0 0.0
        %634 = vmatpush1.msra.mxu0 0.0
        %635 = vmatprep.subr.mxu0 0.0
        %636 = vmatpush1.msra.mxu0 0.0
        %637 = vmatprep.subr.mxu0 0.0
        %638 = vmatpush1.msra.mxu0 0.0
        %639 = vmatprep.subr.mxu0 0.0
        %640 = vmatpush1.msra.mxu0 0.0
        %641 = vmatprep.subr.mxu0 0.0
        %642 = vmatpush1.msra.mxu0 0.0
        %643 = vmatprep.subr.mxu0 0.0
        %644 = vmatpush1.msra.mxu0 0.0
        %645 = vmatprep.subr.mxu0 0.0
        %646 = vmatpush1.msra.mxu0 0.0
        %647 = vmatprep.subr.mxu0 0.0
        %648 = vmatpush1.msra.mxu0 0.0
        %649 = vmatprep.subr.mxu0 0.0
        %650 = vmatpush1.msra.mxu0 0.0
        %651 = vmatprep.subr.mxu0 0.0
        %652 = vmatpush1.msra.mxu0 0.0
        %653 = vmatprep.subr.mxu0 0.0
        %654 = vmatpush1.msra.mxu0 0.0
        %655 = vmatprep.subr.mxu0 0.0
        %656 = vmatpush1.msra.mxu0 0.0
        %657 = vmatprep.subr.mxu0 %v624
        %658 = vmatpush1.msra.mxu0 %v621
        %659 = vmatprep.subr.mxu0 %v610
        %660 = vmatpush1.msra.mxu0 %v609
        %661 = vmatprep.subr.mxu0 0.0
        %662 = vmatpush2.msra.mxu0 0.0
        %663 = vmatprep.subr.mxu0 0.0
        %664 = vmatpush2.msra.mxu0 0.0
        %665 = vmatprep.subr.mxu0 0.0
        %666 = vmatpush2.msra.mxu0 0.0
        %667 = vmatprep.subr.mxu0 0.0
        %668 = vmatpush2.msra.mxu0 0.0
        %669 = vmatprep.subr.mxu0 0.0
        %670 = vmatpush2.msra.mxu0 0.0
        %671 = vmatprep.subr.mxu0 0.0
        %672 = vmatpush2.msra.mxu0 0.0
        %673 = vmatprep.subr.mxu0 0.0
        %674 = vmatpush2.msra.mxu0 0.0
        %675 = vmatprep.subr.mxu0 0.0
        %676 = vmatpush2.msra.mxu0 0.0
        %677 = vmatprep.subr.mxu0 0.0
        %678 = vmatpush2.msra.mxu0 0.0
        %679 = vmatprep.subr.mxu0 0.0
        %680 = vmatpush2.msra.mxu0 0.0
        %681 = vmatprep.subr.mxu0 0.0
        %682 = vmatpush2.msra.mxu0 0.0
        %683 = vmatprep.subr.mxu0 0.0
        %684 = vmatpush2.msra.mxu0 0.0
        %685 = vmatprep.subr.mxu0 0.0
        %686 = vmatpush2.msra.mxu0 0.0
        %687 = vmatprep.subr.mxu0 0.0
        %688 = vmatpush2.msra.mxu0 0.0
        %689 = vmatprep.subr.mxu0 0.0
        %690 = vmatpush2.msra.mxu0 0.0
        %691 = vmatprep.subr.mxu0 0.0
        %692 = vmatpush2.msra.mxu0 0.0
        %693 = vmatprep.mubr.f32.mxu0 0.0
        %694 = vmatmul.mubr.f32.gmra.mxu0 %v617
        %v695 = vpop.f32.mrf.mxu0
        %v696 = vadd.f32 0.0, %v695
        %v697 = vpop.f32.mrf.mxu0
        %v698 = vadd.f32 0.0, %v697
        %699 = vdwg.mxu0
        %700 = vmatprep.subr.mxu0 0.0
        %701 = vmatpush1.msra.mxu0 0.0
        %702 = vmatprep.subr.mxu0 0.0
        %703 = vmatpush1.msra.mxu0 0.0
        %704 = vmatprep.subr.mxu0 0.0
        %705 = vmatpush1.msra.mxu0 0.0
        %706 = vmatprep.subr.mxu0 0.0
        %707 = vmatpush1.msra.mxu0 0.0
        %708 = vmatprep.subr.mxu0 0.0
        %709 = vmatpush1.msra.mxu0 0.0
        %710 = vmatprep.subr.mxu0 0.0
        %711 = vmatpush1.msra.mxu0 0.0
        %712 = vmatprep.subr.mxu0 0.0
        %713 = vmatpush1.msra.mxu0 0.0
        %714 = vmatprep.subr.mxu0 0.0
        %715 = vmatpush1.msra.mxu0 0.0
        %716 = vmatprep.subr.mxu0 0.0
        %717 = vmatpush1.msra.mxu0 0.0
        %718 = vmatprep.subr.mxu0 0.0
        %719 = vmatpush1.msra.mxu0 0.0
        %720 = vmatprep.subr.mxu0 0.0
        %721 = vmatpush1.msra.mxu0 0.0
        %722 = vmatprep.subr.mxu0 0.0
        %723 = vmatpush1.msra.mxu0 0.0
        %724 = vmatprep.subr.mxu0 0.0
        %725 = vmatpush1.msra.mxu0 0.0
        %726 = vmatprep.subr.mxu0 0.0
        %727 = vmatpush1.msra.mxu0 0.0
        %728 = vmatprep.subr.mxu0 0.0
        %729 = vmatpush1.msra.mxu0 %v627
        %730 = vmatprep.subr.mxu0 0.0
        %731 = vmatpush1.msra.mxu0 %v611
        %732 = vmatprep.subr.mxu0 0.0
        %733 = vmatpush2.msra.mxu0 0.0
        %734 = vmatprep.subr.mxu0 0.0
        %735 = vmatpush2.msra.mxu0 0.0
        %736 = vmatprep.subr.mxu0 0.0
        %737 = vmatpush2.msra.mxu0 0.0
        %738 = vmatprep.subr.mxu0 0.0
        %739 = vmatpush2.msra.mxu0 0.0
        %740 = vmatprep.subr.mxu0 0.0
        %741 = vmatpush2.msra.mxu0 0.0
        %742 = vmatprep.subr.mxu0 0.0
        %743 = vmatpush2.msra.mxu0 0.0
        %744 = vmatprep.subr.mxu0 0.0
        %745 = vmatpush2.msra.mxu0 0.0
        %746 = vmatprep.subr.mxu0 0.0
        %747 = vmatpush2.msra.mxu0 0.0
        %748 = vmatprep.subr.mxu0 0.0
        %749 = vmatpush2.msra.mxu0 0.0
        %750 = vmatprep.subr.mxu0 0.0
        %751 = vmatpush2.msra.mxu0 0.0
        %752 = vmatprep.subr.mxu0 0.0
        %753 = vmatpush2.msra.mxu0 0.0
        %754 = vmatprep.subr.mxu0 0.0
        %755 = vmatpush2.msra.mxu0 0.0
        %756 = vmatprep.subr.mxu0 0.0
        %757 = vmatpush2.msra.mxu0 0.0
        %758 = vmatprep.subr.mxu0 0.0
        %759 = vmatpush2.msra.mxu0 0.0
        %760 = vmatprep.subr.mxu0 0.0
        %761 = vmatpush2.msra.mxu0 0.0
        %762 = vmatprep.subr.mxu0 0.0
        %763 = vmatpush2.msra.mxu0 0.0
        %764 = vmatprep.mubr.f32.mxu0 0.0
        %765 = vmatmul.mubr.f32.gmra.mxu0 %v617
        %v766 = vpop.f32.mrf.mxu0
        %v767 = vadd.f32 0.0, %v766
        %v768 = vpop.f32.mrf.mxu0
        %769 = vdwg.mxu0
        %v770 = vld [vmem:[%s2] sm:$0xff]
        %772 = vset.pattern.permute.xlu0 0
        %773 = vperm.xlu0 %772, %v770
        %v774 = vpop.permute.xlu0 %773
        %v776 = vmul.f32 %v696, %v774
        %v777 = vmul.f32 %v698, %v774
        %v778 = vmul.f32 %v767, %v774
        %v779 = vld [vmem:[%s3] sm:$0xff]
        %781 = vset.pattern.permute.xlu0 0
        %782 = vperm.xlu0 %781, %v779
        %v783 = vpop.permute.xlu0 %782
        %v785 = vadd.f32 %v776, %v783
        %v786 = vadd.f32 %v777, %v783
        %v787 = vadd.f32 %v778, %v783
        %v788 = vmax.f32 %v785, 0.0
        %v789 = vmax.f32 %v786, 0.0
        %v790 = vmax.f32 %v787, 0.0
        %791 = vst [vmem:[#allocation4] sm:$0xff] %v788
        %792 = vst [vmem:[#allocation4 + $0x8] sm:$0xff] %v789
        %vm793 = vcmask 261120
        %794 = vst.msk [vmem:[#allocation4 + $0x10] sm:$0xff] %vm793, %v790
        %v795 = vlaneseq
        %v796 = vshrl.u32 %v795, 7
        %v797 = vadd.s32 %v796, 8
        %v798 = vlaneseq
        %v799 = vand.u32 %v798, 127
        %v800 = vmul.u32 %v799, 2
        %vm801 = vcmp.eq.s32.totalorder %v796, %v800
        %vm802 = vcmp.eq.s32.totalorder %v797, %v800
        %v803 = vsel %vm801, 1.0, 0.0
        %v804 = vsel %vm802, 1.0, 0.0
        %v805 = vadd.s32 %v800, 1
        %vm806 = vcmp.eq.s32.totalorder %v796, %v805
        %vm807 = vcmp.eq.s32.totalorder %v797, %v805
        %v808 = vsel %vm806, 1.0, 0.0
        %v809 = vsel %vm807, 1.0, 0.0
        %v810 = vld [vmem:[#allocation4] sm:$0xff]
        %812 = vrot.lane.b32.xlu0 %v810, 110
        %v813 = vpop.permute.xlu0 %812
        %v815 = vmax.f32 %v810, %v813
        %vm816 = vcmask 130048
        %v818 = vsel %vm816, %v815, 0
        %820 = vmatprep.subr.mxu0 0.0
        %821 = vmatpush1.msra.mxu0 0.0
        %822 = vmatprep.subr.mxu0 0.0
        %823 = vmatpush1.msra.mxu0 0.0
        %824 = vmatprep.subr.mxu0 0.0
        %825 = vmatpush1.msra.mxu0 0.0
        %826 = vmatprep.subr.mxu0 0.0
        %827 = vmatpush1.msra.mxu0 0.0
        %828 = vmatprep.subr.mxu0 0.0
        %829 = vmatpush1.msra.mxu0 0.0
        %830 = vmatprep.subr.mxu0 0.0
        %831 = vmatpush1.msra.mxu0 0.0
        %832 = vmatprep.subr.mxu0 0.0
        %833 = vmatpush1.msra.mxu0 0.0
        %834 = vmatprep.subr.mxu0 0.0
        %835 = vmatpush1.msra.mxu0 0.0
        %836 = vmatprep.subr.mxu0 0.0
        %837 = vmatpush1.msra.mxu0 0.0
        %838 = vmatprep.subr.mxu0 0.0
        %839 = vmatpush1.msra.mxu0 0.0
        %840 = vmatprep.subr.mxu0 0.0
        %841 = vmatpush1.msra.mxu0 0.0
        %842 = vmatprep.subr.mxu0 0.0
        %843 = vmatpush1.msra.mxu0 0.0
        %844 = vmatprep.subr.mxu0 0.0
        %845 = vmatpush1.msra.mxu0 0.0
        %846 = vmatprep.subr.mxu0 0.0
        %847 = vmatpush1.msra.mxu0 0.0
        %848 = vmatprep.subr.mxu0 0.0
        %849 = vmatpush1.msra.mxu0 %v804
        %850 = vmatprep.subr.mxu0 0.0
        %851 = vmatpush1.msra.mxu0 %v803
        %852 = vmatprep.subr.mxu0 0.0
        %853 = vmatpush2.msra.mxu0 0.0
        %854 = vmatprep.subr.mxu0 0.0
        %855 = vmatpush2.msra.mxu0 0.0
        %856 = vmatprep.subr.mxu0 0.0
        %857 = vmatpush2.msra.mxu0 0.0
        %858 = vmatprep.subr.mxu0 0.0
        %859 = vmatpush2.msra.mxu0 0.0
        %860 = vmatprep.subr.mxu0 0.0
        %861 = vmatpush2.msra.mxu0 0.0
        %862 = vmatprep.subr.mxu0 0.0
        %863 = vmatpush2.msra.mxu0 0.0
        %864 = vmatprep.subr.mxu0 0.0
        %865 = vmatpush2.msra.mxu0 0.0
        %866 = vmatprep.subr.mxu0 0.0
        %867 = vmatpush2.msra.mxu0 0.0
        %868 = vmatprep.subr.mxu0 0.0
        %869 = vmatpush2.msra.mxu0 0.0
        %870 = vmatprep.subr.mxu0 0.0
        %871 = vmatpush2.msra.mxu0 0.0
        %872 = vmatprep.subr.mxu0 0.0
        %873 = vmatpush2.msra.mxu0 0.0
        %874 = vmatprep.subr.mxu0 0.0
        %875 = vmatpush2.msra.mxu0 0.0
        %876 = vmatprep.subr.mxu0 0.0
        %877 = vmatpush2.msra.mxu0 0.0
        %878 = vmatprep.subr.mxu0 0.0
        %879 = vmatpush2.msra.mxu0 0.0
        %880 = vmatprep.subr.mxu0 0.0
        %881 = vmatpush2.msra.mxu0 0.0
        %882 = vmatprep.subr.mxu0 0.0
        %883 = vmatpush2.msra.mxu0 0.0
        %884 = vmatprep.mubr.f32.mxu0 0.0
        %885 = vmatmul.mubr.f32.gmra.mxu0 %v818
        %v886 = vpop.f32.mrf.mxu0
        %v887 = vadd.f32 0.0, %v886
        %v888 = vpop.f32.mrf.mxu0
        %889 = vdwg.mxu0
        %890 = vmatprep.subr.mxu0 0.0
        %891 = vmatpush1.msra.mxu0 0.0
        %892 = vmatprep.subr.mxu0 0.0
        %893 = vmatpush1.msra.mxu0 0.0
        %894 = vmatprep.subr.mxu0 0.0
        %895 = vmatpush1.msra.mxu0 0.0
        %896 = vmatprep.subr.mxu0 0.0
        %897 = vmatpush1.msra.mxu0 0.0
        %898 = vmatprep.subr.mxu0 0.0
        %899 = vmatpush1.msra.mxu0 0.0
        %900 = vmatprep.subr.mxu0 0.0
        %901 = vmatpush1.msra.mxu0 0.0
        %902 = vmatprep.subr.mxu0 0.0
        %903 = vmatpush1.msra.mxu0 0.0
        %904 = vmatprep.subr.mxu0 0.0
        %905 = vmatpush1.msra.mxu0 0.0
        %906 = vmatprep.subr.mxu0 0.0
        %907 = vmatpush1.msra.mxu0 0.0
        %908 = vmatprep.subr.mxu0 0.0
        %909 = vmatpush1.msra.mxu0 0.0
        %910 = vmatprep.subr.mxu0 0.0
        %911 = vmatpush1.msra.mxu0 0.0
        %912 = vmatprep.subr.mxu0 0.0
        %913 = vmatpush1.msra.mxu0 0.0
        %914 = vmatprep.subr.mxu0 0.0
        %915 = vmatpush1.msra.mxu0 0.0
        %916 = vmatprep.subr.mxu0 0.0
        %917 = vmatpush1.msra.mxu0 0.0
        %918 = vmatprep.subr.mxu0 0.0
        %919 = vmatpush1.msra.mxu0 %v809
        %920 = vmatprep.subr.mxu0 0.0
        %921 = vmatpush1.msra.mxu0 %v808
        %922 = vmatprep.subr.mxu0 0.0
        %923 = vmatpush2.msra.mxu0 0.0
        %924 = vmatprep.subr.mxu0 0.0
        %925 = vmatpush2.msra.mxu0 0.0
        %926 = vmatprep.subr.mxu0 0.0
        %927 = vmatpush2.msra.mxu0 0.0
        %928 = vmatprep.subr.mxu0 0.0
        %929 = vmatpush2.msra.mxu0 0.0
        %930 = vmatprep.subr.mxu0 0.0
        %931 = vmatpush2.msra.mxu0 0.0
        %932 = vmatprep.subr.mxu0 0.0
        %933 = vmatpush2.msra.mxu0 0.0
        %934 = vmatprep.subr.mxu0 0.0
        %935 = vmatpush2.msra.mxu0 0.0
        %936 = vmatprep.subr.mxu0 0.0
        %937 = vmatpush2.msra.mxu0 0.0
        %938 = vmatprep.subr.mxu0 0.0
        %939 = vmatpush2.msra.mxu0 0.0
        %940 = vmatprep.subr.mxu0 0.0
        %941 = vmatpush2.msra.mxu0 0.0
        %942 = vmatprep.subr.mxu0 0.0
        %943 = vmatpush2.msra.mxu0 0.0
        %944 = vmatprep.subr.mxu0 0.0
        %945 = vmatpush2.msra.mxu0 0.0
        %946 = vmatprep.subr.mxu0 0.0
        %947 = vmatpush2.msra.mxu0 0.0
        %948 = vmatprep.subr.mxu0 0.0
        %949 = vmatpush2.msra.mxu0 0.0
        %950 = vmatprep.subr.mxu0 0.0
        %951 = vmatpush2.msra.mxu0 0.0
        %952 = vmatprep.subr.mxu0 0.0
        %953 = vmatpush2.msra.mxu0 0.0
        %954 = vmatprep.mubr.f32.mxu0 0.0
        %955 = vmatmul.mubr.f32.gmra.mxu0 %v818
        %v956 = vpop.f32.mrf.mxu0
        %v957 = vadd.f32 0.0, %v956
        %v958 = vpop.f32.mrf.mxu0
        %959 = vdwg.mxu0
        %v960 = vmax.f32 %v887, %v957
        %962 = vrot.lane.b32.xlu0 %v960, 11
        %v963 = vpop.permute.xlu0 %962
        %vm965 = vcmask 154712
        %966 = vst.msk [vmem:[#allocation5] sm:$0xff] %vm965, %v963
        %v967 = vld [vmem:[#allocation4] sm:$0xff]
        %969 = vrot.lane.b32.xlu0 %v967, 110
        %v970 = vpop.permute.xlu0 %969
        %v972 = vmax.f32 %v967, %v970
        %974 = vrot.lane.b32.xlu0 %v972, 92
        %v975 = vpop.permute.xlu0 %974
        %v976 = vsel %vm816, %v975, 0
        %978 = vmatprep.subr.mxu0 0.0
        %979 = vmatpush1.msra.mxu0 0.0
        %980 = vmatprep.subr.mxu0 0.0
        %981 = vmatpush1.msra.mxu0 0.0
        %982 = vmatprep.subr.mxu0 0.0
        %983 = vmatpush1.msra.mxu0 0.0
        %984 = vmatprep.subr.mxu0 0.0
        %985 = vmatpush1.msra.mxu0 0.0
        %986 = vmatprep.subr.mxu0 0.0
        %987 = vmatpush1.msra.mxu0 0.0
        %988 = vmatprep.subr.mxu0 0.0
        %989 = vmatpush1.msra.mxu0 0.0
        %990 = vmatprep.subr.mxu0 0.0
        %991 = vmatpush1.msra.mxu0 0.0
        %992 = vmatprep.subr.mxu0 0.0
        %993 = vmatpush1.msra.mxu0 0.0
        %994 = vmatprep.subr.mxu0 0.0
        %995 = vmatpush1.msra.mxu0 0.0
        %996 = vmatprep.subr.mxu0 0.0
        %997 = vmatpush1.msra.mxu0 0.0
        %998 = vmatprep.subr.mxu0 0.0
        %999 = vmatpush1.msra.mxu0 0.0
        %1000 = vmatprep.subr.mxu0 0.0
        %1001 = vmatpush1.msra.mxu0 0.0
        %1002 = vmatprep.subr.mxu0 0.0
        %1003 = vmatpush1.msra.mxu0 0.0
        %1004 = vmatprep.subr.mxu0 0.0
        %1005 = vmatpush1.msra.mxu0 0.0
        %1006 = vmatprep.subr.mxu0 0.0
        %1007 = vmatpush1.msra.mxu0 %v804
        %1008 = vmatprep.subr.mxu0 0.0
        %1009 = vmatpush1.msra.mxu0 %v803
        %1010 = vmatprep.subr.mxu0 0.0
        %1011 = vmatpush2.msra.mxu0 0.0
        %1012 = vmatprep.subr.mxu0 0.0
        %1013 = vmatpush2.msra.mxu0 0.0
        %1014 = vmatprep.subr.mxu0 0.0
        %1015 = vmatpush2.msra.mxu0 0.0
        %1016 = vmatprep.subr.mxu0 0.0
        %1017 = vmatpush2.msra.mxu0 0.0
        %1018 = vmatprep.subr.mxu0 0.0
        %1019 = vmatpush2.msra.mxu0 0.0
        %1020 = vmatprep.subr.mxu0 0.0
        %1021 = vmatpush2.msra.mxu0 0.0
        %1022 = vmatprep.subr.mxu0 0.0
        %1023 = vmatpush2.msra.mxu0 0.0
        %1024 = vmatprep.subr.mxu0 0.0
        %1025 = vmatpush2.msra.mxu0 0.0
        %1026 = vmatprep.subr.mxu0 0.0
        %1027 = vmatpush2.msra.mxu0 0.0
        %1028 = vmatprep.subr.mxu0 0.0
        %1029 = vmatpush2.msra.mxu0 0.0
        %1030 = vmatprep.subr.mxu0 0.0
        %1031 = vmatpush2.msra.mxu0 0.0
        %1032 = vmatprep.subr.mxu0 0.0
        %1033 = vmatpush2.msra.mxu0 0.0
        %1034 = vmatprep.subr.mxu0 0.0
        %1035 = vmatpush2.msra.mxu0 0.0
        %1036 = vmatprep.subr.mxu0 0.0
        %1037 = vmatpush2.msra.mxu0 0.0
        %1038 = vmatprep.subr.mxu0 0.0
        %1039 = vmatpush2.msra.mxu0 0.0
        %1040 = vmatprep.subr.mxu0 0.0
        %1041 = vmatpush2.msra.mxu0 0.0
        %1042 = vmatprep.mubr.f32.mxu0 0.0
        %1043 = vmatmul.mubr.f32.gmra.mxu0 %v976
        %v1044 = vpop.f32.mrf.mxu0
        %v1045 = vadd.f32 0.0, %v1044
        %v1046 = vpop.f32.mrf.mxu0
        %1047 = vdwg.mxu0
        %1048 = vmatprep.subr.mxu0 0.0
        %1049 = vmatpush1.msra.mxu0 0.0
        %1050 = vmatprep.subr.mxu0 0.0
        %1051 = vmatpush1.msra.mxu0 0.0
        %1052 = vmatprep.subr.mxu0 0.0
        %1053 = vmatpush1.msra.mxu0 0.0
        %1054 = vmatprep.subr.mxu0 0.0
        %1055 = vmatpush1.msra.mxu0 0.0
        %1056 = vmatprep.subr.mxu0 0.0
        %1057 = vmatpush1.msra.mxu0 0.0
        %1058 = vmatprep.subr.mxu0 0.0
        %1059 = vmatpush1.msra.mxu0 0.0
        %1060 = vmatprep.subr.mxu0 0.0
        %1061 = vmatpush1.msra.mxu0 0.0
        %1062 = vmatprep.subr.mxu0 0.0
        %1063 = vmatpush1.msra.mxu0 0.0
        %1064 = vmatprep.subr.mxu0 0.0
        %1065 = vmatpush1.msra.mxu0 0.0
        %1066 = vmatprep.subr.mxu0 0.0
        %1067 = vmatpush1.msra.mxu0 0.0
        %1068 = vmatprep.subr.mxu0 0.0
        %1069 = vmatpush1.msra.mxu0 0.0
        %1070 = vmatprep.subr.mxu0 0.0
        %1071 = vmatpush1.msra.mxu0 0.0
        %1072 = vmatprep.subr.mxu0 0.0
        %1073 = vmatpush1.msra.mxu0 0.0
        %1074 = vmatprep.subr.mxu0 0.0
        %1075 = vmatpush1.msra.mxu0 0.0
        %1076 = vmatprep.subr.mxu0 0.0
        %1077 = vmatpush1.msra.mxu0 %v809
        %1078 = vmatprep.subr.mxu0 0.0
        %1079 = vmatpush1.msra.mxu0 %v808
        %1080 = vmatprep.subr.mxu0 0.0
        %1081 = vmatpush2.msra.mxu0 0.0
        %1082 = vmatprep.subr.mxu0 0.0
        %1083 = vmatpush2.msra.mxu0 0.0
        %1084 = vmatprep.subr.mxu0 0.0
        %1085 = vmatpush2.msra.mxu0 0.0
        %1086 = vmatprep.subr.mxu0 0.0
        %1087 = vmatpush2.msra.mxu0 0.0
        %1088 = vmatprep.subr.mxu0 0.0
        %1089 = vmatpush2.msra.mxu0 0.0
        %1090 = vmatprep.subr.mxu0 0.0
        %1091 = vmatpush2.msra.mxu0 0.0
        %1092 = vmatprep.subr.mxu0 0.0
        %1093 = vmatpush2.msra.mxu0 0.0
        %1094 = vmatprep.subr.mxu0 0.0
        %1095 = vmatpush2.msra.mxu0 0.0
        %1096 = vmatprep.subr.mxu0 0.0
        %1097 = vmatpush2.msra.mxu0 0.0
        %1098 = vmatprep.subr.mxu0 0.0
        %1099 = vmatpush2.msra.mxu0 0.0
        %1100 = vmatprep.subr.mxu0 0.0
        %1101 = vmatpush2.msra.mxu0 0.0
        %1102 = vmatprep.subr.mxu0 0.0
        %1103 = vmatpush2.msra.mxu0 0.0
        %1104 = vmatprep.subr.mxu0 0.0
        %1105 = vmatpush2.msra.mxu0 0.0
        %1106 = vmatprep.subr.mxu0 0.0
        %1107 = vmatpush2.msra.mxu0 0.0
        %1108 = vmatprep.subr.mxu0 0.0
        %1109 = vmatpush2.msra.mxu0 0.0
        %1110 = vmatprep.subr.mxu0 0.0
        %1111 = vmatpush2.msra.mxu0 0.0
        %1112 = vmatprep.mubr.f32.mxu0 0.0
        %1113 = vmatmul.mubr.f32.gmra.mxu0 %v976
        %v1114 = vpop.f32.mrf.mxu0
        %v1115 = vadd.f32 0.0, %v1114
        %v1116 = vpop.f32.mrf.mxu0
        %1117 = vdwg.mxu0
        %v1118 = vmax.f32 %v1045, %v1115
        %1120 = vrot.lane.b32.xlu0 %v1118, 21
        %v1121 = vpop.permute.xlu0 %1120
        %vm1123 = vcmask 236712
        %1124 = vst.msk [vmem:[#allocation5] sm:$0xff] %vm1123, %v1121
        %v1125 = vld [vmem:[#allocation4] sm:$0xff]
        %1127 = vrot.lane.b32.xlu0 %v1125, 110
        %v1128 = vpop.permute.xlu0 %1127
        %v1130 = vmax.f32 %v1125, %v1128
        %1132 = vrot.lane.b32.xlu0 %v1130, 56
        %v1133 = vpop.permute.xlu0 %1132
        %v1134 = vsel %vm816, %v1133, 0
        %1136 = vmatprep.subr.mxu0 0.0
        %1137 = vmatpush1.msra.mxu0 0.0
        %1138 = vmatprep.subr.mxu0 0.0
        %1139 = vmatpush1.msra.mxu0 0.0
        %1140 = vmatprep.subr.mxu0 0.0
        %1141 = vmatpush1.msra.mxu0 0.0
        %1142 = vmatprep.subr.mxu0 0.0
        %1143 = vmatpush1.msra.mxu0 0.0
        %1144 = vmatprep.subr.mxu0 0.0
        %1145 = vmatpush1.msra.mxu0 0.0
        %1146 = vmatprep.subr.mxu0 0.0
        %1147 = vmatpush1.msra.mxu0 0.0
        %1148 = vmatprep.subr.mxu0 0.0
        %1149 = vmatpush1.msra.mxu0 0.0
        %1150 = vmatprep.subr.mxu0 0.0
        %1151 = vmatpush1.msra.mxu0 0.0
        %1152 = vmatprep.subr.mxu0 0.0
        %1153 = vmatpush1.msra.mxu0 0.0
        %1154 = vmatprep.subr.mxu0 0.0
        %1155 = vmatpush1.msra.mxu0 0.0
        %1156 = vmatprep.subr.mxu0 0.0
        %1157 = vmatpush1.msra.mxu0 0.0
        %1158 = vmatprep.subr.mxu0 0.0
        %1159 = vmatpush1.msra.mxu0 0.0
        %1160 = vmatprep.subr.mxu0 0.0
        %1161 = vmatpush1.msra.mxu0 0.0
        %1162 = vmatprep.subr.mxu0 0.0
        %1163 = vmatpush1.msra.mxu0 0.0
        %1164 = vmatprep.subr.mxu0 0.0
        %1165 = vmatpush1.msra.mxu0 %v804
        %1166 = vmatprep.subr.mxu0 0.0
        %1167 = vmatpush1.msra.mxu0 %v803
        %1168 = vmatprep.subr.mxu0 0.0
        %1169 = vmatpush2.msra.mxu0 0.0
        %1170 = vmatprep.subr.mxu0 0.0
        %1171 = vmatpush2.msra.mxu0 0.0
        %1172 = vmatprep.subr.mxu0 0.0
        %1173 = vmatpush2.msra.mxu0 0.0
        %1174 = vmatprep.subr.mxu0 0.0
        %1175 = vmatpush2.msra.mxu0 0.0
        %1176 = vmatprep.subr.mxu0 0.0
        %1177 = vmatpush2.msra.mxu0 0.0
        %1178 = vmatprep.subr.mxu0 0.0
        %1179 = vmatpush2.msra.mxu0 0.0
        %1180 = vmatprep.subr.mxu0 0.0
        %1181 = vmatpush2.msra.mxu0 0.0
        %1182 = vmatprep.subr.mxu0 0.0
        %1183 = vmatpush2.msra.mxu0 0.0
        %1184 = vmatprep.subr.mxu0 0.0
        %1185 = vmatpush2.msra.mxu0 0.0
        %1186 = vmatprep.subr.mxu0 0.0
        %1187 = vmatpush2.msra.mxu0 0.0
        %1188 = vmatprep.subr.mxu0 0.0
        %1189 = vmatpush2.msra.mxu0 0.0
        %1190 = vmatprep.subr.mxu0 0.0
        %1191 = vmatpush2.msra.mxu0 0.0
        %1192 = vmatprep.subr.mxu0 0.0
        %1193 = vmatpush2.msra.mxu0 0.0
        %1194 = vmatprep.subr.mxu0 0.0
        %1195 = vmatpush2.msra.mxu0 0.0
        %1196 = vmatprep.subr.mxu0 0.0
        %1197 = vmatpush2.msra.mxu0 0.0
        %1198 = vmatprep.subr.mxu0 0.0
        %1199 = vmatpush2.msra.mxu0 0.0
        %1200 = vmatprep.mubr.f32.mxu0 0.0
        %1201 = vmatmul.mubr.f32.gmra.mxu0 %v1134
        %v1202 = vpop.f32.mrf.mxu0
        %v1203 = vadd.f32 0.0, %v1202
        %v1204 = vpop.f32.mrf.mxu0
        %1205 = vdwg.mxu0
        %1206 = vmatprep.subr.mxu0 0.0
        %1207 = vmatpush1.msra.mxu0 0.0
        %1208 = vmatprep.subr.mxu0 0.0
        %1209 = vmatpush1.msra.mxu0 0.0
        %1210 = vmatprep.subr.mxu0 0.0
        %1211 = vmatpush1.msra.mxu0 0.0
        %1212 = vmatprep.subr.mxu0 0.0
        %1213 = vmatpush1.msra.mxu0 0.0
        %1214 = vmatprep.subr.mxu0 0.0
        %1215 = vmatpush1.msra.mxu0 0.0
        %1216 = vmatprep.subr.mxu0 0.0
        %1217 = vmatpush1.msra.mxu0 0.0
        %1218 = vmatprep.subr.mxu0 0.0
        %1219 = vmatpush1.msra.mxu0 0.0
        %1220 = vmatprep.subr.mxu0 0.0
        %1221 = vmatpush1.msra.mxu0 0.0
        %1222 = vmatprep.subr.mxu0 0.0
        %1223 = vmatpush1.msra.mxu0 0.0
        %1224 = vmatprep.subr.mxu0 0.0
        %1225 = vmatpush1.msra.mxu0 0.0
        %1226 = vmatprep.subr.mxu0 0.0
        %1227 = vmatpush1.msra.mxu0 0.0
        %1228 = vmatprep.subr.mxu0 0.0
        %1229 = vmatpush1.msra.mxu0 0.0
        %1230 = vmatprep.subr.mxu0 0.0
        %1231 = vmatpush1.msra.mxu0 0.0
        %1232 = vmatprep.subr.mxu0 0.0
        %1233 = vmatpush1.msra.mxu0 0.0
        %1234 = vmatprep.subr.mxu0 0.0
        %1235 = vmatpush1.msra.mxu0 %v809
        %1236 = vmatprep.subr.mxu0 0.0
        %1237 = vmatpush1.msra.mxu0 %v808
        %1238 = vmatprep.subr.mxu0 0.0
        %1239 = vmatpush2.msra.mxu0 0.0
        %1240 = vmatprep.subr.mxu0 0.0
        %1241 = vmatpush2.msra.mxu0 0.0
        %1242 = vmatprep.subr.mxu0 0.0
        %1243 = vmatpush2.msra.mxu0 0.0
        %1244 = vmatprep.subr.mxu0 0.0
        %1245 = vmatpush2.msra.mxu0 0.0
        %1246 = vmatprep.subr.mxu0 0.0
        %1247 = vmatpush2.msra.mxu0 0.0
        %1248 = vmatprep.subr.mxu0 0.0
        %1249 = vmatpush2.msra.mxu0 0.0
        %1250 = vmatprep.subr.mxu0 0.0
        %1251 = vmatpush2.msra.mxu0 0.0
        %1252 = vmatprep.subr.mxu0 0.0
        %1253 = vmatpush2.msra.mxu0 0.0
        %1254 = vmatprep.subr.mxu0 0.0
        %1255 = vmatpush2.msra.mxu0 0.0
        %1256 = vmatprep.subr.mxu0 0.0
        %1257 = vmatpush2.msra.mxu0 0.0
        %1258 = vmatprep.subr.mxu0 0.0
        %1259 = vmatpush2.msra.mxu0 0.0
        %1260 = vmatprep.subr.mxu0 0.0
        %1261 = vmatpush2.msra.mxu0 0.0
        %1262 = vmatprep.subr.mxu0 0.0
        %1263 = vmatpush2.msra.mxu0 0.0
        %1264 = vmatprep.subr.mxu0 0.0
        %1265 = vmatpush2.msra.mxu0 0.0
        %1266 = vmatprep.subr.mxu0 0.0
        %1267 = vmatpush2.msra.mxu0 0.0
        %1268 = vmatprep.subr.mxu0 0.0
        %1269 = vmatpush2.msra.mxu0 0.0
        %1270 = vmatprep.mubr.f32.mxu0 0.0
        %1271 = vmatmul.mubr.f32.gmra.mxu0 %v1134
        %v1272 = vpop.f32.mrf.mxu0
        %v1273 = vadd.f32 0.0, %v1272
        %v1274 = vpop.f32.mrf.mxu0
        %1275 = vdwg.mxu0
        %v1276 = vmax.f32 %v1203, %v1273
        %1278 = vrot.lane.b32.xlu0 %v1276, 31
        %v1279 = vpop.permute.xlu0 %1278
        %vm1281 = vcmask 318712
        %1282 = vst.msk [vmem:[#allocation5] sm:$0xff] %vm1281, %v1279
        %v1283 = vld [vmem:[#allocation4] sm:$0xff]
        %v1284 = vld [vmem:[#allocation4 + $0x8] sm:$0xff]
        %1287 = vrot.lane.b32.xlu0 %v1283, 110
        %v1288 = vpop.permute.xlu0 %1287
        %1289 = vrot.lane.b32.xlu0 %v1284, 110
        %v1290 = vpop.permute.xlu0 %1289
        %v1291 = vsel %vm295, %v1288, %v1290
        %v1293 = vmax.f32 %v1283, %v1291
        %1295 = vrot.lane.b32.xlu0 %v1293, 20
        %v1296 = vpop.permute.xlu0 %1295
        %v1297 = vsel %vm816, %v1296, 0
        %1299 = vmatprep.subr.mxu0 0.0
        %1300 = vmatpush1.msra.mxu0 0.0
        %1301 = vmatprep.subr.mxu0 0.0
        %1302 = vmatpush1.msra.mxu0 0.0
        %1303 = vmatprep.subr.mxu0 0.0
        %1304 = vmatpush1.msra.mxu0 0.0
        %1305 = vmatprep.subr.mxu0 0.0
        %1306 = vmatpush1.msra.mxu0 0.0
        %1307 = vmatprep.subr.mxu0 0.0
        %1308 = vmatpush1.msra.mxu0 0.0
        %1309 = vmatprep.subr.mxu0 0.0
        %1310 = vmatpush1.msra.mxu0 0.0
        %1311 = vmatprep.subr.mxu0 0.0
        %1312 = vmatpush1.msra.mxu0 0.0
        %1313 = vmatprep.subr.mxu0 0.0
        %1314 = vmatpush1.msra.mxu0 0.0
        %1315 = vmatprep.subr.mxu0 0.0
        %1316 = vmatpush1.msra.mxu0 0.0
        %1317 = vmatprep.subr.mxu0 0.0
        %1318 = vmatpush1.msra.mxu0 0.0
        %1319 = vmatprep.subr.mxu0 0.0
        %1320 = vmatpush1.msra.mxu0 0.0
        %1321 = vmatprep.subr.mxu0 0.0
        %1322 = vmatpush1.msra.mxu0 0.0
        %1323 = vmatprep.subr.mxu0 0.0
        %1324 = vmatpush1.msra.mxu0 0.0
        %1325 = vmatprep.subr.mxu0 0.0
        %1326 = vmatpush1.msra.mxu0 0.0
        %1327 = vmatprep.subr.mxu0 0.0
        %1328 = vmatpush1.msra.mxu0 %v804
        %1329 = vmatprep.subr.mxu0 0.0
        %1330 = vmatpush1.msra.mxu0 %v803
        %1331 = vmatprep.subr.mxu0 0.0
        %1332 = vmatpush2.msra.mxu0 0.0
        %1333 = vmatprep.subr.mxu0 0.0
        %1334 = vmatpush2.msra.mxu0 0.0
        %1335 = vmatprep.subr.mxu0 0.0
        %1336 = vmatpush2.msra.mxu0 0.0
        %1337 = vmatprep.subr.mxu0 0.0
        %1338 = vmatpush2.msra.mxu0 0.0
        %1339 = vmatprep.subr.mxu0 0.0
        %1340 = vmatpush2.msra.mxu0 0.0
        %1341 = vmatprep.subr.mxu0 0.0
        %1342 = vmatpush2.msra.mxu0 0.0
        %1343 = vmatprep.subr.mxu0 0.0
        %1344 = vmatpush2.msra.mxu0 0.0
        %1345 = vmatprep.subr.mxu0 0.0
        %1346 = vmatpush2.msra.mxu0 0.0
        %1347 = vmatprep.subr.mxu0 0.0
        %1348 = vmatpush2.msra.mxu0 0.0
        %1349 = vmatprep.subr.mxu0 0.0
        %1350 = vmatpush2.msra.mxu0 0.0
        %1351 = vmatprep.subr.mxu0 0.0
        %1352 = vmatpush2.msra.mxu0 0.0
        %1353 = vmatprep.subr.mxu0 0.0
        %1354 = vmatpush2.msra.mxu0 0.0
        %1355 = vmatprep.subr.mxu0 0.0
        %1356 = vmatpush2.msra.mxu0 0.0
        %1357 = vmatprep.subr.mxu0 0.0
        %1358 = vmatpush2.msra.mxu0 0.0
        %1359 = vmatprep.subr.mxu0 0.0
        %1360 = vmatpush2.msra.mxu0 0.0
        %1361 = vmatprep.subr.mxu0 0.0
        %1362 = vmatpush2.msra.mxu0 0.0
        %1363 = vmatprep.mubr.f32.mxu0 0.0
        %1364 = vmatmul.mubr.f32.gmra.mxu0 %v1297
        %v1365 = vpop.f32.mrf.mxu0
        %v1366 = vadd.f32 0.0, %v1365
        %v1367 = vpop.f32.mrf.mxu0
        %1368 = vdwg.mxu0
        %1369 = vmatprep.subr.mxu0 0.0
        %1370 = vmatpush1.msra.mxu0 0.0
        %1371 = vmatprep.subr.mxu0 0.0
        %1372 = vmatpush1.msra.mxu0 0.0
        %1373 = vmatprep.subr.mxu0 0.0
        %1374 = vmatpush1.msra.mxu0 0.0
        %1375 = vmatprep.subr.mxu0 0.0
        %1376 = vmatpush1.msra.mxu0 0.0
        %1377 = vmatprep.subr.mxu0 0.0
        %1378 = vmatpush1.msra.mxu0 0.0
        %1379 = vmatprep.subr.mxu0 0.0
        %1380 = vmatpush1.msra.mxu0 0.0
        %1381 = vmatprep.subr.mxu0 0.0
        %1382 = vmatpush1.msra.mxu0 0.0
        %1383 = vmatprep.subr.mxu0 0.0
        %1384 = vmatpush1.msra.mxu0 0.0
        %1385 = vmatprep.subr.mxu0 0.0
        %1386 = vmatpush1.msra.mxu0 0.0
        %1387 = vmatprep.subr.mxu0 0.0
        %1388 = vmatpush1.msra.mxu0 0.0
        %1389 = vmatprep.subr.mxu0 0.0
        %1390 = vmatpush1.msra.mxu0 0.0
        %1391 = vmatprep.subr.mxu0 0.0
        %1392 = vmatpush1.msra.mxu0 0.0
        %1393 = vmatprep.subr.mxu0 0.0
        %1394 = vmatpush1.msra.mxu0 0.0
        %1395 = vmatprep.subr.mxu0 0.0
        %1396 = vmatpush1.msra.mxu0 0.0
        %1397 = vmatprep.subr.mxu0 0.0
        %1398 = vmatpush1.msra.mxu0 %v809
        %1399 = vmatprep.subr.mxu0 0.0
        %1400 = vmatpush1.msra.mxu0 %v808
        %1401 = vmatprep.subr.mxu0 0.0
        %1402 = vmatpush2.msra.mxu0 0.0
        %1403 = vmatprep.subr.mxu0 0.0
        %1404 = vmatpush2.msra.mxu0 0.0
        %1405 = vmatprep.subr.mxu0 0.0
        %1406 = vmatpush2.msra.mxu0 0.0
        %1407 = vmatprep.subr.mxu0 0.0
        %1408 = vmatpush2.msra.mxu0 0.0
        %1409 = vmatprep.subr.mxu0 0.0
        %1410 = vmatpush2.msra.mxu0 0.0
        %1411 = vmatprep.subr.mxu0 0.0
        %1412 = vmatpush2.msra.mxu0 0.0
        %1413 = vmatprep.subr.mxu0 0.0
        %1414 = vmatpush2.msra.mxu0 0.0
        %1415 = vmatprep.subr.mxu0 0.0
        %1416 = vmatpush2.msra.mxu0 0.0
        %1417 = vmatprep.subr.mxu0 0.0
        %1418 = vmatpush2.msra.mxu0 0.0
        %1419 = vmatprep.subr.mxu0 0.0
        %1420 = vmatpush2.msra.mxu0 0.0
        %1421 = vmatprep.subr.mxu0 0.0
        %1422 = vmatpush2.msra.mxu0 0.0
        %1423 = vmatprep.subr.mxu0 0.0
        %1424 = vmatpush2.msra.mxu0 0.0
        %1425 = vmatprep.subr.mxu0 0.0
        %1426 = vmatpush2.msra.mxu0 0.0
        %1427 = vmatprep.subr.mxu0 0.0
        %1428 = vmatpush2.msra.mxu0 0.0
        %1429 = vmatprep.subr.mxu0 0.0
        %1430 = vmatpush2.msra.mxu0 0.0
        %1431 = vmatprep.subr.mxu0 0.0
        %1432 = vmatpush2.msra.mxu0 0.0
        %1433 = vmatprep.mubr.f32.mxu0 0.0
        %1434 = vmatmul.mubr.f32.gmra.mxu0 %v1297
        %v1435 = vpop.f32.mrf.mxu0
        %v1436 = vadd.f32 0.0, %v1435
        %v1437 = vpop.f32.mrf.mxu0
        %1438 = vdwg.mxu0
        %v1439 = vmax.f32 %v1366, %v1436
        %1441 = vrot.lane.b32.xlu0 %v1439, 41
        %v1442 = vpop.permute.xlu0 %1441
        %vm1444 = vcmask 400712
        %1445 = vst.msk [vmem:[#allocation5] sm:$0xff] %vm1444, %v1442
        %v1446 = vld [vmem:[#allocation4 + $0x8] sm:$0xff]
        %1448 = vrot.lane.b32.xlu0 %v1446, 110
        %v1449 = vpop.permute.xlu0 %1448
        %v1451 = vmax.f32 %v1446, %v1449
        %1453 = vrot.lane.b32.xlu0 %v1451, 112
        %v1454 = vpop.permute.xlu0 %1453
        %v1455 = vsel %vm816, %v1454, 0
        %1457 = vmatprep.subr.mxu0 0.0
        %1458 = vmatpush1.msra.mxu0 0.0
        %1459 = vmatprep.subr.mxu0 0.0
        %1460 = vmatpush1.msra.mxu0 0.0
        %1461 = vmatprep.subr.mxu0 0.0
        %1462 = vmatpush1.msra.mxu0 0.0
        %1463 = vmatprep.subr.mxu0 0.0
        %1464 = vmatpush1.msra.mxu0 0.0
        %1465 = vmatprep.subr.mxu0 0.0
        %1466 = vmatpush1.msra.mxu0 0.0
        %1467 = vmatprep.subr.mxu0 0.0
        %1468 = vmatpush1.msra.mxu0 0.0
        %1469 = vmatprep.subr.mxu0 0.0
        %1470 = vmatpush1.msra.mxu0 0.0
        %1471 = vmatprep.subr.mxu0 0.0
        %1472 = vmatpush1.msra.mxu0 0.0
        %1473 = vmatprep.subr.mxu0 0.0
        %1474 = vmatpush1.msra.mxu0 0.0
        %1475 = vmatprep.subr.mxu0 0.0
        %1476 = vmatpush1.msra.mxu0 0.0
        %1477 = vmatprep.subr.mxu0 0.0
        %1478 = vmatpush1.msra.mxu0 0.0
        %1479 = vmatprep.subr.mxu0 0.0
        %1480 = vmatpush1.msra.mxu0 0.0
        %1481 = vmatprep.subr.mxu0 0.0
        %1482 = vmatpush1.msra.mxu0 0.0
        %1483 = vmatprep.subr.mxu0 0.0
        %1484 = vmatpush1.msra.mxu0 0.0
        %1485 = vmatprep.subr.mxu0 0.0
        %1486 = vmatpush1.msra.mxu0 %v804
        %1487 = vmatprep.subr.mxu0 0.0
        %1488 = vmatpush1.msra.mxu0 %v803
        %1489 = vmatprep.subr.mxu0 0.0
        %1490 = vmatpush2.msra.mxu0 0.0
        %1491 = vmatprep.subr.mxu0 0.0
        %1492 = vmatpush2.msra.mxu0 0.0
        %1493 = vmatprep.subr.mxu0 0.0
        %1494 = vmatpush2.msra.mxu0 0.0
        %1495 = vmatprep.subr.mxu0 0.0
        %1496 = vmatpush2.msra.mxu0 0.0
        %1497 = vmatprep.subr.mxu0 0.0
        %1498 = vmatpush2.msra.mxu0 0.0
        %1499 = vmatprep.subr.mxu0 0.0
        %1500 = vmatpush2.msra.mxu0 0.0
        %1501 = vmatprep.subr.mxu0 0.0
        %1502 = vmatpush2.msra.mxu0 0.0
        %1503 = vmatprep.subr.mxu0 0.0
        %1504 = vmatpush2.msra.mxu0 0.0
        %1505 = vmatprep.subr.mxu0 0.0
        %1506 = vmatpush2.msra.mxu0 0.0
        %1507 = vmatprep.subr.mxu0 0.0
        %1508 = vmatpush2.msra.mxu0 0.0
        %1509 = vmatprep.subr.mxu0 0.0
        %1510 = vmatpush2.msra.mxu0 0.0
        %1511 = vmatprep.subr.mxu0 0.0
        %1512 = vmatpush2.msra.mxu0 0.0
        %1513 = vmatprep.subr.mxu0 0.0
        %1514 = vmatpush2.msra.mxu0 0.0
        %1515 = vmatprep.subr.mxu0 0.0
        %1516 = vmatpush2.msra.mxu0 0.0
        %1517 = vmatprep.subr.mxu0 0.0
        %1518 = vmatpush2.msra.mxu0 0.0
        %1519 = vmatprep.subr.mxu0 0.0
        %1520 = vmatpush2.msra.mxu0 0.0
        %1521 = vmatprep.mubr.f32.mxu0 0.0
        %1522 = vmatmul.mubr.f32.gmra.mxu0 %v1455
        %v1523 = vpop.f32.mrf.mxu0
        %v1524 = vadd.f32 0.0, %v1523
        %v1525 = vpop.f32.mrf.mxu0
        %1526 = vdwg.mxu0
        %1527 = vmatprep.subr.mxu0 0.0
        %1528 = vmatpush1.msra.mxu0 0.0
        %1529 = vmatprep.subr.mxu0 0.0
        %1530 = vmatpush1.msra.mxu0 0.0
        %1531 = vmatprep.subr.mxu0 0.0
        %1532 = vmatpush1.msra.mxu0 0.0
        %1533 = vmatprep.subr.mxu0 0.0
        %1534 = vmatpush1.msra.mxu0 0.0
        %1535 = vmatprep.subr.mxu0 0.0
        %1536 = vmatpush1.msra.mxu0 0.0
        %1537 = vmatprep.subr.mxu0 0.0
        %1538 = vmatpush1.msra.mxu0 0.0
        %1539 = vmatprep.subr.mxu0 0.0
        %1540 = vmatpush1.msra.mxu0 0.0
        %1541 = vmatprep.subr.mxu0 0.0
        %1542 = vmatpush1.msra.mxu0 0.0
        %1543 = vmatprep.subr.mxu0 0.0
        %1544 = vmatpush1.msra.mxu0 0.0
        %1545 = vmatprep.subr.mxu0 0.0
        %1546 = vmatpush1.msra.mxu0 0.0
        %1547 = vmatprep.subr.mxu0 0.0
        %1548 = vmatpush1.msra.mxu0 0.0
        %1549 = vmatprep.subr.mxu0 0.0
        %1550 = vmatpush1.msra.mxu0 0.0
        %1551 = vmatprep.subr.mxu0 0.0
        %1552 = vmatpush1.msra.mxu0 0.0
        %1553 = vmatprep.subr.mxu0 0.0
        %1554 = vmatpush1.msra.mxu0 0.0
        %1555 = vmatprep.subr.mxu0 0.0
        %1556 = vmatpush1.msra.mxu0 %v809
        %1557 = vmatprep.subr.mxu0 0.0
        %1558 = vmatpush1.msra.mxu0 %v808
        %1559 = vmatprep.subr.mxu0 0.0
        %1560 = vmatpush2.msra.mxu0 0.0
        %1561 = vmatprep.subr.mxu0 0.0
        %1562 = vmatpush2.msra.mxu0 0.0
        %1563 = vmatprep.subr.mxu0 0.0
        %1564 = vmatpush2.msra.mxu0 0.0
        %1565 = vmatprep.subr.mxu0 0.0
        %1566 = vmatpush2.msra.mxu0 0.0
        %1567 = vmatprep.subr.mxu0 0.0
        %1568 = vmatpush2.msra.mxu0 0.0
        %1569 = vmatprep.subr.mxu0 0.0
        %1570 = vmatpush2.msra.mxu0 0.0
        %1571 = vmatprep.subr.mxu0 0.0
        %1572 = vmatpush2.msra.mxu0 0.0
        %1573 = vmatprep.subr.mxu0 0.0
        %1574 = vmatpush2.msra.mxu0 0.0
        %1575 = vmatprep.subr.mxu0 0.0
        %1576 = vmatpush2.msra.mxu0 0.0
        %1577 = vmatprep.subr.mxu0 0.0
        %1578 = vmatpush2.msra.mxu0 0.0
        %1579 = vmatprep.subr.mxu0 0.0
        %1580 = vmatpush2.msra.mxu0 0.0
        %1581 = vmatprep.subr.mxu0 0.0
        %1582 = vmatpush2.msra.mxu0 0.0
        %1583 = vmatprep.subr.mxu0 0.0
        %1584 = vmatpush2.msra.mxu0 0.0
        %1585 = vmatprep.subr.mxu0 0.0
        %1586 = vmatpush2.msra.mxu0 0.0
        %1587 = vmatprep.subr.mxu0 0.0
        %1588 = vmatpush2.msra.mxu0 0.0
        %1589 = vmatprep.subr.mxu0 0.0
        %1590 = vmatpush2.msra.mxu0 0.0
        %1591 = vmatprep.mubr.f32.mxu0 0.0
        %1592 = vmatmul.mubr.f32.gmra.mxu0 %v1455
        %v1593 = vpop.f32.mrf.mxu0
        %v1594 = vadd.f32 0.0, %v1593
        %v1595 = vpop.f32.mrf.mxu0
        %1596 = vdwg.mxu0
        %v1597 = vmax.f32 %v1524, %v1594
        %1599 = vrot.lane.b32.xlu0 %v1597, 51
        %v1600 = vpop.permute.xlu0 %1599
        %vm1602 = vcmask 482712
        %1603 = vst.msk [vmem:[#allocation5] sm:$0xff] %vm1602, %v1600
        %v1604 = vld [vmem:[#allocation4 + $0x8] sm:$0xff]
        %1606 = vrot.lane.b32.xlu0 %v1604, 110
        %v1607 = vpop.permute.xlu0 %1606
        %v1609 = vmax.f32 %v1604, %v1607
        %1611 = vrot.lane.b32.xlu0 %v1609, 76
        %v1612 = vpop.permute.xlu0 %1611
        %v1613 = vsel %vm816, %v1612, 0
        %1615 = vmatprep.subr.mxu0 0.0
        %1616 = vmatpush1.msra.mxu0 0.0
        %1617 = vmatprep.subr.mxu0 0.0
        %1618 = vmatpush1.msra.mxu0 0.0
        %1619 = vmatprep.subr.mxu0 0.0
        %1620 = vmatpush1.msra.mxu0 0.0
        %1621 = vmatprep.subr.mxu0 0.0
        %1622 = vmatpush1.msra.mxu0 0.0
        %1623 = vmatprep.subr.mxu0 0.0
        %1624 = vmatpush1.msra.mxu0 0.0
        %1625 = vmatprep.subr.mxu0 0.0
        %1626 = vmatpush1.msra.mxu0 0.0
        %1627 = vmatprep.subr.mxu0 0.0
        %1628 = vmatpush1.msra.mxu0 0.0
        %1629 = vmatprep.subr.mxu0 0.0
        %1630 = vmatpush1.msra.mxu0 0.0
        %1631 = vmatprep.subr.mxu0 0.0
        %1632 = vmatpush1.msra.mxu0 0.0
        %1633 = vmatprep.subr.mxu0 0.0
        %1634 = vmatpush1.msra.mxu0 0.0
        %1635 = vmatprep.subr.mxu0 0.0
        %1636 = vmatpush1.msra.mxu0 0.0
        %1637 = vmatprep.subr.mxu0 0.0
        %1638 = vmatpush1.msra.mxu0 0.0
        %1639 = vmatprep.subr.mxu0 0.0
        %1640 = vmatpush1.msra.mxu0 0.0
        %1641 = vmatprep.subr.mxu0 0.0
        %1642 = vmatpush1.msra.mxu0 0.0
        %1643 = vmatprep.subr.mxu0 0.0
        %1644 = vmatpush1.msra.mxu0 %v804
        %1645 = vmatprep.subr.mxu0 0.0
        %1646 = vmatpush1.msra.mxu0 %v803
        %1647 = vmatprep.subr.mxu0 0.0
        %1648 = vmatpush2.msra.mxu0 0.0
        %1649 = vmatprep.subr.mxu0 0.0
        %1650 = vmatpush2.msra.mxu0 0.0
        %1651 = vmatprep.subr.mxu0 0.0
        %1652 = vmatpush2.msra.mxu0 0.0
        %1653 = vmatprep.subr.mxu0 0.0
        %1654 = vmatpush2.msra.mxu0 0.0
        %1655 = vmatprep.subr.mxu0 0.0
        %1656 = vmatpush2.msra.mxu0 0.0
        %1657 = vmatprep.subr.mxu0 0.0
        %1658 = vmatpush2.msra.mxu0 0.0
        %1659 = vmatprep.subr.mxu0 0.0
        %1660 = vmatpush2.msra.mxu0 0.0
        %1661 = vmatprep.subr.mxu0 0.0
        %1662 = vmatpush2.msra.mxu0 0.0
        %1663 = vmatprep.subr.mxu0 0.0
        %1664 = vmatpush2.msra.mxu0 0.0
        %1665 = vmatprep.subr.mxu0 0.0
        %1666 = vmatpush2.msra.mxu0 0.0
        %1667 = vmatprep.subr.mxu0 0.0
        %1668 = vmatpush2.msra.mxu0 0.0
        %1669 = vmatprep.subr.mxu0 0.0
        %1670 = vmatpush2.msra.mxu0 0.0
        %1671 = vmatprep.subr.mxu0 0.0
        %1672 = vmatpush2.msra.mxu0 0.0
        %1673 = vmatprep.subr.mxu0 0.0
        %1674 = vmatpush2.msra.mxu0 0.0
        %1675 = vmatprep.subr.mxu0 0.0
        %1676 = vmatpush2.msra.mxu0 0.0
        %1677 = vmatprep.subr.mxu0 0.0
        %1678 = vmatpush2.msra.mxu0 0.0
        %1679 = vmatprep.mubr.f32.mxu0 0.0
        %1680 = vmatmul.mubr.f32.gmra.mxu0 %v1613
        %v1681 = vpop.f32.mrf.mxu0
        %v1682 = vadd.f32 0.0, %v1681
        %v1683 = vpop.f32.mrf.mxu0
        %1684 = vdwg.mxu0
        %1685 = vmatprep.subr.mxu0 0.0
        %1686 = vmatpush1.msra.mxu0 0.0
        %1687 = vmatprep.subr.mxu0 0.0
        %1688 = vmatpush1.msra.mxu0 0.0
        %1689 = vmatprep.subr.mxu0 0.0
        %1690 = vmatpush1.msra.mxu0 0.0
        %1691 = vmatprep.subr.mxu0 0.0
        %1692 = vmatpush1.msra.mxu0 0.0
        %1693 = vmatprep.subr.mxu0 0.0
        %1694 = vmatpush1.msra.mxu0 0.0
        %1695 = vmatprep.subr.mxu0 0.0
        %1696 = vmatpush1.msra.mxu0 0.0
        %1697 = vmatprep.subr.mxu0 0.0
        %1698 = vmatpush1.msra.mxu0 0.0
        %1699 = vmatprep.subr.mxu0 0.0
        %1700 = vmatpush1.msra.mxu0 0.0
        %1701 = vmatprep.subr.mxu0 0.0
        %1702 = vmatpush1.msra.mxu0 0.0
        %1703 = vmatprep.subr.mxu0 0.0
        %1704 = vmatpush1.msra.mxu0 0.0
        %1705 = vmatprep.subr.mxu0 0.0
        %1706 = vmatpush1.msra.mxu0 0.0
        %1707 = vmatprep.subr.mxu0 0.0
        %1708 = vmatpush1.msra.mxu0 0.0
        %1709 = vmatprep.subr.mxu0 0.0
        %1710 = vmatpush1.msra.mxu0 0.0
        %1711 = vmatprep.subr.mxu0 0.0
        %1712 = vmatpush1.msra.mxu0 0.0
        %1713 = vmatprep.subr.mxu0 0.0
        %1714 = vmatpush1.msra.mxu0 %v809
        %1715 = vmatprep.subr.mxu0 0.0
        %1716 = vmatpush1.msra.mxu0 %v808
        %1717 = vmatprep.subr.mxu0 0.0
        %1718 = vmatpush2.msra.mxu0 0.0
        %1719 = vmatprep.subr.mxu0 0.0
        %1720 = vmatpush2.msra.mxu0 0.0
        %1721 = vmatprep.subr.mxu0 0.0
        %1722 = vmatpush2.msra.mxu0 0.0
        %1723 = vmatprep.subr.mxu0 0.0
        %1724 = vmatpush2.msra.mxu0 0.0
        %1725 = vmatprep.subr.mxu0 0.0
        %1726 = vmatpush2.msra.mxu0 0.0
        %1727 = vmatprep.subr.mxu0 0.0
        %1728 = vmatpush2.msra.mxu0 0.0
        %1729 = vmatprep.subr.mxu0 0.0
        %1730 = vmatpush2.msra.mxu0 0.0
        %1731 = vmatprep.subr.mxu0 0.0
        %1732 = vmatpush2.msra.mxu0 0.0
        %1733 = vmatprep.subr.mxu0 0.0
        %1734 = vmatpush2.msra.mxu0 0.0
        %1735 = vmatprep.subr.mxu0 0.0
        %1736 = vmatpush2.msra.mxu0 0.0
        %1737 = vmatprep.subr.mxu0 0.0
        %1738 = vmatpush2.msra.mxu0 0.0
        %1739 = vmatprep.subr.mxu0 0.0
        %1740 = vmatpush2.msra.mxu0 0.0
        %1741 = vmatprep.subr.mxu0 0.0
        %1742 = vmatpush2.msra.mxu0 0.0
        %1743 = vmatprep.subr.mxu0 0.0
        %1744 = vmatpush2.msra.mxu0 0.0
        %1745 = vmatprep.subr.mxu0 0.0
        %1746 = vmatpush2.msra.mxu0 0.0
        %1747 = vmatprep.subr.mxu0 0.0
        %1748 = vmatpush2.msra.mxu0 0.0
        %1749 = vmatprep.mubr.f32.mxu0 0.0
        %1750 = vmatmul.mubr.f32.gmra.mxu0 %v1613
        %v1751 = vpop.f32.mrf.mxu0
        %v1752 = vadd.f32 0.0, %v1751
        %v1753 = vpop.f32.mrf.mxu0
        %1754 = vdwg.mxu0
        %v1755 = vmax.f32 %v1682, %v1752
        %1757 = vrot.lane.b32.xlu0 %v1755, 61
        %v1758 = vpop.permute.xlu0 %1757
        %vm1760 = vcmask 564712
        %1761 = vst.msk [vmem:[#allocation5] sm:$0xff] %vm1760, %v1758
        %v1762 = vld [vmem:[#allocation4 + $0x8] sm:$0xff]
        %1764 = vrot.lane.b32.xlu0 %v1762, 110
        %v1765 = vpop.permute.xlu0 %1764
        %v1767 = vmax.f32 %v1762, %v1765
        %1769 = vrot.lane.b32.xlu0 %v1767, 40
        %v1770 = vpop.permute.xlu0 %1769
        %v1771 = vsel %vm816, %v1770, 0
        %1773 = vmatprep.subr.mxu0 0.0
        %1774 = vmatpush1.msra.mxu0 0.0
        %1775 = vmatprep.subr.mxu0 0.0
        %1776 = vmatpush1.msra.mxu0 0.0
        %1777 = vmatprep.subr.mxu0 0.0
        %1778 = vmatpush1.msra.mxu0 0.0
        %1779 = vmatprep.subr.mxu0 0.0
        %1780 = vmatpush1.msra.mxu0 0.0
        %1781 = vmatprep.subr.mxu0 0.0
        %1782 = vmatpush1.msra.mxu0 0.0
        %1783 = vmatprep.subr.mxu0 0.0
        %1784 = vmatpush1.msra.mxu0 0.0
        %1785 = vmatprep.subr.mxu0 0.0
        %1786 = vmatpush1.msra.mxu0 0.0
        %1787 = vmatprep.subr.mxu0 0.0
        %1788 = vmatpush1.msra.mxu0 0.0
        %1789 = vmatprep.subr.mxu0 0.0
        %1790 = vmatpush1.msra.mxu0 0.0
        %1791 = vmatprep.subr.mxu0 0.0
        %1792 = vmatpush1.msra.mxu0 0.0
        %1793 = vmatprep.subr.mxu0 0.0
        %1794 = vmatpush1.msra.mxu0 0.0
        %1795 = vmatprep.subr.mxu0 0.0
        %1796 = vmatpush1.msra.mxu0 0.0
        %1797 = vmatprep.subr.mxu0 0.0
        %1798 = vmatpush1.msra.mxu0 0.0
        %1799 = vmatprep.subr.mxu0 0.0
        %1800 = vmatpush1.msra.mxu0 0.0
        %1801 = vmatprep.subr.mxu0 0.0
        %1802 = vmatpush1.msra.mxu0 %v804
        %1803 = vmatprep.subr.mxu0 0.0
        %1804 = vmatpush1.msra.mxu0 %v803
        %1805 = vmatprep.subr.mxu0 0.0
        %1806 = vmatpush2.msra.mxu0 0.0
        %1807 = vmatprep.subr.mxu0 0.0
        %1808 = vmatpush2.msra.mxu0 0.0
        %1809 = vmatprep.subr.mxu0 0.0
        %1810 = vmatpush2.msra.mxu0 0.0
        %1811 = vmatprep.subr.mxu0 0.0
        %1812 = vmatpush2.msra.mxu0 0.0
        %1813 = vmatprep.subr.mxu0 0.0
        %1814 = vmatpush2.msra.mxu0 0.0
        %1815 = vmatprep.subr.mxu0 0.0
        %1816 = vmatpush2.msra.mxu0 0.0
        %1817 = vmatprep.subr.mxu0 0.0
        %1818 = vmatpush2.msra.mxu0 0.0
        %1819 = vmatprep.subr.mxu0 0.0
        %1820 = vmatpush2.msra.mxu0 0.0
        %1821 = vmatprep.subr.mxu0 0.0
        %1822 = vmatpush2.msra.mxu0 0.0
        %1823 = vmatprep.subr.mxu0 0.0
        %1824 = vmatpush2.msra.mxu0 0.0
        %1825 = vmatprep.subr.mxu0 0.0
        %1826 = vmatpush2.msra.mxu0 0.0
        %1827 = vmatprep.subr.mxu0 0.0
        %1828 = vmatpush2.msra.mxu0 0.0
        %1829 = vmatprep.subr.mxu0 0.0
        %1830 = vmatpush2.msra.mxu0 0.0
        %1831 = vmatprep.subr.mxu0 0.0
        %1832 = vmatpush2.msra.mxu0 0.0
        %1833 = vmatprep.subr.mxu0 0.0
        %1834 = vmatpush2.msra.mxu0 0.0
        %1835 = vmatprep.subr.mxu0 0.0
        %1836 = vmatpush2.msra.mxu0 0.0
        %1837 = vmatprep.mubr.f32.mxu0 0.0
        %1838 = vmatmul.mubr.f32.gmra.mxu0 %v1771
        %v1839 = vpop.f32.mrf.mxu0
        %v1840 = vadd.f32 0.0, %v1839
        %v1841 = vpop.f32.mrf.mxu0
        %1842 = vdwg.mxu0
        %1843 = vmatprep.subr.mxu0 0.0
        %1844 = vmatpush1.msra.mxu0 0.0
        %1845 = vmatprep.subr.mxu0 0.0
        %1846 = vmatpush1.msra.mxu0 0.0
        %1847 = vmatprep.subr.mxu0 0.0
        %1848 = vmatpush1.msra.mxu0 0.0
        %1849 = vmatprep.subr.mxu0 0.0
        %1850 = vmatpush1.msra.mxu0 0.0
        %1851 = vmatprep.subr.mxu0 0.0
        %1852 = vmatpush1.msra.mxu0 0.0
        %1853 = vmatprep.subr.mxu0 0.0
        %1854 = vmatpush1.msra.mxu0 0.0
        %1855 = vmatprep.subr.mxu0 0.0
        %1856 = vmatpush1.msra.mxu0 0.0
        %1857 = vmatprep.subr.mxu0 0.0
        %1858 = vmatpush1.msra.mxu0 0.0
        %1859 = vmatprep.subr.mxu0 0.0
        %1860 = vmatpush1.msra.mxu0 0.0
        %1861 = vmatprep.subr.mxu0 0.0
        %1862 = vmatpush1.msra.mxu0 0.0
        %1863 = vmatprep.subr.mxu0 0.0
        %1864 = vmatpush1.msra.mxu0 0.0
        %1865 = vmatprep.subr.mxu0 0.0
        %1866 = vmatpush1.msra.mxu0 0.0
        %1867 = vmatprep.subr.mxu0 0.0
        %1868 = vmatpush1.msra.mxu0 0.0
        %1869 = vmatprep.subr.mxu0 0.0
        %1870 = vmatpush1.msra.mxu0 0.0
        %1871 = vmatprep.subr.mxu0 0.0
        %1872 = vmatpush1.msra.mxu0 %v809
        %1873 = vmatprep.subr.mxu0 0.0
        %1874 = vmatpush1.msra.mxu0 %v808
        %1875 = vmatprep.subr.mxu0 0.0
        %1876 = vmatpush2.msra.mxu0 0.0
        %1877 = vmatprep.subr.mxu0 0.0
        %1878 = vmatpush2.msra.mxu0 0.0
        %1879 = vmatprep.subr.mxu0 0.0
        %1880 = vmatpush2.msra.mxu0 0.0
        %1881 = vmatprep.subr.mxu0 0.0
        %1882 = vmatpush2.msra.mxu0 0.0
        %1883 = vmatprep.subr.mxu0 0.0
        %1884 = vmatpush2.msra.mxu0 0.0
        %1885 = vmatprep.subr.mxu0 0.0
        %1886 = vmatpush2.msra.mxu0 0.0
        %1887 = vmatprep.subr.mxu0 0.0
        %1888 = vmatpush2.msra.mxu0 0.0
        %1889 = vmatprep.subr.mxu0 0.0
        %1890 = vmatpush2.msra.mxu0 0.0
        %1891 = vmatprep.subr.mxu0 0.0
        %1892 = vmatpush2.msra.mxu0 0.0
        %1893 = vmatprep.subr.mxu0 0.0
        %1894 = vmatpush2.msra.mxu0 0.0
        %1895 = vmatprep.subr.mxu0 0.0
        %1896 = vmatpush2.msra.mxu0 0.0
        %1897 = vmatprep.subr.mxu0 0.0
        %1898 = vmatpush2.msra.mxu0 0.0
        %1899 = vmatprep.subr.mxu0 0.0
        %1900 = vmatpush2.msra.mxu0 0.0
        %1901 = vmatprep.subr.mxu0 0.0
        %1902 = vmatpush2.msra.mxu0 0.0
        %1903 = vmatprep.subr.mxu0 0.0
        %1904 = vmatpush2.msra.mxu0 0.0
        %1905 = vmatprep.subr.mxu0 0.0
        %1906 = vmatpush2.msra.mxu0 0.0
        %1907 = vmatprep.mubr.f32.mxu0 0.0
        %1908 = vmatmul.mubr.f32.gmra.mxu0 %v1771
        %v1909 = vpop.f32.mrf.mxu0
        %v1910 = vadd.f32 0.0, %v1909
        %v1911 = vpop.f32.mrf.mxu0
        %1912 = vdwg.mxu0
        %v1913 = vmax.f32 %v1840, %v1910
        %1915 = vrot.lane.b32.xlu0 %v1913, 71
        %v1916 = vpop.permute.xlu0 %1915
        %vm1918 = vcmask 646712
        %1919 = vst.msk [vmem:[#allocation5] sm:$0xff] %vm1918, %v1916
        %v1920 = vld [vmem:[#allocation4 + $0x8] sm:$0xff]
        %v1921 = vld [vmem:[#allocation4 + $0x10] sm:$0xff]
        %1923 = vrot.lane.b32.xlu0 %v1921, 110
        %v1924 = vpop.permute.xlu0 %1923
        %v1926 = vmax.f32 %v1920, %v1924
        %v1927 = vmax.f32 %v1921, %v1924
        %1930 = vrot.lane.b32.xlu0 %v1926, 4
        %v1931 = vpop.permute.xlu0 %1930
        %1932 = vrot.lane.b32.xlu0 %v1927, 4
        %v1933 = vpop.permute.xlu0 %1932
        %vm1934 = vcmask 31744
        %v1935 = vsel %vm1934, %v1931, %v1933
        %v1936 = vsel %vm816, %v1935, 0
        %1938 = vmatprep.subr.mxu0 0.0
        %1939 = vmatpush1.msra.mxu0 0.0
        %1940 = vmatprep.subr.mxu0 0.0
        %1941 = vmatpush1.msra.mxu0 0.0
        %1942 = vmatprep.subr.mxu0 0.0
        %1943 = vmatpush1.msra.mxu0 0.0
        %1944 = vmatprep.subr.mxu0 0.0
        %1945 = vmatpush1.msra.mxu0 0.0
        %1946 = vmatprep.subr.mxu0 0.0
        %1947 = vmatpush1.msra.mxu0 0.0
        %1948 = vmatprep.subr.mxu0 0.0
        %1949 = vmatpush1.msra.mxu0 0.0
        %1950 = vmatprep.subr.mxu0 0.0
        %1951 = vmatpush1.msra.mxu0 0.0
        %1952 = vmatprep.subr.mxu0 0.0
        %1953 = vmatpush1.msra.mxu0 0.0
        %1954 = vmatprep.subr.mxu0 0.0
        %1955 = vmatpush1.msra.mxu0 0.0
        %1956 = vmatprep.subr.mxu0 0.0
        %1957 = vmatpush1.msra.mxu0 0.0
        %1958 = vmatprep.subr.mxu0 0.0
        %1959 = vmatpush1.msra.mxu0 0.0
        %1960 = vmatprep.subr.mxu0 0.0
        %1961 = vmatpush1.msra.mxu0 0.0
        %1962 = vmatprep.subr.mxu0 0.0
        %1963 = vmatpush1.msra.mxu0 0.0
        %1964 = vmatprep.subr.mxu0 0.0
        %1965 = vmatpush1.msra.mxu0 0.0
        %1966 = vmatprep.subr.mxu0 0.0
        %1967 = vmatpush1.msra.mxu0 %v804
        %1968 = vmatprep.subr.mxu0 0.0
        %1969 = vmatpush1.msra.mxu0 %v803
        %1970 = vmatprep.subr.mxu0 0.0
        %1971 = vmatpush2.msra.mxu0 0.0
        %1972 = vmatprep.subr.mxu0 0.0
        %1973 = vmatpush2.msra.mxu0 0.0
        %1974 = vmatprep.subr.mxu0 0.0
        %1975 = vmatpush2.msra.mxu0 0.0
        %1976 = vmatprep.subr.mxu0 0.0
        %1977 = vmatpush2.msra.mxu0 0.0
        %1978 = vmatprep.subr.mxu0 0.0
        %1979 = vmatpush2.msra.mxu0 0.0
        %1980 = vmatprep.subr.mxu0 0.0
        %1981 = vmatpush2.msra.mxu0 0.0
        %1982 = vmatprep.subr.mxu0 0.0
        %1983 = vmatpush2.msra.mxu0 0.0
        %1984 = vmatprep.subr.mxu0 0.0
        %1985 = vmatpush2.msra.mxu0 0.0
        %1986 = vmatprep.subr.mxu0 0.0
        %1987 = vmatpush2.msra.mxu0 0.0
        %1988 = vmatprep.subr.mxu0 0.0
        %1989 = vmatpush2.msra.mxu0 0.0
        %1990 = vmatprep.subr.mxu0 0.0
        %1991 = vmatpush2.msra.mxu0 0.0
        %1992 = vmatprep.subr.mxu0 0.0
        %1993 = vmatpush2.msra.mxu0 0.0
        %1994 = vmatprep.subr.mxu0 0.0
        %1995 = vmatpush2.msra.mxu0 0.0
        %1996 = vmatprep.subr.mxu0 0.0
        %1997 = vmatpush2.msra.mxu0 0.0
        %1998 = vmatprep.subr.mxu0 0.0
        %1999 = vmatpush2.msra.mxu0 0.0
        %2000 = vmatprep.subr.mxu0 0.0
        %2001 = vmatpush2.msra.mxu0 0.0
        %2002 = vmatprep.mubr.f32.mxu0 0.0
        %2003 = vmatmul.mubr.f32.gmra.mxu0 %v1936
        %v2004 = vpop.f32.mrf.mxu0
        %v2005 = vadd.f32 0.0, %v2004
        %v2006 = vpop.f32.mrf.mxu0
        %2007 = vdwg.mxu0
        %2008 = vmatprep.subr.mxu0 0.0
        %2009 = vmatpush1.msra.mxu0 0.0
        %2010 = vmatprep.subr.mxu0 0.0
        %2011 = vmatpush1.msra.mxu0 0.0
        %2012 = vmatprep.subr.mxu0 0.0
        %2013 = vmatpush1.msra.mxu0 0.0
        %2014 = vmatprep.subr.mxu0 0.0
        %2015 = vmatpush1.msra.mxu0 0.0
        %2016 = vmatprep.subr.mxu0 0.0
        %2017 = vmatpush1.msra.mxu0 0.0
        %2018 = vmatprep.subr.mxu0 0.0
        %2019 = vmatpush1.msra.mxu0 0.0
        %2020 = vmatprep.subr.mxu0 0.0
        %2021 = vmatpush1.msra.mxu0 0.0
        %2022 = vmatprep.subr.mxu0 0.0
        %2023 = vmatpush1.msra.mxu0 0.0
        %2024 = vmatprep.subr.mxu0 0.0
        %2025 = vmatpush1.msra.mxu0 0.0
        %2026 = vmatprep.subr.mxu0 0.0
        %2027 = vmatpush1.msra.mxu0 0.0
        %2028 = vmatprep.subr.mxu0 0.0
        %2029 = vmatpush1.msra.mxu0 0.0
        %2030 = vmatprep.subr.mxu0 0.0
        %2031 = vmatpush1.msra.mxu0 0.0
        %2032 = vmatprep.subr.mxu0 0.0
        %2033 = vmatpush1.msra.mxu0 0.0
        %2034 = vmatprep.subr.mxu0 0.0
        %2035 = vmatpush1.msra.mxu0 0.0
        %2036 = vmatprep.subr.mxu0 0.0
        %2037 = vmatpush1.msra.mxu0 %v809
        %2038 = vmatprep.subr.mxu0 0.0
        %2039 = vmatpush1.msra.mxu0 %v808
        %2040 = vmatprep.subr.mxu0 0.0
        %2041 = vmatpush2.msra.mxu0 0.0
        %2042 = vmatprep.subr.mxu0 0.0
        %2043 = vmatpush2.msra.mxu0 0.0
        %2044 = vmatprep.subr.mxu0 0.0
        %2045 = vmatpush2.msra.mxu0 0.0
        %2046 = vmatprep.subr.mxu0 0.0
        %2047 = vmatpush2.msra.mxu0 0.0
        %2048 = vmatprep.subr.mxu0 0.0
        %2049 = vmatpush2.msra.mxu0 0.0
        %2050 = vmatprep.subr.mxu0 0.0
        %2051 = vmatpush2.msra.mxu0 0.0
        %2052 = vmatprep.subr.mxu0 0.0
        %2053 = vmatpush2.msra.mxu0 0.0
        %2054 = vmatprep.subr.mxu0 0.0
        %2055 = vmatpush2.msra.mxu0 0.0
        %2056 = vmatprep.subr.mxu0 0.0
        %2057 = vmatpush2.msra.mxu0 0.0
        %2058 = vmatprep.subr.mxu0 0.0
        %2059 = vmatpush2.msra.mxu0 0.0
        %2060 = vmatprep.subr.mxu0 0.0
        %2061 = vmatpush2.msra.mxu0 0.0
        %2062 = vmatprep.subr.mxu0 0.0
        %2063 = vmatpush2.msra.mxu0 0.0
        %2064 = vmatprep.subr.mxu0 0.0
        %2065 = vmatpush2.msra.mxu0 0.0
        %2066 = vmatprep.subr.mxu0 0.0
        %2067 = vmatpush2.msra.mxu0 0.0
        %2068 = vmatprep.subr.mxu0 0.0
        %2069 = vmatpush2.msra.mxu0 0.0
        %2070 = vmatprep.subr.mxu0 0.0
        %2071 = vmatpush2.msra.mxu0 0.0
        %2072 = vmatprep.mubr.f32.mxu0 0.0
        %2073 = vmatmul.mubr.f32.gmra.mxu0 %v1936
        %v2074 = vpop.f32.mrf.mxu0
        %v2075 = vadd.f32 0.0, %v2074
        %v2076 = vpop.f32.mrf.mxu0
        %2077 = vdwg.mxu0
        %v2078 = vmax.f32 %v2005, %v2075
        %2080 = vrot.lane.b32.xlu0 %v2078, 81
        %v2081 = vpop.permute.xlu0 %2080
        %vm2083 = vcmask 728712
        %2084 = vst.msk [vmem:[#allocation5] sm:$0xff] %vm2083, %v2081
        %v2085 = vld [vmem:[#allocation5] sm:$0xff]
        %vm2086 = vcmask 654336
        %2087 = vst.msk [vmem:[#allocation6] sm:$0xff] %vm2086, %v2085
        %v2088 = vld [vmem:[#allocation5] sm:$0xff]
        %2090 = vrot.lane.b32.xlu0 %v2088, 127
        %v2091 = vpop.permute.xlu0 %2090
        %2093 = vst.msk [vmem:[#allocation6 + $0x8] sm:$0xff] %vm2086, %v2091
        %v2094 = vld [vmem:[#allocation5] sm:$0xff]
        %2096 = vrot.lane.b32.xlu0 %v2094, 126
        %v2097 = vpop.permute.xlu0 %2096
        %2099 = vst.msk [vmem:[#allocation6 + $0x10] sm:$0xff] %vm2086, %v2097
        %v2100 = vld [vmem:[#allocation5] sm:$0xff]
        %2102 = vrot.lane.b32.xlu0 %v2100, 118
        %v2103 = vpop.permute.xlu0 %2102
        %2105 = vst.msk [vmem:[#allocation6 + $0x18] sm:$0xff] %vm2086, %v2103
        %v2106 = vld [vmem:[#allocation5] sm:$0xff]
        %2108 = vrot.lane.b32.xlu0 %v2106, 117
        %v2109 = vpop.permute.xlu0 %2108
        %2111 = vst.msk [vmem:[#allocation6 + $0x20] sm:$0xff] %vm2086, %v2109
        %v2112 = vld [vmem:[#allocation5] sm:$0xff]
        %2114 = vrot.lane.b32.xlu0 %v2112, 116
        %v2115 = vpop.permute.xlu0 %2114
        %2117 = vst.msk [vmem:[#allocation6 + $0x28] sm:$0xff] %vm2086, %v2115
        %v2118 = vld [vmem:[#allocation5] sm:$0xff]
        %2120 = vrot.lane.b32.xlu0 %v2118, 108
        %v2121 = vpop.permute.xlu0 %2120
        %2123 = vst.msk [vmem:[#allocation6 + $0x30] sm:$0xff] %vm2086, %v2121
        %v2124 = vld [vmem:[#allocation5] sm:$0xff]
        %2126 = vrot.lane.b32.xlu0 %v2124, 107
        %v2127 = vpop.permute.xlu0 %2126
        %2129 = vst.msk [vmem:[#allocation6 + $0x38] sm:$0xff] %vm2086, %v2127
        %v2130 = vld [vmem:[#allocation5] sm:$0xff]
        %2132 = vrot.lane.b32.xlu0 %v2130, 106
        %v2133 = vpop.permute.xlu0 %2132
        %2135 = vst.msk [vmem:[#allocation6 + $0x40] sm:$0xff] %vm2086, %v2133
        %v2136 = vld [vmem:[%s4] sm:$0xff]
        %v2137 = vld [vmem:[#allocation6] sm:$0xff]
        %v2138 = vld [vmem:[#allocation6 + $0x8] sm:$0xff]
        %v2139 = vld [vmem:[#allocation6 + $0x10] sm:$0xff]
        %v2140 = vld [vmem:[#allocation6 + $0x18] sm:$0xff]
        %v2141 = vld [vmem:[#allocation6 + $0x20] sm:$0xff]
        %v2142 = vld [vmem:[#allocation6 + $0x28] sm:$0xff]
        %v2143 = vld [vmem:[#allocation6 + $0x30] sm:$0xff]
        %v2144 = vld [vmem:[#allocation6 + $0x38] sm:$0xff]
        %v2145 = vld [vmem:[#allocation6 + $0x40] sm:$0xff]
        %vm2146 = vcmask 588800
        %v2148 = vsel %vm2146, %v2136, 0
        %2150 = vmatprep.subr.mxu0 0.0
        %2151 = vmatpush1.msra.mxu0 0.0
        %2152 = vmatprep.subr.mxu0 0.0
        %2153 = vmatpush1.msra.mxu0 0.0
        %2154 = vmatprep.subr.mxu0 0.0
        %2155 = vmatpush1.msra.mxu0 0.0
        %2156 = vmatprep.subr.mxu0 0.0
        %2157 = vmatpush1.msra.mxu0 0.0
        %2158 = vmatprep.subr.mxu0 0.0
        %2159 = vmatpush1.msra.mxu0 0.0
        %2160 = vmatprep.subr.mxu0 0.0
        %2161 = vmatpush1.msra.mxu0 0.0
        %2162 = vmatprep.subr.mxu0 0.0
        %2163 = vmatpush1.msra.mxu0 0.0
        %2164 = vmatprep.subr.mxu0 0.0
        %2165 = vmatpush1.msra.mxu0 %v2145
        %2166 = vmatprep.subr.mxu0 0.0
        %2167 = vmatpush1.msra.mxu0 %v2144
        %2168 = vmatprep.subr.mxu0 0.0
        %2169 = vmatpush1.msra.mxu0 %v2143
        %2170 = vmatprep.subr.mxu0 0.0
        %2171 = vmatpush1.msra.mxu0 %v2142
        %2172 = vmatprep.subr.mxu0 0.0
        %2173 = vmatpush1.msra.mxu0 %v2141
        %2174 = vmatprep.subr.mxu0 0.0
        %2175 = vmatpush1.msra.mxu0 %v2140
        %2176 = vmatprep.subr.mxu0 0.0
        %2177 = vmatpush1.msra.mxu0 %v2139
        %2178 = vmatprep.subr.mxu0 0.0
        %2179 = vmatpush1.msra.mxu0 %v2138
        %2180 = vmatprep.subr.mxu0 0.0
        %2181 = vmatpush1.msra.mxu0 %v2137
        %2182 = vmatprep.subr.mxu0 0.0
        %2183 = vmatpush2.msra.mxu0 0.0
        %2184 = vmatprep.subr.mxu0 0.0
        %2185 = vmatpush2.msra.mxu0 0.0
        %2186 = vmatprep.subr.mxu0 0.0
        %2187 = vmatpush2.msra.mxu0 0.0
        %2188 = vmatprep.subr.mxu0 0.0
        %2189 = vmatpush2.msra.mxu0 0.0
        %2190 = vmatprep.subr.mxu0 0.0
        %2191 = vmatpush2.msra.mxu0 0.0
        %2192 = vmatprep.subr.mxu0 0.0
        %2193 = vmatpush2.msra.mxu0 0.0
        %2194 = vmatprep.subr.mxu0 0.0
        %2195 = vmatpush2.msra.mxu0 0.0
        %2196 = vmatprep.subr.mxu0 0.0
        %2197 = vmatpush2.msra.mxu0 0.0
        %2198 = vmatprep.subr.mxu0 0.0
        %2199 = vmatpush2.msra.mxu0 0.0
        %2200 = vmatprep.subr.mxu0 0.0
        %2201 = vmatpush2.msra.mxu0 0.0
        %2202 = vmatprep.subr.mxu0 0.0
        %2203 = vmatpush2.msra.mxu0 0.0
        %2204 = vmatprep.subr.mxu0 0.0
        %2205 = vmatpush2.msra.mxu0 0.0
        %2206 = vmatprep.subr.mxu0 0.0
        %2207 = vmatpush2.msra.mxu0 0.0
        %2208 = vmatprep.subr.mxu0 0.0
        %2209 = vmatpush2.msra.mxu0 0.0
        %2210 = vmatprep.subr.mxu0 0.0
        %2211 = vmatpush2.msra.mxu0 0.0
        %2212 = vmatprep.subr.mxu0 0.0
        %2213 = vmatpush2.msra.mxu0 0.0
        %2214 = vmatprep.mubr.f32.mxu0 0.0
        %2215 = vmatmul.mubr.f32.gmra.mxu0 %v2148
        %v2216 = vpop.f32.mrf.mxu0
        %v2217 = vadd.f32 0.0, %v2216
        %v2218 = vpop.f32.mrf.mxu0
        %2219 = vdwg.mxu0
        %v2220 = vld [vmem:[%s5] sm:$0xff]
        %2222 = vset.pattern.permute.xlu0 0
        %2223 = vperm.xlu0 %2222, %v2220
        %v2224 = vpop.permute.xlu0 %2223
        %v2226 = vmul.f32 %v2217, %v2224
        %v2227 = vld [vmem:[%s6] sm:$0xff]
        %2229 = vset.pattern.permute.xlu0 0
        %2230 = vperm.xlu0 %2229, %v2227
        %v2231 = vpop.permute.xlu0 %2230
        %v2233 = vadd.f32 %v2226, %v2231
        %v2234 = vmax.f32 %v2233, 0.0
        %2235 = vst.msk [vmem:[#allocation7] sm:$0xff] %vm2086, %v2234
        %v2236 = vld [vmem:[#allocation7] sm:$0xff]
        %2238 = vrot.lane.b32.xlu0 %v2236, 118
        %v2239 = vpop.permute.xlu0 %2238
        %v2241 = vmax.f32 %v2236, %v2239
        %vm2242 = vcmask 64512
        %v2244 = vsel %vm2242, %v2241, 0
        %2246 = vmatprep.subr.mxu0 0.0
        %2247 = vmatpush1.msra.mxu0 0.0
        %2248 = vmatprep.subr.mxu0 0.0
        %2249 = vmatpush1.msra.mxu0 0.0
        %2250 = vmatprep.subr.mxu0 0.0
        %2251 = vmatpush1.msra.mxu0 0.0
        %2252 = vmatprep.subr.mxu0 0.0
        %2253 = vmatpush1.msra.mxu0 0.0
        %2254 = vmatprep.subr.mxu0 0.0
        %2255 = vmatpush1.msra.mxu0 0.0
        %2256 = vmatprep.subr.mxu0 0.0
        %2257 = vmatpush1.msra.mxu0 0.0
        %2258 = vmatprep.subr.mxu0 0.0
        %2259 = vmatpush1.msra.mxu0 0.0
        %2260 = vmatprep.subr.mxu0 0.0
        %2261 = vmatpush1.msra.mxu0 0.0
        %2262 = vmatprep.subr.mxu0 0.0
        %2263 = vmatpush1.msra.mxu0 0.0
        %2264 = vmatprep.subr.mxu0 0.0
        %2265 = vmatpush1.msra.mxu0 0.0
        %2266 = vmatprep.subr.mxu0 0.0
        %2267 = vmatpush1.msra.mxu0 0.0
        %2268 = vmatprep.subr.mxu0 0.0
        %2269 = vmatpush1.msra.mxu0 0.0
        %2270 = vmatprep.subr.mxu0 0.0
        %2271 = vmatpush1.msra.mxu0 0.0
        %2272 = vmatprep.subr.mxu0 0.0
        %2273 = vmatpush1.msra.mxu0 0.0
        %2274 = vmatprep.subr.mxu0 0.0
        %2275 = vmatpush1.msra.mxu0 0.0
        %2276 = vmatprep.subr.mxu0 0.0
        %2277 = vmatpush1.msra.mxu0 %v803
        %2278 = vmatprep.subr.mxu0 0.0
        %2279 = vmatpush2.msra.mxu0 0.0
        %2280 = vmatprep.subr.mxu0 0.0
        %2281 = vmatpush2.msra.mxu0 0.0
        %2282 = vmatprep.subr.mxu0 0.0
        %2283 = vmatpush2.msra.mxu0 0.0
        %2284 = vmatprep.subr.mxu0 0.0
        %2285 = vmatpush2.msra.mxu0 0.0
        %2286 = vmatprep.subr.mxu0 0.0
        %2287 = vmatpush2.msra.mxu0 0.0
        %2288 = vmatprep.subr.mxu0 0.0
        %2289 = vmatpush2.msra.mxu0 0.0
        %2290 = vmatprep.subr.mxu0 0.0
        %2291 = vmatpush2.msra.mxu0 0.0
        %2292 = vmatprep.subr.mxu0 0.0
        %2293 = vmatpush2.msra.mxu0 0.0
        %2294 = vmatprep.subr.mxu0 0.0
        %2295 = vmatpush2.msra.mxu0 0.0
        %2296 = vmatprep.subr.mxu0 0.0
        %2297 = vmatpush2.msra.mxu0 0.0
        %2298 = vmatprep.subr.mxu0 0.0
        %2299 = vmatpush2.msra.mxu0 0.0
        %2300 = vmatprep.subr.mxu0 0.0
        %2301 = vmatpush2.msra.mxu0 0.0
        %2302 = vmatprep.subr.mxu0 0.0
        %2303 = vmatpush2.msra.mxu0 0.0
        %2304 = vmatprep.subr.mxu0 0.0
        %2305 = vmatpush2.msra.mxu0 0.0
        %2306 = vmatprep.subr.mxu0 0.0
        %2307 = vmatpush2.msra.mxu0 0.0
        %2308 = vmatprep.subr.mxu0 0.0
        %2309 = vmatpush2.msra.mxu0 0.0
        %2310 = vmatprep.mubr.f32.mxu0 0.0
        %2311 = vmatmul.mubr.f32.gmra.mxu0 %v2244
        %v2312 = vpop.f32.mrf.mxu0
        %v2313 = vadd.f32 0.0, %v2312
        %v2314 = vpop.f32.mrf.mxu0
        %2315 = vdwg.mxu0
        %2316 = vmatprep.subr.mxu0 0.0
        %2317 = vmatpush1.msra.mxu0 0.0
        %2318 = vmatprep.subr.mxu0 0.0
        %2319 = vmatpush1.msra.mxu0 0.0
        %2320 = vmatprep.subr.mxu0 0.0
        %2321 = vmatpush1.msra.mxu0 0.0
        %2322 = vmatprep.subr.mxu0 0.0
        %2323 = vmatpush1.msra.mxu0 0.0
        %2324 = vmatprep.subr.mxu0 0.0
        %2325 = vmatpush1.msra.mxu0 0.0
        %2326 = vmatprep.subr.mxu0 0.0
        %2327 = vmatpush1.msra.mxu0 0.0
        %2328 = vmatprep.subr.mxu0 0.0
        %2329 = vmatpush1.msra.mxu0 0.0
        %2330 = vmatprep.subr.mxu0 0.0
        %2331 = vmatpush1.msra.mxu0 0.0
        %2332 = vmatprep.subr.mxu0 0.0
        %2333 = vmatpush1.msra.mxu0 0.0
        %2334 = vmatprep.subr.mxu0 0.0
        %2335 = vmatpush1.msra.mxu0 0.0
        %2336 = vmatprep.subr.mxu0 0.0
        %2337 = vmatpush1.msra.mxu0 0.0
        %2338 = vmatprep.subr.mxu0 0.0
        %2339 = vmatpush1.msra.mxu0 0.0
        %2340 = vmatprep.subr.mxu0 0.0
        %2341 = vmatpush1.msra.mxu0 0.0
        %2342 = vmatprep.subr.mxu0 0.0
        %2343 = vmatpush1.msra.mxu0 0.0
        %2344 = vmatprep.subr.mxu0 0.0
        %2345 = vmatpush1.msra.mxu0 0.0
        %2346 = vmatprep.subr.mxu0 0.0
        %2347 = vmatpush1.msra.mxu0 %v808
        %2348 = vmatprep.subr.mxu0 0.0
        %2349 = vmatpush2.msra.mxu0 0.0
        %2350 = vmatprep.subr.mxu0 0.0
        %2351 = vmatpush2.msra.mxu0 0.0
        %2352 = vmatprep.subr.mxu0 0.0
        %2353 = vmatpush2.msra.mxu0 0.0
        %2354 = vmatprep.subr.mxu0 0.0
        %2355 = vmatpush2.msra.mxu0 0.0
        %2356 = vmatprep.subr.mxu0 0.0
        %2357 = vmatpush2.msra.mxu0 0.0
        %2358 = vmatprep.subr.mxu0 0.0
        %2359 = vmatpush2.msra.mxu0 0.0
        %2360 = vmatprep.subr.mxu0 0.0
        %2361 = vmatpush2.msra.mxu0 0.0
        %2362 = vmatprep.subr.mxu0 0.0
        %2363 = vmatpush2.msra.mxu0 0.0
        %2364 = vmatprep.subr.mxu0 0.0
        %2365 = vmatpush2.msra.mxu0 0.0
        %2366 = vmatprep.subr.mxu0 0.0
        %2367 = vmatpush2.msra.mxu0 0.0
        %2368 = vmatprep.subr.mxu0 0.0
        %2369 = vmatpush2.msra.mxu0 0.0
        %2370 = vmatprep.subr.mxu0 0.0
        %2371 = vmatpush2.msra.mxu0 0.0
        %2372 = vmatprep.subr.mxu0 0.0
        %2373 = vmatpush2.msra.mxu0 0.0
        %2374 = vmatprep.subr.mxu0 0.0
        %2375 = vmatpush2.msra.mxu0 0.0
        %2376 = vmatprep.subr.mxu0 0.0
        %2377 = vmatpush2.msra.mxu0 0.0
        %2378 = vmatprep.subr.mxu0 0.0
        %2379 = vmatpush2.msra.mxu0 0.0
        %2380 = vmatprep.mubr.f32.mxu0 0.0
        %2381 = vmatmul.mubr.f32.gmra.mxu0 %v2244
        %v2382 = vpop.f32.mrf.mxu0
        %v2383 = vadd.f32 0.0, %v2382
        %v2384 = vpop.f32.mrf.mxu0
        %2385 = vdwg.mxu0
        %v2386 = vmax.f32 %v2313, %v2383
        %2387 = vst.msk [vmem:[%s284] sm:$0xff] %vm1934, %v2386
        %v2388 = vld [vmem:[#allocation7] sm:$0xff]
        %2390 = vrot.lane.b32.xlu0 %v2388, 118
        %v2391 = vpop.permute.xlu0 %2390
        %v2393 = vmax.f32 %v2388, %v2391
        %2395 = vrot.lane.b32.xlu0 %v2393, 108
        %v2396 = vpop.permute.xlu0 %2395
        %v2397 = vsel %vm2242, %v2396, 0
        %2399 = vmatprep.subr.mxu0 0.0
        %2400 = vmatpush1.msra.mxu0 0.0
        %2401 = vmatprep.subr.mxu0 0.0
        %2402 = vmatpush1.msra.mxu0 0.0
        %2403 = vmatprep.subr.mxu0 0.0
        %2404 = vmatpush1.msra.mxu0 0.0
        %2405 = vmatprep.subr.mxu0 0.0
        %2406 = vmatpush1.msra.mxu0 0.0
        %2407 = vmatprep.subr.mxu0 0.0
        %2408 = vmatpush1.msra.mxu0 0.0
        %2409 = vmatprep.subr.mxu0 0.0
        %2410 = vmatpush1.msra.mxu0 0.0
        %2411 = vmatprep.subr.mxu0 0.0
        %2412 = vmatpush1.msra.mxu0 0.0
        %2413 = vmatprep.subr.mxu0 0.0
        %2414 = vmatpush1.msra.mxu0 0.0
        %2415 = vmatprep.subr.mxu0 0.0
        %2416 = vmatpush1.msra.mxu0 0.0
        %2417 = vmatprep.subr.mxu0 0.0
        %2418 = vmatpush1.msra.mxu0 0.0
        %2419 = vmatprep.subr.mxu0 0.0
        %2420 = vmatpush1.msra.mxu0 0.0
        %2421 = vmatprep.subr.mxu0 0.0
        %2422 = vmatpush1.msra.mxu0 0.0
        %2423 = vmatprep.subr.mxu0 0.0
        %2424 = vmatpush1.msra.mxu0 0.0
        %2425 = vmatprep.subr.mxu0 0.0
        %2426 = vmatpush1.msra.mxu0 0.0
        %2427 = vmatprep.subr.mxu0 0.0
        %2428 = vmatpush1.msra.mxu0 0.0
        %2429 = vmatprep.subr.mxu0 0.0
        %2430 = vmatpush1.msra.mxu0 %v803
        %2431 = vmatprep.subr.mxu0 0.0
        %2432 = vmatpush2.msra.mxu0 0.0
        %2433 = vmatprep.subr.mxu0 0.0
        %2434 = vmatpush2.msra.mxu0 0.0
        %2435 = vmatprep.subr.mxu0 0.0
        %2436 = vmatpush2.msra.mxu0 0.0
        %2437 = vmatprep.subr.mxu0 0.0
        %2438 = vmatpush2.msra.mxu0 0.0
        %2439 = vmatprep.subr.mxu0 0.0
        %2440 = vmatpush2.msra.mxu0 0.0
        %2441 = vmatprep.subr.mxu0 0.0
        %2442 = vmatpush2.msra.mxu0 0.0
        %2443 = vmatprep.subr.mxu0 0.0
        %2444 = vmatpush2.msra.mxu0 0.0
        %2445 = vmatprep.subr.mxu0 0.0
        %2446 = vmatpush2.msra.mxu0 0.0
        %2447 = vmatprep.subr.mxu0 0.0
        %2448 = vmatpush2.msra.mxu0 0.0
        %2449 = vmatprep.subr.mxu0 0.0
        %2450 = vmatpush2.msra.mxu0 0.0
        %2451 = vmatprep.subr.mxu0 0.0
        %2452 = vmatpush2.msra.mxu0 0.0
        %2453 = vmatprep.subr.mxu0 0.0
        %2454 = vmatpush2.msra.mxu0 0.0
        %2455 = vmatprep.subr.mxu0 0.0
        %2456 = vmatpush2.msra.mxu0 0.0
        %2457 = vmatprep.subr.mxu0 0.0
        %2458 = vmatpush2.msra.mxu0 0.0
        %2459 = vmatprep.subr.mxu0 0.0
        %2460 = vmatpush2.msra.mxu0 0.0
        %2461 = vmatprep.subr.mxu0 0.0
        %2462 = vmatpush2.msra.mxu0 0.0
        %2463 = vmatprep.mubr.f32.mxu0 0.0
        %2464 = vmatmul.mubr.f32.gmra.mxu0 %v2397
        %v2465 = vpop.f32.mrf.mxu0
        %v2466 = vadd.f32 0.0, %v2465
        %v2467 = vpop.f32.mrf.mxu0
        %2468 = vdwg.mxu0
        %2469 = vmatprep.subr.mxu0 0.0
        %2470 = vmatpush1.msra.mxu0 0.0
        %2471 = vmatprep.subr.mxu0 0.0
        %2472 = vmatpush1.msra.mxu0 0.0
        %2473 = vmatprep.subr.mxu0 0.0
        %2474 = vmatpush1.msra.mxu0 0.0
        %2475 = vmatprep.subr.mxu0 0.0
        %2476 = vmatpush1.msra.mxu0 0.0
        %2477 = vmatprep.subr.mxu0 0.0
        %2478 = vmatpush1.msra.mxu0 0.0
        %2479 = vmatprep.subr.mxu0 0.0
        %2480 = vmatpush1.msra.mxu0 0.0
        %2481 = vmatprep.subr.mxu0 0.0
        %2482 = vmatpush1.msra.mxu0 0.0
        %2483 = vmatprep.subr.mxu0 0.0
        %2484 = vmatpush1.msra.mxu0 0.0
        %2485 = vmatprep.subr.mxu0 0.0
        %2486 = vmatpush1.msra.mxu0 0.0
        %2487 = vmatprep.subr.mxu0 0.0
        %2488 = vmatpush1.msra.mxu0 0.0
        %2489 = vmatprep.subr.mxu0 0.0
        %2490 = vmatpush1.msra.mxu0 0.0
        %2491 = vmatprep.subr.mxu0 0.0
        %2492 = vmatpush1.msra.mxu0 0.0
        %2493 = vmatprep.subr.mxu0 0.0
        %2494 = vmatpush1.msra.mxu0 0.0
        %2495 = vmatprep.subr.mxu0 0.0
        %2496 = vmatpush1.msra.mxu0 0.0
        %2497 = vmatprep.subr.mxu0 0.0
        %2498 = vmatpush1.msra.mxu0 0.0
        %2499 = vmatprep.subr.mxu0 0.0
        %2500 = vmatpush1.msra.mxu0 %v808
        %2501 = vmatprep.subr.mxu0 0.0
        %2502 = vmatpush2.msra.mxu0 0.0
        %2503 = vmatprep.subr.mxu0 0.0
        %2504 = vmatpush2.msra.mxu0 0.0
        %2505 = vmatprep.subr.mxu0 0.0
        %2506 = vmatpush2.msra.mxu0 0.0
        %2507 = vmatprep.subr.mxu0 0.0
        %2508 = vmatpush2.msra.mxu0 0.0
        %2509 = vmatprep.subr.mxu0 0.0
        %2510 = vmatpush2.msra.mxu0 0.0
        %2511 = vmatprep.subr.mxu0 0.0
        %2512 = vmatpush2.msra.mxu0 0.0
        %2513 = vmatprep.subr.mxu0 0.0
        %2514 = vmatpush2.msra.mxu0 0.0
        %2515 = vmatprep.subr.mxu0 0.0
        %2516 = vmatpush2.msra.mxu0 0.0
        %2517 = vmatprep.subr.mxu0 0.0
        %2518 = vmatpush2.msra.mxu0 0.0
        %2519 = vmatprep.subr.mxu0 0.0
        %2520 = vmatpush2.msra.mxu0 0.0
        %2521 = vmatprep.subr.mxu0 0.0
        %2522 = vmatpush2.msra.mxu0 0.0
        %2523 = vmatprep.subr.mxu0 0.0
        %2524 = vmatpush2.msra.mxu0 0.0
        %2525 = vmatprep.subr.mxu0 0.0
        %2526 = vmatpush2.msra.mxu0 0.0
        %2527 = vmatprep.subr.mxu0 0.0
        %2528 = vmatpush2.msra.mxu0 0.0
        %2529 = vmatprep.subr.mxu0 0.0
        %2530 = vmatpush2.msra.mxu0 0.0
        %2531 = vmatprep.subr.mxu0 0.0
        %2532 = vmatpush2.msra.mxu0 0.0
        %2533 = vmatprep.mubr.f32.mxu0 0.0
        %2534 = vmatmul.mubr.f32.gmra.mxu0 %v2397
        %v2535 = vpop.f32.mrf.mxu0
        %v2536 = vadd.f32 0.0, %v2535
        %v2537 = vpop.f32.mrf.mxu0
        %2538 = vdwg.mxu0
        %v2539 = vmax.f32 %v2466, %v2536
        %2541 = vrot.lane.b32.xlu0 %v2539, 4
        %v2542 = vpop.permute.xlu0 %2541
        %vm2544 = vcmask 64544
        %2545 = vst.msk [vmem:[%s284] sm:$0xff] %vm2544, %v2542
        %v2546 = vld [vmem:[#allocation7] sm:$0xff]
        %2548 = vrot.lane.b32.xlu0 %v2546, 118
        %v2549 = vpop.permute.xlu0 %2548
        %v2551 = vmax.f32 %v2546, %v2549
        %2553 = vrot.lane.b32.xlu0 %v2551, 88
        %v2554 = vpop.permute.xlu0 %2553
        %v2555 = vsel %vm2242, %v2554, 0
        %2557 = vmatprep.subr.mxu0 0.0
        %2558 = vmatpush1.msra.mxu0 0.0
        %2559 = vmatprep.subr.mxu0 0.0
        %2560 = vmatpush1.msra.mxu0 0.0
        %2561 = vmatprep.subr.mxu0 0.0
        %2562 = vmatpush1.msra.mxu0 0.0
        %2563 = vmatprep.subr.mxu0 0.0
        %2564 = vmatpush1.msra.mxu0 0.0
        %2565 = vmatprep.subr.mxu0 0.0
        %2566 = vmatpush1.msra.mxu0 0.0
        %2567 = vmatprep.subr.mxu0 0.0
        %2568 = vmatpush1.msra.mxu0 0.0
        %2569 = vmatprep.subr.mxu0 0.0
        %2570 = vmatpush1.msra.mxu0 0.0
        %2571 = vmatprep.subr.mxu0 0.0
        %2572 = vmatpush1.msra.mxu0 0.0
        %2573 = vmatprep.subr.mxu0 0.0
        %2574 = vmatpush1.msra.mxu0 0.0
        %2575 = vmatprep.subr.mxu0 0.0
        %2576 = vmatpush1.msra.mxu0 0.0
        %2577 = vmatprep.subr.mxu0 0.0
        %2578 = vmatpush1.msra.mxu0 0.0
        %2579 = vmatprep.subr.mxu0 0.0
        %2580 = vmatpush1.msra.mxu0 0.0
        %2581 = vmatprep.subr.mxu0 0.0
        %2582 = vmatpush1.msra.mxu0 0.0
        %2583 = vmatprep.subr.mxu0 0.0
        %2584 = vmatpush1.msra.mxu0 0.0
        %2585 = vmatprep.subr.mxu0 0.0
        %2586 = vmatpush1.msra.mxu0 0.0
        %2587 = vmatprep.subr.mxu0 0.0
        %2588 = vmatpush1.msra.mxu0 %v803
        %2589 = vmatprep.subr.mxu0 0.0
        %2590 = vmatpush2.msra.mxu0 0.0
        %2591 = vmatprep.subr.mxu0 0.0
        %2592 = vmatpush2.msra.mxu0 0.0
        %2593 = vmatprep.subr.mxu0 0.0
        %2594 = vmatpush2.msra.mxu0 0.0
        %2595 = vmatprep.subr.mxu0 0.0
        %2596 = vmatpush2.msra.mxu0 0.0
        %2597 = vmatprep.subr.mxu0 0.0
        %2598 = vmatpush2.msra.mxu0 0.0
        %2599 = vmatprep.subr.mxu0 0.0
        %2600 = vmatpush2.msra.mxu0 0.0
        %2601 = vmatprep.subr.mxu0 0.0
        %2602 = vmatpush2.msra.mxu0 0.0
        %2603 = vmatprep.subr.mxu0 0.0
        %2604 = vmatpush2.msra.mxu0 0.0
        %2605 = vmatprep.subr.mxu0 0.0
        %2606 = vmatpush2.msra.mxu0 0.0
        %2607 = vmatprep.subr.mxu0 0.0
        %2608 = vmatpush2.msra.mxu0 0.0
        %2609 = vmatprep.subr.mxu0 0.0
        %2610 = vmatpush2.msra.mxu0 0.0
        %2611 = vmatprep.subr.mxu0 0.0
        %2612 = vmatpush2.msra.mxu0 0.0
        %2613 = vmatprep.subr.mxu0 0.0
        %2614 = vmatpush2.msra.mxu0 0.0
        %2615 = vmatprep.subr.mxu0 0.0
        %2616 = vmatpush2.msra.mxu0 0.0
        %2617 = vmatprep.subr.mxu0 0.0
        %2618 = vmatpush2.msra.mxu0 0.0
        %2619 = vmatprep.subr.mxu0 0.0
        %2620 = vmatpush2.msra.mxu0 0.0
        %2621 = vmatprep.mubr.f32.mxu0 0.0
        %2622 = vmatmul.mubr.f32.gmra.mxu0 %v2555
        %v2623 = vpop.f32.mrf.mxu0
        %v2624 = vadd.f32 0.0, %v2623
        %v2625 = vpop.f32.mrf.mxu0
        %2626 = vdwg.mxu0
        %2627 = vmatprep.subr.mxu0 0.0
        %2628 = vmatpush1.msra.mxu0 0.0
        %2629 = vmatprep.subr.mxu0 0.0
        %2630 = vmatpush1.msra.mxu0 0.0
        %2631 = vmatprep.subr.mxu0 0.0
        %2632 = vmatpush1.msra.mxu0 0.0
        %2633 = vmatprep.subr.mxu0 0.0
        %2634 = vmatpush1.msra.mxu0 0.0
        %2635 = vmatprep.subr.mxu0 0.0
        %2636 = vmatpush1.msra.mxu0 0.0
        %2637 = vmatprep.subr.mxu0 0.0
        %2638 = vmatpush1.msra.mxu0 0.0
        %2639 = vmatprep.subr.mxu0 0.0
        %2640 = vmatpush1.msra.mxu0 0.0
        %2641 = vmatprep.subr.mxu0 0.0
        %2642 = vmatpush1.msra.mxu0 0.0
        %2643 = vmatprep.subr.mxu0 0.0
        %2644 = vmatpush1.msra.mxu0 0.0
        %2645 = vmatprep.subr.mxu0 0.0
        %2646 = vmatpush1.msra.mxu0 0.0
        %2647 = vmatprep.subr.mxu0 0.0
        %2648 = vmatpush1.msra.mxu0 0.0
        %2649 = vmatprep.subr.mxu0 0.0
        %2650 = vmatpush1.msra.mxu0 0.0
        %2651 = vmatprep.subr.mxu0 0.0
        %2652 = vmatpush1.msra.mxu0 0.0
        %2653 = vmatprep.subr.mxu0 0.0
        %2654 = vmatpush1.msra.mxu0 0.0
        %2655 = vmatprep.subr.mxu0 0.0
        %2656 = vmatpush1.msra.mxu0 0.0
        %2657 = vmatprep.subr.mxu0 0.0
        %2658 = vmatpush1.msra.mxu0 %v808
        %2659 = vmatprep.subr.mxu0 0.0
        %2660 = vmatpush2.msra.mxu0 0.0
        %2661 = vmatprep.subr.mxu0 0.0
        %2662 = vmatpush2.msra.mxu0 0.0
        %2663 = vmatprep.subr.mxu0 0.0
        %2664 = vmatpush2.msra.mxu0 0.0
        %2665 = vmatprep.subr.mxu0 0.0
        %2666 = vmatpush2.msra.mxu0 0.0
        %2667 = vmatprep.subr.mxu0 0.0
        %2668 = vmatpush2.msra.mxu0 0.0
        %2669 = vmatprep.subr.mxu0 0.0
        %2670 = vmatpush2.msra.mxu0 0.0
        %2671 = vmatprep.subr.mxu0 0.0
        %2672 = vmatpush2.msra.mxu0 0.0
        %2673 = vmatprep.subr.mxu0 0.0
        %2674 = vmatpush2.msra.mxu0 0.0
        %2675 = vmatprep.subr.mxu0 0.0
        %2676 = vmatpush2.msra.mxu0 0.0
        %2677 = vmatprep.subr.mxu0 0.0
        %2678 = vmatpush2.msra.mxu0 0.0
        %2679 = vmatprep.subr.mxu0 0.0
        %2680 = vmatpush2.msra.mxu0 0.0
        %2681 = vmatprep.subr.mxu0 0.0
        %2682 = vmatpush2.msra.mxu0 0.0
        %2683 = vmatprep.subr.mxu0 0.0
        %2684 = vmatpush2.msra.mxu0 0.0
        %2685 = vmatprep.subr.mxu0 0.0
        %2686 = vmatpush2.msra.mxu0 0.0
        %2687 = vmatprep.subr.mxu0 0.0
        %2688 = vmatpush2.msra.mxu0 0.0
        %2689 = vmatprep.subr.mxu0 0.0
        %2690 = vmatpush2.msra.mxu0 0.0
        %2691 = vmatprep.mubr.f32.mxu0 0.0
        %2692 = vmatmul.mubr.f32.gmra.mxu0 %v2555
        %v2693 = vpop.f32.mrf.mxu0
        %v2694 = vadd.f32 0.0, %v2693
        %v2695 = vpop.f32.mrf.mxu0
        %2696 = vdwg.mxu0
        %v2697 = vmax.f32 %v2624, %v2694
        %2699 = vrot.lane.b32.xlu0 %v2697, 8
        %v2700 = vpop.permute.xlu0 %2699
        %vm2702 = vcmask 97344
        %2703 = vst.msk [vmem:[%s284] sm:$0xff] %vm2702, %v2700
        %v2704 = vld [vmem:[#allocation7] sm:$0xff]
        %2706 = vrot.lane.b32.xlu0 %v2704, 118
        %v2707 = vpop.permute.xlu0 %2706
        %v2709 = vmax.f32 %v2704, %v2707
        %2711 = vrot.lane.b32.xlu0 %v2709, 68
        %v2712 = vpop.permute.xlu0 %2711
        %v2713 = vsel %vm2242, %v2712, 0
        %2715 = vmatprep.subr.mxu0 0.0
        %2716 = vmatpush1.msra.mxu0 0.0
        %2717 = vmatprep.subr.mxu0 0.0
        %2718 = vmatpush1.msra.mxu0 0.0
        %2719 = vmatprep.subr.mxu0 0.0
        %2720 = vmatpush1.msra.mxu0 0.0
        %2721 = vmatprep.subr.mxu0 0.0
        %2722 = vmatpush1.msra.mxu0 0.0
        %2723 = vmatprep.subr.mxu0 0.0
        %2724 = vmatpush1.msra.mxu0 0.0
        %2725 = vmatprep.subr.mxu0 0.0
        %2726 = vmatpush1.msra.mxu0 0.0
        %2727 = vmatprep.subr.mxu0 0.0
        %2728 = vmatpush1.msra.mxu0 0.0
        %2729 = vmatprep.subr.mxu0 0.0
        %2730 = vmatpush1.msra.mxu0 0.0
        %2731 = vmatprep.subr.mxu0 0.0
        %2732 = vmatpush1.msra.mxu0 0.0
        %2733 = vmatprep.subr.mxu0 0.0
        %2734 = vmatpush1.msra.mxu0 0.0
        %2735 = vmatprep.subr.mxu0 0.0
        %2736 = vmatpush1.msra.mxu0 0.0
        %2737 = vmatprep.subr.mxu0 0.0
        %2738 = vmatpush1.msra.mxu0 0.0
        %2739 = vmatprep.subr.mxu0 0.0
        %2740 = vmatpush1.msra.mxu0 0.0
        %2741 = vmatprep.subr.mxu0 0.0
        %2742 = vmatpush1.msra.mxu0 0.0
        %2743 = vmatprep.subr.mxu0 0.0
        %2744 = vmatpush1.msra.mxu0 0.0
        %2745 = vmatprep.subr.mxu0 0.0
        %2746 = vmatpush1.msra.mxu0 %v803
        %2747 = vmatprep.subr.mxu0 0.0
        %2748 = vmatpush2.msra.mxu0 0.0
        %2749 = vmatprep.subr.mxu0 0.0
        %2750 = vmatpush2.msra.mxu0 0.0
        %2751 = vmatprep.subr.mxu0 0.0
        %2752 = vmatpush2.msra.mxu0 0.0
        %2753 = vmatprep.subr.mxu0 0.0
        %2754 = vmatpush2.msra.mxu0 0.0
        %2755 = vmatprep.subr.mxu0 0.0
        %2756 = vmatpush2.msra.mxu0 0.0
        %2757 = vmatprep.subr.mxu0 0.0
        %2758 = vmatpush2.msra.mxu0 0.0
        %2759 = vmatprep.subr.mxu0 0.0
        %2760 = vmatpush2.msra.mxu0 0.0
        %2761 = vmatprep.subr.mxu0 0.0
        %2762 = vmatpush2.msra.mxu0 0.0
        %2763 = vmatprep.subr.mxu0 0.0
        %2764 = vmatpush2.msra.mxu0 0.0
        %2765 = vmatprep.subr.mxu0 0.0
        %2766 = vmatpush2.msra.mxu0 0.0
        %2767 = vmatprep.subr.mxu0 0.0
        %2768 = vmatpush2.msra.mxu0 0.0
        %2769 = vmatprep.subr.mxu0 0.0
        %2770 = vmatpush2.msra.mxu0 0.0
        %2771 = vmatprep.subr.mxu0 0.0
        %2772 = vmatpush2.msra.mxu0 0.0
        %2773 = vmatprep.subr.mxu0 0.0
        %2774 = vmatpush2.msra.mxu0 0.0
        %2775 = vmatprep.subr.mxu0 0.0
        %2776 = vmatpush2.msra.mxu0 0.0
        %2777 = vmatprep.subr.mxu0 0.0
        %2778 = vmatpush2.msra.mxu0 0.0
        %2779 = vmatprep.mubr.f32.mxu0 0.0
        %2780 = vmatmul.mubr.f32.gmra.mxu0 %v2713
        %v2781 = vpop.f32.mrf.mxu0
        %v2782 = vadd.f32 0.0, %v2781
        %v2783 = vpop.f32.mrf.mxu0
        %2784 = vdwg.mxu0
        %2785 = vmatprep.subr.mxu0 0.0
        %2786 = vmatpush1.msra.mxu0 0.0
        %2787 = vmatprep.subr.mxu0 0.0
        %2788 = vmatpush1.msra.mxu0 0.0
        %2789 = vmatprep.subr.mxu0 0.0
        %2790 = vmatpush1.msra.mxu0 0.0
        %2791 = vmatprep.subr.mxu0 0.0
        %2792 = vmatpush1.msra.mxu0 0.0
        %2793 = vmatprep.subr.mxu0 0.0
        %2794 = vmatpush1.msra.mxu0 0.0
        %2795 = vmatprep.subr.mxu0 0.0
        %2796 = vmatpush1.msra.mxu0 0.0
        %2797 = vmatprep.subr.mxu0 0.0
        %2798 = vmatpush1.msra.mxu0 0.0
        %2799 = vmatprep.subr.mxu0 0.0
        %2800 = vmatpush1.msra.mxu0 0.0
        %2801 = vmatprep.subr.mxu0 0.0
        %2802 = vmatpush1.msra.mxu0 0.0
        %2803 = vmatprep.subr.mxu0 0.0
        %2804 = vmatpush1.msra.mxu0 0.0
        %2805 = vmatprep.subr.mxu0 0.0
        %2806 = vmatpush1.msra.mxu0 0.0
        %2807 = vmatprep.subr.mxu0 0.0
        %2808 = vmatpush1.msra.mxu0 0.0
        %2809 = vmatprep.subr.mxu0 0.0
        %2810 = vmatpush1.msra.mxu0 0.0
        %2811 = vmatprep.subr.mxu0 0.0
        %2812 = vmatpush1.msra.mxu0 0.0
        %2813 = vmatprep.subr.mxu0 0.0
        %2814 = vmatpush1.msra.mxu0 0.0
        %2815 = vmatprep.subr.mxu0 0.0
        %2816 = vmatpush1.msra.mxu0 %v808
        %2817 = vmatprep.subr.mxu0 0.0
        %2818 = vmatpush2.msra.mxu0 0.0
        %2819 = vmatprep.subr.mxu0 0.0
        %2820 = vmatpush2.msra.mxu0 0.0
        %2821 = vmatprep.subr.mxu0 0.0
        %2822 = vmatpush2.msra.mxu0 0.0
        %2823 = vmatprep.subr.mxu0 0.0
        %2824 = vmatpush2.msra.mxu0 0.0
        %2825 = vmatprep.subr.mxu0 0.0
        %2826 = vmatpush2.msra.mxu0 0.0
        %2827 = vmatprep.subr.mxu0 0.0
        %2828 = vmatpush2.msra.mxu0 0.0
        %2829 = vmatprep.subr.mxu0 0.0
        %2830 = vmatpush2.msra.mxu0 0.0
        %2831 = vmatprep.subr.mxu0 0.0
        %2832 = vmatpush2.msra.mxu0 0.0
        %2833 = vmatprep.subr.mxu0 0.0
        %2834 = vmatpush2.msra.mxu0 0.0
        %2835 = vmatprep.subr.mxu0 0.0
        %2836 = vmatpush2.msra.mxu0 0.0
        %2837 = vmatprep.subr.mxu0 0.0
        %2838 = vmatpush2.msra.mxu0 0.0
        %2839 = vmatprep.subr.mxu0 0.0
        %2840 = vmatpush2.msra.mxu0 0.0
        %2841 = vmatprep.subr.mxu0 0.0
        %2842 = vmatpush2.msra.mxu0 0.0
        %2843 = vmatprep.subr.mxu0 0.0
        %2844 = vmatpush2.msra.mxu0 0.0
        %2845 = vmatprep.subr.mxu0 0.0
        %2846 = vmatpush2.msra.mxu0 0.0
        %2847 = vmatprep.subr.mxu0 0.0
        %2848 = vmatpush2.msra.mxu0 0.0
        %2849 = vmatprep.mubr.f32.mxu0 0.0
        %2850 = vmatmul.mubr.f32.gmra.mxu0 %v2713
        %v2851 = vpop.f32.mrf.mxu0
        %v2852 = vadd.f32 0.0, %v2851
        %v2853 = vpop.f32.mrf.mxu0
        %2854 = vdwg.mxu0
        %v2855 = vmax.f32 %v2782, %v2852
        %2857 = vrot.lane.b32.xlu0 %v2855, 12
        %v2858 = vpop.permute.xlu0 %2857
        %vm2860 = vcmask 130144
        %2861 = vst.msk [vmem:[%s284] sm:$0xff] %vm2860, %v2858
        %s2862 = sand.u32 %s182, 1
        %s2863 = scalar_lea.sflag [#allocation10], %s2862
        %s2864 = sand.u32 %s182, 1
        %s2865 = smul.addr %s2864, 8
        %s2866 = scalar_lea.vmem [#allocation11], %s2865
        // Predicated region
        $region53: #{tpu_custom_call.1} parent=47 // pred_check
          %p2867 = pneg %p192
        $region54: #{tpu_custom_call.1} parent=47 // pred_check_branch
          %2869 = sbr.rel (%p2867) target = $region56
        $region55: #{tpu_custom_call.1} parent=47 // pred_region
          %s2871 = ssub.s32 128, 128
          %2872 = vsyncadd %s2863, %s2871
          %s2873 = smul.addr %s22, 128
          %s2874 = scalar_lea.hbm %s7, %s2873
          %s2876 = sshll.u32 %s2866, 4
          %s2877 = int_to_ptr.vmem [resolvable:$true] %s2876
          %2879 = dma.vmem_to_hbm [thread:$0]  %s2877, 128, %s2874, %s2863
        $region56: #{tpu_custom_call.1} parent=47 // pred_fallthru
          _
      $region48: #{tpu_custom_call.1} parent=5 // pred_fallthru
        _
      %p2880 = scmp.le.s32.totalorder 2, %s17
      // Predicated region
      $region57: #{tpu_custom_call.1} parent=5 // pred_check
        %p2881 = pneg %p2880
      $region58: #{tpu_custom_call.1} parent=5 // pred_check_branch
        %2883 = sbr.rel (%p2881) target = $region60
      $region59: #{tpu_custom_call.1} parent=5 // pred_region
        %s2884 = ssub.s32 %s17, 2
        // Predicated region
        $region61: #{tpu_custom_call.1} parent=59 // pred_check
          %p2885 = pneg %p198
        $region62: #{tpu_custom_call.1} parent=59 // pred_check_branch
          %2887 = sbr.rel (%p2885) target = $region64
        $region63: #{tpu_custom_call.1} parent=59 // pred_region
          %s2888 = sand.u32 %s183, 1
          %s2889 = scalar_lea.sflag [#allocation10], %s2888
          %s2890 = sand.u32 %s183, 1
          %s2891 = smul.addr %s2890, 8
          %s2892 = scalar_lea.vmem [#allocation11], %s2891
          %2893 = dma.done %s2889, 128
        $region64: #{tpu_custom_call.1} parent=59 // pred_fallthru
          _
      $region60: #{tpu_custom_call.1} parent=5 // pred_fallthru
        _
    $region6: #{tpu_custom_call.1} parent=1 // loop_footer
      %s21 = sadd.s32 1, %s17
    $region7: #{tpu_custom_call.1} parent=1 // loop_footer_branch
      %16 = sbr.rel target = $region3
    $region8: #{tpu_custom_call.1} parent=1 // loop_exit
      _
    %2894 = vsyncpa [#allocation9], 1
    %s2895 = scalar_lea.sflag [#allocation9], 1
    %2896 = vsyncpa %s2895, 1
    %2897 = vsyncpa [#allocation10], 1
    %s2898 = scalar_lea.sflag [#allocation10], 1
    %2899 = vsyncpa %s2898, 1

</llo_original>
